<compile_context>
chip_gen: v6e
topology: v6e:2x2x1
jax: 0.10.0
libtpu: 0.0.40
codegen_flags: <defaults>
</compile_context>

<pallas_src>
import jax
import jax.numpy as jnp
from jax.experimental import pallas as pl
from jax.experimental.pallas import tpu as pltpu

# ----------------------- synthetic DiamondNet profile -----------------------
V = 3          # adjacency.vertexes
B = 2          # batch
C = 4          # in_channels per vertex
L = 16         # in_features (spatial length)
G = 8          # growth_ratio (update conv out_channels)
K = 3          # conv kernel size (padding = 1)
SE_R = 2       # squeeze-excitation reduction ratio
P = 128        # adaptive_linear_features (AdaptiveMaxPool1d output size)
H = 64         # linear[0].out_features
NCLS = 5       # class_number
F_TOT = V * G * L        # flattened features per batch = 384
KW = F_TOT // P          # adaptive max-pool window size = 3


# ----------------------- fused Pallas kernel -----------------------

def _fused_kernel(x_ref, w1_ref, b1_ref, sw1_ref, sb1_ref, sw2_ref, sb2_ref,
                  w2_ref, b2_ref, wl_ref, bl_ref, wo_ref, bo_ref,
                  o_ref, p1_s, p2_s, flat_s):
    """Whole forward pass.  Shapes:
      x_ref  (V, B, C, L)            stacked per-vertex inputs
      w1_ref (V, G, K*V*C)           conv1 weights, adjacency-scaled, im2col (k-major) layout
      b1_ref (V, G, 1)
      sw1_ref(V, G//SE_R, G) sb1_ref(V, G//SE_R, 1) sw2_ref(V, G, G//SE_R) sb2_ref(V, G, 1)
      w2_ref (V, G, K*G)             conv2 weights, im2col layout
      b2_ref (V, G, 1)
      wl_ref (V*G*L, H)              pool->linear weights, zero-expanded (only rows i%KW==0)
      bl_ref (1, H)  wo_ref (H, NCLS)  bo_ref (1, NCLS)
      o_ref  (B, NCLS)
      p1_s   (K*V*C, B*L)  p2_s (K*G, B*L)  flat_s (B, V*G*L + KW - 1)   VMEM scratch
    """
    cin1 = V * C

    # Zero the scratches whose halo / padding lanes are never overwritten.
    p1_s[...] = jnp.zeros(p1_s.shape, jnp.float32)
    p2_s[...] = jnp.zeros(p2_s.shape, jnp.float32)
    if KW > 1:
        flat_s[:, F_TOT:] = jnp.zeros((B, KW - 1), jnp.float32)

    # ---- conv1 im2col patches (shared by every target vertex) ---------------
    # p1_s[k*cin1 + (v*C + c), b*L + l] = x[v, b, c, l + k - 1]  (0 outside [0, L))
    for v in range(V):
        for b in range(B):
            xv = x_ref[v, b]                                          # (C, L)
            r = v * C
            c0 = b * L
            p1_s[r:r + C, c0 + 1:c0 + L] = xv[:, :L - 1]              # tap k = 0
            p1_s[cin1 + r:cin1 + r + C, c0:c0 + L] = xv               # tap k = 1
            p1_s[2 * cin1 + r:2 * cin1 + r + C, c0:c0 + L - 1] = xv[:, 1:]   # tap k = 2
    patches1 = p1_s[...]                                              # (K*V*C, B*L)

    for v in range(V):
        # --- SpiderLayer: adjacency (folded into w1) + Conv1d(k=3, pad=1) + ReLU ---
        y1 = jnp.dot(w1_ref[v], patches1,
                     preferred_element_type=jnp.float32) + b1_ref[v]
        y1 = jnp.maximum(y1, 0.0)                                     # (G, B*L)

        # --- SpiderOutputLayer adjacency: squeeze-excitation gate --------------
        for b in range(B):
            c0 = b * L
            yb = y1[:, c0:c0 + L]                                     # (G, L)
            z = jnp.mean(yb, axis=1, keepdims=True)                   # (G, 1) squeeze
            h = jnp.dot(sw1_ref[v], z,
                        preferred_element_type=jnp.float32) + sb1_ref[v]
            h = jnp.maximum(h, 0.0)                                   # (G//SE_R, 1)
            s = jnp.dot(sw2_ref[v], h,
                        preferred_element_type=jnp.float32) + sb2_ref[v]
            s = pl.reciprocal(1.0 + jnp.exp(-s), approx=True)         # sigmoid, (G, 1)
            gb = yb * s                                               # gated features (G, L)
            # conv2 im2col rows for this batch (padding lanes stay zero)
            p2_s[0:G, c0 + 1:c0 + L] = gb[:, :L - 1]                  # tap k = 0
            p2_s[G:2 * G, c0:c0 + L] = gb                             # tap k = 1
            p2_s[2 * G:3 * G, c0:c0 + L - 1] = gb[:, 1:]              # tap k = 2

        # --- SpiderOutputLayer update: Conv1d(k=3, pad=1) + ReLU ----------------
        y2 = jnp.dot(w2_ref[v], p2_s[...],
                     preferred_element_type=jnp.float32) + b2_ref[v]
        y2 = jnp.maximum(y2, 0.0)                                     # (G, B*L)

        # --- flatten: flat[b, v*G*L + g*L + l] = y2[g, b*L + l] -----------------
        for b in range(B):
            for g in range(G):
                dst = v * G * L + g * L
                flat_s[b:b + 1, dst:dst + L] = y2[g:g + 1, b * L:(b + 1) * L]

    # ---- AdaptiveMaxPool1d(P) folded into the first Linear ----------------------
    # m[:, i] = max_{j<KW} flat[:, i + j];  wl has zero rows except i % KW == 0,
    # so m @ wl == MaxPool1d(flat, KW) @ lin_w exactly.
    m = flat_s[:, 0:F_TOT]
    for j in range(1, KW):
        m = jnp.maximum(m, flat_s[:, j:j + F_TOT])

    h = jnp.dot(m, wl_ref[...], preferred_element_type=jnp.float32) + bl_ref[...]   # (B, H)
    alpha = 1.6732632423543772
    selu_scale = 1.0507009873554805
    h = selu_scale * jnp.where(h > 0, h, alpha * (jnp.exp(h) - 1.0))  # SELU
    o_ref[...] = jnp.dot(h, wo_ref[...],
                         preferred_element_type=jnp.float32) + bo_ref[...]           # (B, NCLS)


# ----------------------- parameter preparation & forward -----------------------

def _prepare_kernel_params(p):
    """Fold adjacency into conv1 weights, lay conv weights out for im2col, transpose SE
    weights for the column-vector layout, zero-expand pool->linear weights."""
    A = jax.nn.softmax(p["adj"], axis=0)                              # (V_from, V_to)
    scale = jnp.repeat(A, C, axis=0)                                  # (V*C, V): row f*C+c = A[f, :]

    def conv_to_2d(w):                                                # (K, Cout, Cin) -> (Cout, K*Cin)
        k, cout, cin = w.shape
        return w.transpose(1, 0, 2).reshape(cout, k * cin)

    w1 = jnp.stack([conv_to_2d(p["conv1_w"][t] * scale[:, t][None, None, :])
                    for t in range(V)])                               # (V, G, K*V*C)
    b1 = jnp.stack([b.reshape(G, 1) for b in p["conv1_b"]])           # (V, G, 1)
    sw1 = jnp.stack([w.T for w in p["se_w1"]])                        # (V, G//SE_R, G)
    sb1 = jnp.stack([b.reshape(-1, 1) for b in p["se_b1"]])           # (V, G//SE_R, 1)
    sw2 = jnp.stack([w.T for w in p["se_w2"]])                        # (V, G, G//SE_R)
    sb2 = jnp.stack([b.reshape(-1, 1) for b in p["se_b2"]])           # (V, G, 1)
    w2 = jnp.stack([conv_to_2d(w) for w in p["conv2_w"]])             # (V, G, K*G)
    b2 = jnp.stack([b.reshape(G, 1) for b in p["conv2_b"]])           # (V, G, 1)

    assert F_TOT % P == 0, "pool output size must divide flattened features"
    wl = jnp.zeros((F_TOT, H), jnp.float32).at[::KW].set(p["lin_w"])  # zero-expanded (F_TOT, H)
    bl = p["lin_b"].reshape(1, H)
    wo = p["out_w"]                                                   # (H, NCLS)
    bo = p["out_b"].reshape(1, NCLS)
    return dict(w1=w1, b1=b1, sw1=sw1, sb1=sb1, sw2=sw2, sb2=sb2,
                w2=w2, b2=b2, wl=wl, bl=bl, wo=wo, bo=bo)


def spider_forward(params, x):
    """x: (V, B, C, L) stacked per-vertex features -> (B, NCLS) logits."""
    kp = _prepare_kernel_params(params)
    vmem = pl.BlockSpec(memory_space=pltpu.MemorySpace.VMEM)
    return pl.pallas_call(
        _fused_kernel,
        out_shape=jax.ShapeDtypeStruct((B, NCLS), jnp.float32),
        in_specs=[vmem] * 13,
        out_specs=vmem,
        scratch_shapes=[
            pltpu.VMEM((K * V * C, B * L), jnp.float32),              # conv1 im2col patches
            pltpu.VMEM((K * G, B * L), jnp.float32),                  # conv2 im2col patches
            pltpu.VMEM((B, F_TOT + KW - 1), jnp.float32),             # flat features + pool halo
        ],
    )(x, kp["w1"], kp["b1"], kp["sw1"], kp["sb1"], kp["sw2"], kp["sb2"],
      kp["w2"], kp["b2"], kp["wl"], kp["bl"], kp["wo"], kp["bo"])


def init_params(key):
    ks = jax.random.split(key, 16)
    sd = 0.2
    p = {}
    p["adj"] = jax.random.normal(ks[0], (V, V), jnp.float32)
    p["conv1_w"] = [sd * jax.random.normal(ks[1 + t], (K, G, V * C), jnp.float32) for t in range(V)]
    p["conv1_b"] = [jnp.full((G,), 0.01 * (t + 1), jnp.float32) for t in range(V)]
    p["se_w1"] = [sd * jax.random.normal(ks[4 + v], (G, G // SE_R), jnp.float32) for v in range(V)]
    p["se_b1"] = [jnp.zeros((G // SE_R,), jnp.float32) for _ in range(V)]
    p["se_w2"] = [sd * jax.random.normal(ks[7 + v], (G // SE_R, G), jnp.float32) for v in range(V)]
    p["se_b2"] = [jnp.zeros((G,), jnp.float32) for _ in range(V)]
    p["conv2_w"] = [sd * jax.random.normal(ks[10 + v], (K, G, G), jnp.float32) for v in range(V)]
    p["conv2_b"] = [jnp.full((G,), 0.01 * (v + 1), jnp.float32) for v in range(V)]
    p["lin_w"] = sd * jax.random.normal(ks[13], (P, H), jnp.float32)
    p["lin_b"] = jnp.zeros((H,), jnp.float32)
    p["out_w"] = sd * jax.random.normal(ks[14], (H, NCLS), jnp.float32)
    p["out_b"] = jnp.zeros((NCLS,), jnp.float32)
    return p


if __name__ == "__main__":
    root = jax.random.PRNGKey(0)
    pkey, xkey = jax.random.split(root)
    params = init_params(pkey)

    x = jax.random.normal(xkey, (V, B, C, L), dtype=jnp.float32)      # vertex-stacked input

    fwd = jax.jit(spider_forward)
    y = jax.block_until_ready(fwd(params, x))

    assert y.shape == (B, NCLS), y.shape
    assert bool(jnp.all(jnp.isfinite(y)))
    print("KERNEL_OK")
</pallas_src>

<mosaic_0001>
module attributes {stable_mosaic.version = 11 : i64} {
  func.func @_fused_kernel(%arg0: memref<3x2x4x16xf32, #tpu.memory_space<vmem>>, %arg1: memref<3x8x36xf32, #tpu.memory_space<vmem>>, %arg2: memref<3x8x1xf32, #tpu.memory_space<vmem>>, %arg3: memref<3x4x8xf32, #tpu.memory_space<vmem>>, %arg4: memref<3x4x1xf32, #tpu.memory_space<vmem>>, %arg5: memref<3x8x4xf32, #tpu.memory_space<vmem>>, %arg6: memref<3x8x1xf32, #tpu.memory_space<vmem>>, %arg7: memref<3x8x24xf32, #tpu.memory_space<vmem>>, %arg8: memref<3x8x1xf32, #tpu.memory_space<vmem>>, %arg9: memref<384x64xf32, #tpu.memory_space<vmem>>, %arg10: memref<1x64xf32, #tpu.memory_space<vmem>>, %arg11: memref<64x5xf32, #tpu.memory_space<vmem>>, %arg12: memref<1x5xf32, #tpu.memory_space<vmem>>, %arg13: memref<2x5xf32, #tpu.memory_space<vmem>>, %arg14: memref<36x32xf32, #tpu.memory_space<vmem>>, %arg15: memref<24x32xf32, #tpu.memory_space<vmem>>, %arg16: memref<2x386xf32, #tpu.memory_space<vmem>>) attributes {dimension_semantics = [], scalar_prefetch = 0 : i64, scratch_operands = 3 : i64, tpu.core_type = #tpu.core_type<tc>} {
    %cst = arith.constant 0.000000e+00 : f32
    %0 = vector.broadcast %cst : f32 to vector<36x32xf32>
    %c0 = arith.constant 0 : index
    %c0_0 = arith.constant 0 : index
    %1 = vector.load %arg14[%c0, %c0_0] : memref<36x32xf32, #tpu.memory_space<vmem>>, vector<36x32xf32>
    tpu.vector_store %arg14[%c0, %c0_0], %0 {strides = array<i32>} : memref<36x32xf32, #tpu.memory_space<vmem>>, vector<36x32xf32>,
    %cst_1 = arith.constant 0.000000e+00 : f32
    %2 = vector.broadcast %cst_1 : f32 to vector<24x32xf32>
    %c0_2 = arith.constant 0 : index
    %c0_3 = arith.constant 0 : index
    %3 = vector.load %arg15[%c0_2, %c0_3] : memref<24x32xf32, #tpu.memory_space<vmem>>, vector<24x32xf32>
    tpu.vector_store %arg15[%c0_2, %c0_3], %2 {strides = array<i32>} : memref<24x32xf32, #tpu.memory_space<vmem>>, vector<24x32xf32>,
    %cst_4 = arith.constant 0.000000e+00 : f32
    %4 = vector.broadcast %cst_4 : f32 to vector<2x2xf32>
    %c0_5 = arith.constant 0 : index
    %c384 = arith.constant 384 : index
    %5 = vector.load %arg16[%c0_5, %c384] : memref<2x386xf32, #tpu.memory_space<vmem>>, vector<2x2xf32>
    tpu.vector_store %arg16[%c0_5, %c384], %4 {strides = array<i32>} : memref<2x386xf32, #tpu.memory_space<vmem>>, vector<2x2xf32>,
    %c0_6 = arith.constant 0 : index
    %c0_7 = arith.constant 0 : index
    %c0_8 = arith.constant 0 : index
    %c0_9 = arith.constant 0 : index
    %6 = vector.load %arg0[%c0_6, %c0_7, %c0_8, %c0_9] : memref<3x2x4x16xf32, #tpu.memory_space<vmem>>, vector<1x1x4x16xf32>
    %7 = vector.shape_cast %6 : vector<1x1x4x16xf32> to vector<4x16xf32>
    %8 = vector.extract_strided_slice %7 {offsets = [0, 0], sizes = [4, 15], strides = [1, 1]} : vector<4x16xf32> to vector<4x15xf32>
    %c0_10 = arith.constant 0 : index
    %c1 = arith.constant 1 : index
    %9 = vector.load %arg14[%c0_10, %c1] : memref<36x32xf32, #tpu.memory_space<vmem>>, vector<4x15xf32>
    tpu.vector_store %arg14[%c0_10, %c1], %8 {strides = array<i32>} : memref<36x32xf32, #tpu.memory_space<vmem>>, vector<4x15xf32>,
    %c12 = arith.constant 12 : index
    %c0_11 = arith.constant 0 : index
    %10 = vector.load %arg14[%c12, %c0_11] : memref<36x32xf32, #tpu.memory_space<vmem>>, vector<4x16xf32>
    tpu.vector_store %arg14[%c12, %c0_11], %7 {strides = array<i32>} : memref<36x32xf32, #tpu.memory_space<vmem>>, vector<4x16xf32>,
    %11 = vector.extract_strided_slice %7 {offsets = [0, 1], sizes = [4, 15], strides = [1, 1]} : vector<4x16xf32> to vector<4x15xf32>
    %c24 = arith.constant 24 : index
    %c0_12 = arith.constant 0 : index
    %12 = vector.load %arg14[%c24, %c0_12] : memref<36x32xf32, #tpu.memory_space<vmem>>, vector<4x15xf32>
    tpu.vector_store %arg14[%c24, %c0_12], %11 {strides = array<i32>} : memref<36x32xf32, #tpu.memory_space<vmem>>, vector<4x15xf32>,
    %c0_13 = arith.constant 0 : index
    %c1_14 = arith.constant 1 : index
    %c0_15 = arith.constant 0 : index
    %c0_16 = arith.constant 0 : index
    %13 = vector.load %arg0[%c0_13, %c1_14, %c0_15, %c0_16] : memref<3x2x4x16xf32, #tpu.memory_space<vmem>>, vector<1x1x4x16xf32>
    %14 = vector.shape_cast %13 : vector<1x1x4x16xf32> to vector<4x16xf32>
    %15 = vector.extract_strided_slice %14 {offsets = [0, 0], sizes = [4, 15], strides = [1, 1]} : vector<4x16xf32> to vector<4x15xf32>
    %c0_17 = arith.constant 0 : index
    %c17 = arith.constant 17 : index
    %16 = vector.load %arg14[%c0_17, %c17] : memref<36x32xf32, #tpu.memory_space<vmem>>, vector<4x15xf32>
    tpu.vector_store %arg14[%c0_17, %c17], %15 {strides = array<i32>} : memref<36x32xf32, #tpu.memory_space<vmem>>, vector<4x15xf32>,
    %c12_18 = arith.constant 12 : index
    %c16 = arith.constant 16 : index
    %17 = vector.load %arg14[%c12_18, %c16] : memref<36x32xf32, #tpu.memory_space<vmem>>, vector<4x16xf32>
    tpu.vector_store %arg14[%c12_18, %c16], %14 {strides = array<i32>} : memref<36x32xf32, #tpu.memory_space<vmem>>, vector<4x16xf32>,
    %18 = vector.extract_strided_slice %14 {offsets = [0, 1], sizes = [4, 15], strides = [1, 1]} : vector<4x16xf32> to vector<4x15xf32>
    %c24_19 = arith.constant 24 : index
    %c16_20 = arith.constant 16 : index
    %19 = vector.load %arg14[%c24_19, %c16_20] : memref<36x32xf32, #tpu.memory_space<vmem>>, vector<4x15xf32>
    tpu.vector_store %arg14[%c24_19, %c16_20], %18 {strides = array<i32>} : memref<36x32xf32, #tpu.memory_space<vmem>>, vector<4x15xf32>,
    %c1_21 = arith.constant 1 : index
    %c0_22 = arith.constant 0 : index
    %c0_23 = arith.constant 0 : index
    %c0_24 = arith.constant 0 : index
    %20 = vector.load %arg0[%c1_21, %c0_22, %c0_23, %c0_24] : memref<3x2x4x16xf32, #tpu.memory_space<vmem>>, vector<1x1x4x16xf32>
    %21 = vector.shape_cast %20 : vector<1x1x4x16xf32> to vector<4x16xf32>
    %22 = vector.extract_strided_slice %21 {offsets = [0, 0], sizes = [4, 15], strides = [1, 1]} : vector<4x16xf32> to vector<4x15xf32>
    %c4 = arith.constant 4 : index
    %c1_25 = arith.constant 1 : index
    %23 = vector.load %arg14[%c4, %c1_25] : memref<36x32xf32, #tpu.memory_space<vmem>>, vector<4x15xf32>
    tpu.vector_store %arg14[%c4, %c1_25], %22 {strides = array<i32>} : memref<36x32xf32, #tpu.memory_space<vmem>>, vector<4x15xf32>,
    %c16_26 = arith.constant 16 : index
    %c0_27 = arith.constant 0 : index
    %24 = vector.load %arg14[%c16_26, %c0_27] : memref<36x32xf32, #tpu.memory_space<vmem>>, vector<4x16xf32>
    tpu.vector_store %arg14[%c16_26, %c0_27], %21 {strides = array<i32>} : memref<36x32xf32, #tpu.memory_space<vmem>>, vector<4x16xf32>,
    %25 = vector.extract_strided_slice %21 {offsets = [0, 1], sizes = [4, 15], strides = [1, 1]} : vector<4x16xf32> to vector<4x15xf32>
    %c28 = arith.constant 28 : index
    %c0_28 = arith.constant 0 : index
    %26 = vector.load %arg14[%c28, %c0_28] : memref<36x32xf32, #tpu.memory_space<vmem>>, vector<4x15xf32>
    tpu.vector_store %arg14[%c28, %c0_28], %25 {strides = array<i32>} : memref<36x32xf32, #tpu.memory_space<vmem>>, vector<4x15xf32>,
    %c1_29 = arith.constant 1 : index
    %c1_30 = arith.constant 1 : index
    %c0_31 = arith.constant 0 : index
    %c0_32 = arith.constant 0 : index
    %27 = vector.load %arg0[%c1_29, %c1_30, %c0_31, %c0_32] : memref<3x2x4x16xf32, #tpu.memory_space<vmem>>, vector<1x1x4x16xf32>
    %28 = vector.shape_cast %27 : vector<1x1x4x16xf32> to vector<4x16xf32>
    %29 = vector.extract_strided_slice %28 {offsets = [0, 0], sizes = [4, 15], strides = [1, 1]} : vector<4x16xf32> to vector<4x15xf32>
    %c4_33 = arith.constant 4 : index
    %c17_34 = arith.constant 17 : index
    %30 = vector.load %arg14[%c4_33, %c17_34] : memref<36x32xf32, #tpu.memory_space<vmem>>, vector<4x15xf32>
    tpu.vector_store %arg14[%c4_33, %c17_34], %29 {strides = array<i32>} : memref<36x32xf32, #tpu.memory_space<vmem>>, vector<4x15xf32>,
    %c16_35 = arith.constant 16 : index
    %c16_36 = arith.constant 16 : index
    %31 = vector.load %arg14[%c16_35, %c16_36] : memref<36x32xf32, #tpu.memory_space<vmem>>, vector<4x16xf32>
    tpu.vector_store %arg14[%c16_35, %c16_36], %28 {strides = array<i32>} : memref<36x32xf32, #tpu.memory_space<vmem>>, vector<4x16xf32>,
    %32 = vector.extract_strided_slice %28 {offsets = [0, 1], sizes = [4, 15], strides = [1, 1]} : vector<4x16xf32> to vector<4x15xf32>
    %c28_37 = arith.constant 28 : index
    %c16_38 = arith.constant 16 : index
    %33 = vector.load %arg14[%c28_37, %c16_38] : memref<36x32xf32, #tpu.memory_space<vmem>>, vector<4x15xf32>
    tpu.vector_store %arg14[%c28_37, %c16_38], %32 {strides = array<i32>} : memref<36x32xf32, #tpu.memory_space<vmem>>, vector<4x15xf32>,
    %c2 = arith.constant 2 : index
    %c0_39 = arith.constant 0 : index
    %c0_40 = arith.constant 0 : index
    %c0_41 = arith.constant 0 : index
    %34 = vector.load %arg0[%c2, %c0_39, %c0_40, %c0_41] : memref<3x2x4x16xf32, #tpu.memory_space<vmem>>, vector<1x1x4x16xf32>
    %35 = vector.shape_cast %34 : vector<1x1x4x16xf32> to vector<4x16xf32>
    %36 = vector.extract_strided_slice %35 {offsets = [0, 0], sizes = [4, 15], strides = [1, 1]} : vector<4x16xf32> to vector<4x15xf32>
    %c8 = arith.constant 8 : index
    %c1_42 = arith.constant 1 : index
    %37 = vector.load %arg14[%c8, %c1_42] : memref<36x32xf32, #tpu.memory_space<vmem>>, vector<4x15xf32>
    tpu.vector_store %arg14[%c8, %c1_42], %36 {strides = array<i32>} : memref<36x32xf32, #tpu.memory_space<vmem>>, vector<4x15xf32>,
    %c20 = arith.constant 20 : index
    %c0_43 = arith.constant 0 : index
    %38 = vector.load %arg14[%c20, %c0_43] : memref<36x32xf32, #tpu.memory_space<vmem>>, vector<4x16xf32>
    tpu.vector_store %arg14[%c20, %c0_43], %35 {strides = array<i32>} : memref<36x32xf32, #tpu.memory_space<vmem>>, vector<4x16xf32>,
    %39 = vector.extract_strided_slice %35 {offsets = [0, 1], sizes = [4, 15], strides = [1, 1]} : vector<4x16xf32> to vector<4x15xf32>
    %c32 = arith.constant 32 : index
    %c0_44 = arith.constant 0 : index
    %40 = vector.load %arg14[%c32, %c0_44] : memref<36x32xf32, #tpu.memory_space<vmem>>, vector<4x15xf32>
    tpu.vector_store %arg14[%c32, %c0_44], %39 {strides = array<i32>} : memref<36x32xf32, #tpu.memory_space<vmem>>, vector<4x15xf32>,
    %c2_45 = arith.constant 2 : index
    %c1_46 = arith.constant 1 : index
    %c0_47 = arith.constant 0 : index
    %c0_48 = arith.constant 0 : index
    %41 = vector.load %arg0[%c2_45, %c1_46, %c0_47, %c0_48] : memref<3x2x4x16xf32, #tpu.memory_space<vmem>>, vector<1x1x4x16xf32>
    %42 = vector.shape_cast %41 : vector<1x1x4x16xf32> to vector<4x16xf32>
    %43 = vector.extract_strided_slice %42 {offsets = [0, 0], sizes = [4, 15], strides = [1, 1]} : vector<4x16xf32> to vector<4x15xf32>
    %c8_49 = arith.constant 8 : index
    %c17_50 = arith.constant 17 : index
    %44 = vector.load %arg14[%c8_49, %c17_50] : memref<36x32xf32, #tpu.memory_space<vmem>>, vector<4x15xf32>
    tpu.vector_store %arg14[%c8_49, %c17_50], %43 {strides = array<i32>} : memref<36x32xf32, #tpu.memory_space<vmem>>, vector<4x15xf32>,
    %c20_51 = arith.constant 20 : index
    %c16_52 = arith.constant 16 : index
    %45 = vector.load %arg14[%c20_51, %c16_52] : memref<36x32xf32, #tpu.memory_space<vmem>>, vector<4x16xf32>
    tpu.vector_store %arg14[%c20_51, %c16_52], %42 {strides = array<i32>} : memref<36x32xf32, #tpu.memory_space<vmem>>, vector<4x16xf32>,
    %46 = vector.extract_strided_slice %42 {offsets = [0, 1], sizes = [4, 15], strides = [1, 1]} : vector<4x16xf32> to vector<4x15xf32>
    %c32_53 = arith.constant 32 : index
    %c16_54 = arith.constant 16 : index
    %47 = vector.load %arg14[%c32_53, %c16_54] : memref<36x32xf32, #tpu.memory_space<vmem>>, vector<4x15xf32>
    tpu.vector_store %arg14[%c32_53, %c16_54], %46 {strides = array<i32>} : memref<36x32xf32, #tpu.memory_space<vmem>>, vector<4x15xf32>,
    %c0_55 = arith.constant 0 : index
    %c0_56 = arith.constant 0 : index
    %48 = vector.load %arg14[%c0_55, %c0_56] : memref<36x32xf32, #tpu.memory_space<vmem>>, vector<36x32xf32>
    %c0_57 = arith.constant 0 : index
    %c0_58 = arith.constant 0 : index
    %c0_59 = arith.constant 0 : index
    %49 = vector.load %arg1[%c0_57, %c0_58, %c0_59] : memref<3x8x36xf32, #tpu.memory_space<vmem>>, vector<1x8x36xf32>
    %50 = vector.shape_cast %49 : vector<1x8x36xf32> to vector<8x36xf32>
    %cst_60 = arith.constant dense<0.000000e+00> : vector<8x32xf32>
    %51 = tpu.matmul %50, %48, %cst_60 {dimension_numbers = #tpu.dot_dimension_numbers<[1], [0], [0], [1], [0, 0, 1, 1], [], []>} : vector<8x36xf32>, vector<36x32xf32>, vector<8x32xf32> -> vector<8x32xf32>
    %c0_61 = arith.constant 0 : index
    %c0_62 = arith.constant 0 : index
    %c0_63 = arith.constant 0 : index
    %52 = vector.load %arg2[%c0_61, %c0_62, %c0_63] : memref<3x8x1xf32, #tpu.memory_space<vmem>>, vector<1x8x1xf32>
    %53 = vector.shape_cast %52 : vector<1x8x1xf32> to vector<8x1xf32>
    %54 = vector.broadcast %53 : vector<8x1xf32> to vector<8x32xf32>
    %55 = arith.addf %51, %54 : vector<8x32xf32>
    %cst_64 = arith.constant 0.000000e+00 : f32
    %56 = vector.broadcast %cst_64 : f32 to vector<8x32xf32>
    %57 = arith.maximumf %55, %56 : vector<8x32xf32>
    %58 = vector.extract_strided_slice %57 {offsets = [0, 0], sizes = [8, 16], strides = [1, 1]} : vector<8x32xf32> to vector<8x16xf32>
    %cst_65 = arith.constant dense<0.000000e+00> : vector<8xf32>
    %59 = vector.multi_reduction <add>, %58, %cst_65 [1] : vector<8x16xf32> to vector<8xf32>
    %60 = vector.shape_cast %59 : vector<8xf32> to vector<8x1xf32>
    %cst_66 = arith.constant 1.600000e+01 : f32
    %61 = vector.broadcast %cst_66 : f32 to vector<8x1xf32>
    %62 = arith.divf %60, %61 : vector<8x1xf32>
    %c0_67 = arith.constant 0 : index
    %c0_68 = arith.constant 0 : index
    %c0_69 = arith.constant 0 : index
    %63 = vector.load %arg3[%c0_67, %c0_68, %c0_69] : memref<3x4x8xf32, #tpu.memory_space<vmem>>, vector<1x4x8xf32>
    %64 = vector.shape_cast %63 : vector<1x4x8xf32> to vector<4x8xf32>
    %cst_70 = arith.constant dense<0.000000e+00> : vector<4x1xf32>
    %65 = tpu.matmul %64, %62, %cst_70 {dimension_numbers = #tpu.dot_dimension_numbers<[1], [0], [0], [1], [0, 0, 1, 1], [], []>} : vector<4x8xf32>, vector<8x1xf32>, vector<4x1xf32> -> vector<4x1xf32>
    %c0_71 = arith.constant 0 : index
    %c0_72 = arith.constant 0 : index
    %c0_73 = arith.constant 0 : index
    %66 = vector.load %arg4[%c0_71, %c0_72, %c0_73] : memref<3x4x1xf32, #tpu.memory_space<vmem>>, vector<1x4x1xf32>
    %67 = vector.shape_cast %66 : vector<1x4x1xf32> to vector<4x1xf32>
    %68 = arith.addf %65, %67 : vector<4x1xf32>
    %cst_74 = arith.constant 0.000000e+00 : f32
    %69 = vector.broadcast %cst_74 : f32 to vector<4x1xf32>
    %70 = arith.maximumf %68, %69 : vector<4x1xf32>
    %c0_75 = arith.constant 0 : index
    %c0_76 = arith.constant 0 : index
    %c0_77 = arith.constant 0 : index
    %71 = vector.load %arg5[%c0_75, %c0_76, %c0_77] : memref<3x8x4xf32, #tpu.memory_space<vmem>>, vector<1x8x4xf32>
    %72 = vector.shape_cast %71 : vector<1x8x4xf32> to vector<8x4xf32>
    %cst_78 = arith.constant dense<0.000000e+00> : vector<8x1xf32>
    %73 = tpu.matmul %72, %70, %cst_78 {dimension_numbers = #tpu.dot_dimension_numbers<[1], [0], [0], [1], [0, 0, 1, 1], [], []>} : vector<8x4xf32>, vector<4x1xf32>, vector<8x1xf32> -> vector<8x1xf32>
    %c0_79 = arith.constant 0 : index
    %c0_80 = arith.constant 0 : index
    %c0_81 = arith.constant 0 : index
    %74 = vector.load %arg6[%c0_79, %c0_80, %c0_81] : memref<3x8x1xf32, #tpu.memory_space<vmem>>, vector<1x8x1xf32>
    %75 = vector.shape_cast %74 : vector<1x8x1xf32> to vector<8x1xf32>
    %76 = arith.addf %73, %75 : vector<8x1xf32>
    %cst_82 = arith.constant 0.000000e+00 : f32
    %77 = vector.broadcast %cst_82 : f32 to vector<8x1xf32>
    %78 = arith.subf %77, %76 : vector<8x1xf32>
    %79 = math.exp %78 : vector<8x1xf32>
    %cst_83 = arith.constant 1.000000e+00 : f32
    %80 = vector.broadcast %cst_83 : f32 to vector<8x1xf32>
    %81 = arith.addf %80, %79 : vector<8x1xf32>
    %82 = tpu.reciprocal %81 {approx = true} : vector<8x1xf32> -> vector<8x1xf32>
    %83 = vector.broadcast %82 : vector<8x1xf32> to vector<8x16xf32>
    %84 = arith.mulf %58, %83 : vector<8x16xf32>
    %85 = vector.extract_strided_slice %84 {offsets = [0, 0], sizes = [8, 15], strides = [1, 1]} : vector<8x16xf32> to vector<8x15xf32>
    %c0_84 = arith.constant 0 : index
    %c1_85 = arith.constant 1 : index
    %86 = vector.load %arg15[%c0_84, %c1_85] : memref<24x32xf32, #tpu.memory_space<vmem>>, vector<8x15xf32>
    tpu.vector_store %arg15[%c0_84, %c1_85], %85 {strides = array<i32>} : memref<24x32xf32, #tpu.memory_space<vmem>>, vector<8x15xf32>,
    %c8_86 = arith.constant 8 : index
    %c0_87 = arith.constant 0 : index
    %87 = vector.load %arg15[%c8_86, %c0_87] : memref<24x32xf32, #tpu.memory_space<vmem>>, vector<8x16xf32>
    tpu.vector_store %arg15[%c8_86, %c0_87], %84 {strides = array<i32>} : memref<24x32xf32, #tpu.memory_space<vmem>>, vector<8x16xf32>,
    %88 = vector.extract_strided_slice %84 {offsets = [0, 1], sizes = [8, 15], strides = [1, 1]} : vector<8x16xf32> to vector<8x15xf32>
    %c16_88 = arith.constant 16 : index
    %c0_89 = arith.constant 0 : index
    %89 = vector.load %arg15[%c16_88, %c0_89] : memref<24x32xf32, #tpu.memory_space<vmem>>, vector<8x15xf32>
    tpu.vector_store %arg15[%c16_88, %c0_89], %88 {strides = array<i32>} : memref<24x32xf32, #tpu.memory_space<vmem>>, vector<8x15xf32>,
    %90 = vector.extract_strided_slice %57 {offsets = [0, 16], sizes = [8, 16], strides = [1, 1]} : vector<8x32xf32> to vector<8x16xf32>
    %cst_90 = arith.constant dense<0.000000e+00> : vector<8xf32>
    %91 = vector.multi_reduction <add>, %90, %cst_90 [1] : vector<8x16xf32> to vector<8xf32>
    %92 = vector.shape_cast %91 : vector<8xf32> to vector<8x1xf32>
    %cst_91 = arith.constant 1.600000e+01 : f32
    %93 = vector.broadcast %cst_91 : f32 to vector<8x1xf32>
    %94 = arith.divf %92, %93 : vector<8x1xf32>
    %c0_92 = arith.constant 0 : index
    %c0_93 = arith.constant 0 : index
    %c0_94 = arith.constant 0 : index
    %95 = vector.load %arg3[%c0_92, %c0_93, %c0_94] : memref<3x4x8xf32, #tpu.memory_space<vmem>>, vector<1x4x8xf32>
    %96 = vector.shape_cast %95 : vector<1x4x8xf32> to vector<4x8xf32>
    %cst_95 = arith.constant dense<0.000000e+00> : vector<4x1xf32>
    %97 = tpu.matmul %96, %94, %cst_95 {dimension_numbers = #tpu.dot_dimension_numbers<[1], [0], [0], [1], [0, 0, 1, 1], [], []>} : vector<4x8xf32>, vector<8x1xf32>, vector<4x1xf32> -> vector<4x1xf32>
    %c0_96 = arith.constant 0 : index
    %c0_97 = arith.constant 0 : index
    %c0_98 = arith.constant 0 : index
    %98 = vector.load %arg4[%c0_96, %c0_97, %c0_98] : memref<3x4x1xf32, #tpu.memory_space<vmem>>, vector<1x4x1xf32>
    %99 = vector.shape_cast %98 : vector<1x4x1xf32> to vector<4x1xf32>
    %100 = arith.addf %97, %99 : vector<4x1xf32>
    %cst_99 = arith.constant 0.000000e+00 : f32
    %101 = vector.broadcast %cst_99 : f32 to vector<4x1xf32>
    %102 = arith.maximumf %100, %101 : vector<4x1xf32>
    %c0_100 = arith.constant 0 : index
    %c0_101 = arith.constant 0 : index
    %c0_102 = arith.constant 0 : index
    %103 = vector.load %arg5[%c0_100, %c0_101, %c0_102] : memref<3x8x4xf32, #tpu.memory_space<vmem>>, vector<1x8x4xf32>
    %104 = vector.shape_cast %103 : vector<1x8x4xf32> to vector<8x4xf32>
    %cst_103 = arith.constant dense<0.000000e+00> : vector<8x1xf32>
    %105 = tpu.matmul %104, %102, %cst_103 {dimension_numbers = #tpu.dot_dimension_numbers<[1], [0], [0], [1], [0, 0, 1, 1], [], []>} : vector<8x4xf32>, vector<4x1xf32>, vector<8x1xf32> -> vector<8x1xf32>
    %c0_104 = arith.constant 0 : index
    %c0_105 = arith.constant 0 : index
    %c0_106 = arith.constant 0 : index
    %106 = vector.load %arg6[%c0_104, %c0_105, %c0_106] : memref<3x8x1xf32, #tpu.memory_space<vmem>>, vector<1x8x1xf32>
    %107 = vector.shape_cast %106 : vector<1x8x1xf32> to vector<8x1xf32>
    %108 = arith.addf %105, %107 : vector<8x1xf32>
    %cst_107 = arith.constant 0.000000e+00 : f32
    %109 = vector.broadcast %cst_107 : f32 to vector<8x1xf32>
    %110 = arith.subf %109, %108 : vector<8x1xf32>
    %111 = math.exp %110 : vector<8x1xf32>
    %cst_108 = arith.constant 1.000000e+00 : f32
    %112 = vector.broadcast %cst_108 : f32 to vector<8x1xf32>
    %113 = arith.addf %112, %111 : vector<8x1xf32>
    %114 = tpu.reciprocal %113 {approx = true} : vector<8x1xf32> -> vector<8x1xf32>
    %115 = vector.broadcast %114 : vector<8x1xf32> to vector<8x16xf32>
    %116 = arith.mulf %90, %115 : vector<8x16xf32>
    %117 = vector.extract_strided_slice %116 {offsets = [0, 0], sizes = [8, 15], strides = [1, 1]} : vector<8x16xf32> to vector<8x15xf32>
    %c0_109 = arith.constant 0 : index
    %c17_110 = arith.constant 17 : index
    %118 = vector.load %arg15[%c0_109, %c17_110] : memref<24x32xf32, #tpu.memory_space<vmem>>, vector<8x15xf32>
    tpu.vector_store %arg15[%c0_109, %c17_110], %117 {strides = array<i32>} : memref<24x32xf32, #tpu.memory_space<vmem>>, vector<8x15xf32>,
    %c8_111 = arith.constant 8 : index
    %c16_112 = arith.constant 16 : index
    %119 = vector.load %arg15[%c8_111, %c16_112] : memref<24x32xf32, #tpu.memory_space<vmem>>, vector<8x16xf32>
    tpu.vector_store %arg15[%c8_111, %c16_112], %116 {strides = array<i32>} : memref<24x32xf32, #tpu.memory_space<vmem>>, vector<8x16xf32>,
    %120 = vector.extract_strided_slice %116 {offsets = [0, 1], sizes = [8, 15], strides = [1, 1]} : vector<8x16xf32> to vector<8x15xf32>
    %c16_113 = arith.constant 16 : index
    %c16_114 = arith.constant 16 : index
    %121 = vector.load %arg15[%c16_113, %c16_114] : memref<24x32xf32, #tpu.memory_space<vmem>>, vector<8x15xf32>
    tpu.vector_store %arg15[%c16_113, %c16_114], %120 {strides = array<i32>} : memref<24x32xf32, #tpu.memory_space<vmem>>, vector<8x15xf32>,
    %c0_115 = arith.constant 0 : index
    %c0_116 = arith.constant 0 : index
    %c0_117 = arith.constant 0 : index
    %122 = vector.load %arg7[%c0_115, %c0_116, %c0_117] : memref<3x8x24xf32, #tpu.memory_space<vmem>>, vector<1x8x24xf32>
    %123 = vector.shape_cast %122 : vector<1x8x24xf32> to vector<8x24xf32>
    %c0_118 = arith.constant 0 : index
    %c0_119 = arith.constant 0 : index
    %124 = vector.load %arg15[%c0_118, %c0_119] : memref<24x32xf32, #tpu.memory_space<vmem>>, vector<24x32xf32>
    %cst_120 = arith.constant dense<0.000000e+00> : vector<8x32xf32>
    %125 = tpu.matmul %123, %124, %cst_120 {dimension_numbers = #tpu.dot_dimension_numbers<[1], [0], [0], [1], [0, 0, 1, 1], [], []>} : vector<8x24xf32>, vector<24x32xf32>, vector<8x32xf32> -> vector<8x32xf32>
    %c0_121 = arith.constant 0 : index
    %c0_122 = arith.constant 0 : index
    %c0_123 = arith.constant 0 : index
    %126 = vector.load %arg8[%c0_121, %c0_122, %c0_123] : memref<3x8x1xf32, #tpu.memory_space<vmem>>, vector<1x8x1xf32>
    %127 = vector.shape_cast %126 : vector<1x8x1xf32> to vector<8x1xf32>
    %128 = vector.broadcast %127 : vector<8x1xf32> to vector<8x32xf32>
    %129 = arith.addf %125, %128 : vector<8x32xf32>
    %cst_124 = arith.constant 0.000000e+00 : f32
    %130 = vector.broadcast %cst_124 : f32 to vector<8x32xf32>
    %131 = arith.maximumf %129, %130 : vector<8x32xf32>
    %132 = vector.extract_strided_slice %131 {offsets = [0, 0], sizes = [1, 16], strides = [1, 1]} : vector<8x32xf32> to vector<1x16xf32>
    %c0_125 = arith.constant 0 : index
    %c0_126 = arith.constant 0 : index
    %133 = vector.load %arg16[%c0_125, %c0_126] : memref<2x386xf32, #tpu.memory_space<vmem>>, vector<1x16xf32>
    tpu.vector_store %arg16[%c0_125, %c0_126], %132 {strides = array<i32>} : memref<2x386xf32, #tpu.memory_space<vmem>>, vector<1x16xf32>,
    %134 = vector.extract_strided_slice %131 {offsets = [1, 0], sizes = [1, 16], strides = [1, 1]} : vector<8x32xf32> to vector<1x16xf32>
    %c0_127 = arith.constant 0 : index
    %c16_128 = arith.constant 16 : index
    %135 = vector.load %arg16[%c0_127, %c16_128] : memref<2x386xf32, #tpu.memory_space<vmem>>, vector<1x16xf32>
    tpu.vector_store %arg16[%c0_127, %c16_128], %134 {strides = array<i32>} : memref<2x386xf32, #tpu.memory_space<vmem>>, vector<1x16xf32>,
    %136 = vector.extract_strided_slice %131 {offsets = [2, 0], sizes = [1, 16], strides = [1, 1]} : vector<8x32xf32> to vector<1x16xf32>
    %c0_129 = arith.constant 0 : index
    %c32_130 = arith.constant 32 : index
    %137 = vector.load %arg16[%c0_129, %c32_130] : memref<2x386xf32, #tpu.memory_space<vmem>>, vector<1x16xf32>
    tpu.vector_store %arg16[%c0_129, %c32_130], %136 {strides = array<i32>} : memref<2x386xf32, #tpu.memory_space<vmem>>, vector<1x16xf32>,
    %138 = vector.extract_strided_slice %131 {offsets = [3, 0], sizes = [1, 16], strides = [1, 1]} : vector<8x32xf32> to vector<1x16xf32>
    %c0_131 = arith.constant 0 : index
    %c48 = arith.constant 48 : index
    %139 = vector.load %arg16[%c0_131, %c48] : memref<2x386xf32, #tpu.memory_space<vmem>>, vector<1x16xf32>
    tpu.vector_store %arg16[%c0_131, %c48], %138 {strides = array<i32>} : memref<2x386xf32, #tpu.memory_space<vmem>>, vector<1x16xf32>,
    %140 = vector.extract_strided_slice %131 {offsets = [4, 0], sizes = [1, 16], strides = [1, 1]} : vector<8x32xf32> to vector<1x16xf32>
    %c0_132 = arith.constant 0 : index
    %c64 = arith.constant 64 : index
    %141 = vector.load %arg16[%c0_132, %c64] : memref<2x386xf32, #tpu.memory_space<vmem>>, vector<1x16xf32>
    tpu.vector_store %arg16[%c0_132, %c64], %140 {strides = array<i32>} : memref<2x386xf32, #tpu.memory_space<vmem>>, vector<1x16xf32>,
    %142 = vector.extract_strided_slice %131 {offsets = [5, 0], sizes = [1, 16], strides = [1, 1]} : vector<8x32xf32> to vector<1x16xf32>
    %c0_133 = arith.constant 0 : index
    %c80 = arith.constant 80 : index
    %143 = vector.load %arg16[%c0_133, %c80] : memref<2x386xf32, #tpu.memory_space<vmem>>, vector<1x16xf32>
    tpu.vector_store %arg16[%c0_133, %c80], %142 {strides = array<i32>} : memref<2x386xf32, #tpu.memory_space<vmem>>, vector<1x16xf32>,
    %144 = vector.extract_strided_slice %131 {offsets = [6, 0], sizes = [1, 16], strides = [1, 1]} : vector<8x32xf32> to vector<1x16xf32>
    %c0_134 = arith.constant 0 : index
    %c96 = arith.constant 96 : index
    %145 = vector.load %arg16[%c0_134, %c96] : memref<2x386xf32, #tpu.memory_space<vmem>>, vector<1x16xf32>
    tpu.vector_store %arg16[%c0_134, %c96], %144 {strides = array<i32>} : memref<2x386xf32, #tpu.memory_space<vmem>>, vector<1x16xf32>,
    %146 = vector.extract_strided_slice %131 {offsets = [7, 0], sizes = [1, 16], strides = [1, 1]} : vector<8x32xf32> to vector<1x16xf32>
    %c0_135 = arith.constant 0 : index
    %c112 = arith.constant 112 : index
    %147 = vector.load %arg16[%c0_135, %c112] : memref<2x386xf32, #tpu.memory_space<vmem>>, vector<1x16xf32>
    tpu.vector_store %arg16[%c0_135, %c112], %146 {strides = array<i32>} : memref<2x386xf32, #tpu.memory_space<vmem>>, vector<1x16xf32>,
    %148 = vector.extract_strided_slice %131 {offsets = [0, 16], sizes = [1, 16], strides = [1, 1]} : vector<8x32xf32> to vector<1x16xf32>
    %c1_136 = arith.constant 1 : index
    %c0_137 = arith.constant 0 : index
    %149 = vector.load %arg16[%c1_136, %c0_137] : memref<2x386xf32, #tpu.memory_space<vmem>>, vector<1x16xf32>
    tpu.vector_store %arg16[%c1_136, %c0_137], %148 {strides = array<i32>} : memref<2x386xf32, #tpu.memory_space<vmem>>, vector<1x16xf32>,
    %150 = vector.extract_strided_slice %131 {offsets = [1, 16], sizes = [1, 16], strides = [1, 1]} : vector<8x32xf32> to vector<1x16xf32>
    %c1_138 = arith.constant 1 : index
    %c16_139 = arith.constant 16 : index
    %151 = vector.load %arg16[%c1_138, %c16_139] : memref<2x386xf32, #tpu.memory_space<vmem>>, vector<1x16xf32>
    tpu.vector_store %arg16[%c1_138, %c16_139], %150 {strides = array<i32>} : memref<2x386xf32, #tpu.memory_space<vmem>>, vector<1x16xf32>,
    %152 = vector.extract_strided_slice %131 {offsets = [2, 16], sizes = [1, 16], strides = [1, 1]} : vector<8x32xf32> to vector<1x16xf32>
    %c1_140 = arith.constant 1 : index
    %c32_141 = arith.constant 32 : index
    %153 = vector.load %arg16[%c1_140, %c32_141] : memref<2x386xf32, #tpu.memory_space<vmem>>, vector<1x16xf32>
    tpu.vector_store %arg16[%c1_140, %c32_141], %152 {strides = array<i32>} : memref<2x386xf32, #tpu.memory_space<vmem>>, vector<1x16xf32>,
    %154 = vector.extract_strided_slice %131 {offsets = [3, 16], sizes = [1, 16], strides = [1, 1]} : vector<8x32xf32> to vector<1x16xf32>
    %c1_142 = arith.constant 1 : index
    %c48_143 = arith.constant 48 : index
    %155 = vector.load %arg16[%c1_142, %c48_143] : memref<2x386xf32, #tpu.memory_space<vmem>>, vector<1x16xf32>
    tpu.vector_store %arg16[%c1_142, %c48_143], %154 {strides = array<i32>} : memref<2x386xf32, #tpu.memory_space<vmem>>, vector<1x16xf32>,
    %156 = vector.extract_strided_slice %131 {offsets = [4, 16], sizes = [1, 16], strides = [1, 1]} : vector<8x32xf32> to vector<1x16xf32>
    %c1_144 = arith.constant 1 : index
    %c64_145 = arith.constant 64 : index
    %157 = vector.load %arg16[%c1_144, %c64_145] : memref<2x386xf32, #tpu.memory_space<vmem>>, vector<1x16xf32>
    tpu.vector_store %arg16[%c1_144, %c64_145], %156 {strides = array<i32>} : memref<2x386xf32, #tpu.memory_space<vmem>>, vector<1x16xf32>,
    %158 = vector.extract_strided_slice %131 {offsets = [5, 16], sizes = [1, 16], strides = [1, 1]} : vector<8x32xf32> to vector<1x16xf32>
    %c1_146 = arith.constant 1 : index
    %c80_147 = arith.constant 80 : index
    %159 = vector.load %arg16[%c1_146, %c80_147] : memref<2x386xf32, #tpu.memory_space<vmem>>, vector<1x16xf32>
    tpu.vector_store %arg16[%c1_146, %c80_147], %158 {strides = array<i32>} : memref<2x386xf32, #tpu.memory_space<vmem>>, vector<1x16xf32>,
    %160 = vector.extract_strided_slice %131 {offsets = [6, 16], sizes = [1, 16], strides = [1, 1]} : vector<8x32xf32> to vector<1x16xf32>
    %c1_148 = arith.constant 1 : index
    %c96_149 = arith.constant 96 : index
    %161 = vector.load %arg16[%c1_148, %c96_149] : memref<2x386xf32, #tpu.memory_space<vmem>>, vector<1x16xf32>
    tpu.vector_store %arg16[%c1_148, %c96_149], %160 {strides = array<i32>} : memref<2x386xf32, #tpu.memory_space<vmem>>, vector<1x16xf32>,
    %162 = vector.extract_strided_slice %131 {offsets = [7, 16], sizes = [1, 16], strides = [1, 1]} : vector<8x32xf32> to vector<1x16xf32>
    %c1_150 = arith.constant 1 : index
    %c112_151 = arith.constant 112 : index
    %163 = vector.load %arg16[%c1_150, %c112_151] : memref<2x386xf32, #tpu.memory_space<vmem>>, vector<1x16xf32>
    tpu.vector_store %arg16[%c1_150, %c112_151], %162 {strides = array<i32>} : memref<2x386xf32, #tpu.memory_space<vmem>>, vector<1x16xf32>,
    %c1_152 = arith.constant 1 : index
    %c0_153 = arith.constant 0 : index
    %c0_154 = arith.constant 0 : index
    %164 = vector.load %arg1[%c1_152, %c0_153, %c0_154] : memref<3x8x36xf32, #tpu.memory_space<vmem>>, vector<1x8x36xf32>
    %165 = vector.shape_cast %164 : vector<1x8x36xf32> to vector<8x36xf32>
    %cst_155 = arith.constant dense<0.000000e+00> : vector<8x32xf32>
    %166 = tpu.matmul %165, %48, %cst_155 {dimension_numbers = #tpu.dot_dimension_numbers<[1], [0], [0], [1], [0, 0, 1, 1], [], []>} : vector<8x36xf32>, vector<36x32xf32>, vector<8x32xf32> -> vector<8x32xf32>
    %c1_156 = arith.constant 1 : index
    %c0_157 = arith.constant 0 : index
    %c0_158 = arith.constant 0 : index
    %167 = vector.load %arg2[%c1_156, %c0_157, %c0_158] : memref<3x8x1xf32, #tpu.memory_space<vmem>>, vector<1x8x1xf32>
    %168 = vector.shape_cast %167 : vector<1x8x1xf32> to vector<8x1xf32>
    %169 = vector.broadcast %168 : vector<8x1xf32> to vector<8x32xf32>
    %170 = arith.addf %166, %169 : vector<8x32xf32>
    %cst_159 = arith.constant 0.000000e+00 : f32
    %171 = vector.broadcast %cst_159 : f32 to vector<8x32xf32>
    %172 = arith.maximumf %170, %171 : vector<8x32xf32>
    %173 = vector.extract_strided_slice %172 {offsets = [0, 0], sizes = [8, 16], strides = [1, 1]} : vector<8x32xf32> to vector<8x16xf32>
    %cst_160 = arith.constant dense<0.000000e+00> : vector<8xf32>
    %174 = vector.multi_reduction <add>, %173, %cst_160 [1] : vector<8x16xf32> to vector<8xf32>
    %175 = vector.shape_cast %174 : vector<8xf32> to vector<8x1xf32>
    %cst_161 = arith.constant 1.600000e+01 : f32
    %176 = vector.broadcast %cst_161 : f32 to vector<8x1xf32>
    %177 = arith.divf %175, %176 : vector<8x1xf32>
    %c1_162 = arith.constant 1 : index
    %c0_163 = arith.constant 0 : index
    %c0_164 = arith.constant 0 : index
    %178 = vector.load %arg3[%c1_162, %c0_163, %c0_164] : memref<3x4x8xf32, #tpu.memory_space<vmem>>, vector<1x4x8xf32>
    %179 = vector.shape_cast %178 : vector<1x4x8xf32> to vector<4x8xf32>
    %cst_165 = arith.constant dense<0.000000e+00> : vector<4x1xf32>
    %180 = tpu.matmul %179, %177, %cst_165 {dimension_numbers = #tpu.dot_dimension_numbers<[1], [0], [0], [1], [0, 0, 1, 1], [], []>} : vector<4x8xf32>, vector<8x1xf32>, vector<4x1xf32> -> vector<4x1xf32>
    %c1_166 = arith.constant 1 : index
    %c0_167 = arith.constant 0 : index
    %c0_168 = arith.constant 0 : index
    %181 = vector.load %arg4[%c1_166, %c0_167, %c0_168] : memref<3x4x1xf32, #tpu.memory_space<vmem>>, vector<1x4x1xf32>
    %182 = vector.shape_cast %181 : vector<1x4x1xf32> to vector<4x1xf32>
    %183 = arith.addf %180, %182 : vector<4x1xf32>
    %cst_169 = arith.constant 0.000000e+00 : f32
    %184 = vector.broadcast %cst_169 : f32 to vector<4x1xf32>
    %185 = arith.maximumf %183, %184 : vector<4x1xf32>
    %c1_170 = arith.constant 1 : index
    %c0_171 = arith.constant 0 : index
    %c0_172 = arith.constant 0 : index
    %186 = vector.load %arg5[%c1_170, %c0_171, %c0_172] : memref<3x8x4xf32, #tpu.memory_space<vmem>>, vector<1x8x4xf32>
    %187 = vector.shape_cast %186 : vector<1x8x4xf32> to vector<8x4xf32>
    %cst_173 = arith.constant dense<0.000000e+00> : vector<8x1xf32>
    %188 = tpu.matmul %187, %185, %cst_173 {dimension_numbers = #tpu.dot_dimension_numbers<[1], [0], [0], [1], [0, 0, 1, 1], [], []>} : vector<8x4xf32>, vector<4x1xf32>, vector<8x1xf32> -> vector<8x1xf32>
    %c1_174 = arith.constant 1 : index
    %c0_175 = arith.constant 0 : index
    %c0_176 = arith.constant 0 : index
    %189 = vector.load %arg6[%c1_174, %c0_175, %c0_176] : memref<3x8x1xf32, #tpu.memory_space<vmem>>, vector<1x8x1xf32>
    %190 = vector.shape_cast %189 : vector<1x8x1xf32> to vector<8x1xf32>
    %191 = arith.addf %188, %190 : vector<8x1xf32>
    %cst_177 = arith.constant 0.000000e+00 : f32
    %192 = vector.broadcast %cst_177 : f32 to vector<8x1xf32>
    %193 = arith.subf %192, %191 : vector<8x1xf32>
    %194 = math.exp %193 : vector<8x1xf32>
    %cst_178 = arith.constant 1.000000e+00 : f32
    %195 = vector.broadcast %cst_178 : f32 to vector<8x1xf32>
    %196 = arith.addf %195, %194 : vector<8x1xf32>
    %197 = tpu.reciprocal %196 {approx = true} : vector<8x1xf32> -> vector<8x1xf32>
    %198 = vector.broadcast %197 : vector<8x1xf32> to vector<8x16xf32>
    %199 = arith.mulf %173, %198 : vector<8x16xf32>
    %200 = vector.extract_strided_slice %199 {offsets = [0, 0], sizes = [8, 15], strides = [1, 1]} : vector<8x16xf32> to vector<8x15xf32>
    %c0_179 = arith.constant 0 : index
    %c1_180 = arith.constant 1 : index
    %201 = vector.load %arg15[%c0_179, %c1_180] : memref<24x32xf32, #tpu.memory_space<vmem>>, vector<8x15xf32>
    tpu.vector_store %arg15[%c0_179, %c1_180], %200 {strides = array<i32>} : memref<24x32xf32, #tpu.memory_space<vmem>>, vector<8x15xf32>,
    %c8_181 = arith.constant 8 : index
    %c0_182 = arith.constant 0 : index
    %202 = vector.load %arg15[%c8_181, %c0_182] : memref<24x32xf32, #tpu.memory_space<vmem>>, vector<8x16xf32>
    tpu.vector_store %arg15[%c8_181, %c0_182], %199 {strides = array<i32>} : memref<24x32xf32, #tpu.memory_space<vmem>>, vector<8x16xf32>,
    %203 = vector.extract_strided_slice %199 {offsets = [0, 1], sizes = [8, 15], strides = [1, 1]} : vector<8x16xf32> to vector<8x15xf32>
    %c16_183 = arith.constant 16 : index
    %c0_184 = arith.constant 0 : index
    %204 = vector.load %arg15[%c16_183, %c0_184] : memref<24x32xf32, #tpu.memory_space<vmem>>, vector<8x15xf32>
    tpu.vector_store %arg15[%c16_183, %c0_184], %203 {strides = array<i32>} : memref<24x32xf32, #tpu.memory_space<vmem>>, vector<8x15xf32>,
    %205 = vector.extract_strided_slice %172 {offsets = [0, 16], sizes = [8, 16], strides = [1, 1]} : vector<8x32xf32> to vector<8x16xf32>
    %cst_185 = arith.constant dense<0.000000e+00> : vector<8xf32>
    %206 = vector.multi_reduction <add>, %205, %cst_185 [1] : vector<8x16xf32> to vector<8xf32>
    %207 = vector.shape_cast %206 : vector<8xf32> to vector<8x1xf32>
    %cst_186 = arith.constant 1.600000e+01 : f32
    %208 = vector.broadcast %cst_186 : f32 to vector<8x1xf32>
    %209 = arith.divf %207, %208 : vector<8x1xf32>
    %c1_187 = arith.constant 1 : index
    %c0_188 = arith.constant 0 : index
    %c0_189 = arith.constant 0 : index
    %210 = vector.load %arg3[%c1_187, %c0_188, %c0_189] : memref<3x4x8xf32, #tpu.memory_space<vmem>>, vector<1x4x8xf32>
    %211 = vector.shape_cast %210 : vector<1x4x8xf32> to vector<4x8xf32>
    %cst_190 = arith.constant dense<0.000000e+00> : vector<4x1xf32>
    %212 = tpu.matmul %211, %209, %cst_190 {dimension_numbers = #tpu.dot_dimension_numbers<[1], [0], [0], [1], [0, 0, 1, 1], [], []>} : vector<4x8xf32>, vector<8x1xf32>, vector<4x1xf32> -> vector<4x1xf32>
    %c1_191 = arith.constant 1 : index
    %c0_192 = arith.constant 0 : index
    %c0_193 = arith.constant 0 : index
    %213 = vector.load %arg4[%c1_191, %c0_192, %c0_193] : memref<3x4x1xf32, #tpu.memory_space<vmem>>, vector<1x4x1xf32>
    %214 = vector.shape_cast %213 : vector<1x4x1xf32> to vector<4x1xf32>
    %215 = arith.addf %212, %214 : vector<4x1xf32>
    %cst_194 = arith.constant 0.000000e+00 : f32
    %216 = vector.broadcast %cst_194 : f32 to vector<4x1xf32>
    %217 = arith.maximumf %215, %216 : vector<4x1xf32>
    %c1_195 = arith.constant 1 : index
    %c0_196 = arith.constant 0 : index
    %c0_197 = arith.constant 0 : index
    %218 = vector.load %arg5[%c1_195, %c0_196, %c0_197] : memref<3x8x4xf32, #tpu.memory_space<vmem>>, vector<1x8x4xf32>
    %219 = vector.shape_cast %218 : vector<1x8x4xf32> to vector<8x4xf32>
    %cst_198 = arith.constant dense<0.000000e+00> : vector<8x1xf32>
    %220 = tpu.matmul %219, %217, %cst_198 {dimension_numbers = #tpu.dot_dimension_numbers<[1], [0], [0], [1], [0, 0, 1, 1], [], []>} : vector<8x4xf32>, vector<4x1xf32>, vector<8x1xf32> -> vector<8x1xf32>
    %c1_199 = arith.constant 1 : index
    %c0_200 = arith.constant 0 : index
    %c0_201 = arith.constant 0 : index
    %221 = vector.load %arg6[%c1_199, %c0_200, %c0_201] : memref<3x8x1xf32, #tpu.memory_space<vmem>>, vector<1x8x1xf32>
    %222 = vector.shape_cast %221 : vector<1x8x1xf32> to vector<8x1xf32>
    %223 = arith.addf %220, %222 : vector<8x1xf32>
    %cst_202 = arith.constant 0.000000e+00 : f32
    %224 = vector.broadcast %cst_202 : f32 to vector<8x1xf32>
    %225 = arith.subf %224, %223 : vector<8x1xf32>
    %226 = math.exp %225 : vector<8x1xf32>
    %cst_203 = arith.constant 1.000000e+00 : f32
    %227 = vector.broadcast %cst_203 : f32 to vector<8x1xf32>
    %228 = arith.addf %227, %226 : vector<8x1xf32>
    %229 = tpu.reciprocal %228 {approx = true} : vector<8x1xf32> -> vector<8x1xf32>
    %230 = vector.broadcast %229 : vector<8x1xf32> to vector<8x16xf32>
    %231 = arith.mulf %205, %230 : vector<8x16xf32>
    %232 = vector.extract_strided_slice %231 {offsets = [0, 0], sizes = [8, 15], strides = [1, 1]} : vector<8x16xf32> to vector<8x15xf32>
    %c0_204 = arith.constant 0 : index
    %c17_205 = arith.constant 17 : index
    %233 = vector.load %arg15[%c0_204, %c17_205] : memref<24x32xf32, #tpu.memory_space<vmem>>, vector<8x15xf32>
    tpu.vector_store %arg15[%c0_204, %c17_205], %232 {strides = array<i32>} : memref<24x32xf32, #tpu.memory_space<vmem>>, vector<8x15xf32>,
    %c8_206 = arith.constant 8 : index
    %c16_207 = arith.constant 16 : index
    %234 = vector.load %arg15[%c8_206, %c16_207] : memref<24x32xf32, #tpu.memory_space<vmem>>, vector<8x16xf32>
    tpu.vector_store %arg15[%c8_206, %c16_207], %231 {strides = array<i32>} : memref<24x32xf32, #tpu.memory_space<vmem>>, vector<8x16xf32>,
    %235 = vector.extract_strided_slice %231 {offsets = [0, 1], sizes = [8, 15], strides = [1, 1]} : vector<8x16xf32> to vector<8x15xf32>
    %c16_208 = arith.constant 16 : index
    %c16_209 = arith.constant 16 : index
    %236 = vector.load %arg15[%c16_208, %c16_209] : memref<24x32xf32, #tpu.memory_space<vmem>>, vector<8x15xf32>
    tpu.vector_store %arg15[%c16_208, %c16_209], %235 {strides = array<i32>} : memref<24x32xf32, #tpu.memory_space<vmem>>, vector<8x15xf32>,
    %c1_210 = arith.constant 1 : index
    %c0_211 = arith.constant 0 : index
    %c0_212 = arith.constant 0 : index
    %237 = vector.load %arg7[%c1_210, %c0_211, %c0_212] : memref<3x8x24xf32, #tpu.memory_space<vmem>>, vector<1x8x24xf32>
    %238 = vector.shape_cast %237 : vector<1x8x24xf32> to vector<8x24xf32>
    %c0_213 = arith.constant 0 : index
    %c0_214 = arith.constant 0 : index
    %239 = vector.load %arg15[%c0_213, %c0_214] : memref<24x32xf32, #tpu.memory_space<vmem>>, vector<24x32xf32>
    %cst_215 = arith.constant dense<0.000000e+00> : vector<8x32xf32>
    %240 = tpu.matmul %238, %239, %cst_215 {dimension_numbers = #tpu.dot_dimension_numbers<[1], [0], [0], [1], [0, 0, 1, 1], [], []>} : vector<8x24xf32>, vector<24x32xf32>, vector<8x32xf32> -> vector<8x32xf32>
    %c1_216 = arith.constant 1 : index
    %c0_217 = arith.constant 0 : index
    %c0_218 = arith.constant 0 : index
    %241 = vector.load %arg8[%c1_216, %c0_217, %c0_218] : memref<3x8x1xf32, #tpu.memory_space<vmem>>, vector<1x8x1xf32>
    %242 = vector.shape_cast %241 : vector<1x8x1xf32> to vector<8x1xf32>
    %243 = vector.broadcast %242 : vector<8x1xf32> to vector<8x32xf32>
    %244 = arith.addf %240, %243 : vector<8x32xf32>
    %cst_219 = arith.constant 0.000000e+00 : f32
    %245 = vector.broadcast %cst_219 : f32 to vector<8x32xf32>
    %246 = arith.maximumf %244, %245 : vector<8x32xf32>
    %247 = vector.extract_strided_slice %246 {offsets = [0, 0], sizes = [1, 16], strides = [1, 1]} : vector<8x32xf32> to vector<1x16xf32>
    %c0_220 = arith.constant 0 : index
    %c128 = arith.constant 128 : index
    %248 = vector.load %arg16[%c0_220, %c128] : memref<2x386xf32, #tpu.memory_space<vmem>>, vector<1x16xf32>
    tpu.vector_store %arg16[%c0_220, %c128], %247 {strides = array<i32>} : memref<2x386xf32, #tpu.memory_space<vmem>>, vector<1x16xf32>,
    %249 = vector.extract_strided_slice %246 {offsets = [1, 0], sizes = [1, 16], strides = [1, 1]} : vector<8x32xf32> to vector<1x16xf32>
    %c0_221 = arith.constant 0 : index
    %c144 = arith.constant 144 : index
    %250 = vector.load %arg16[%c0_221, %c144] : memref<2x386xf32, #tpu.memory_space<vmem>>, vector<1x16xf32>
    tpu.vector_store %arg16[%c0_221, %c144], %249 {strides = array<i32>} : memref<2x386xf32, #tpu.memory_space<vmem>>, vector<1x16xf32>,
    %251 = vector.extract_strided_slice %246 {offsets = [2, 0], sizes = [1, 16], strides = [1, 1]} : vector<8x32xf32> to vector<1x16xf32>
    %c0_222 = arith.constant 0 : index
    %c160 = arith.constant 160 : index
    %252 = vector.load %arg16[%c0_222, %c160] : memref<2x386xf32, #tpu.memory_space<vmem>>, vector<1x16xf32>
    tpu.vector_store %arg16[%c0_222, %c160], %251 {strides = array<i32>} : memref<2x386xf32, #tpu.memory_space<vmem>>, vector<1x16xf32>,
    %253 = vector.extract_strided_slice %246 {offsets = [3, 0], sizes = [1, 16], strides = [1, 1]} : vector<8x32xf32> to vector<1x16xf32>
    %c0_223 = arith.constant 0 : index
    %c176 = arith.constant 176 : index
    %254 = vector.load %arg16[%c0_223, %c176] : memref<2x386xf32, #tpu.memory_space<vmem>>, vector<1x16xf32>
    tpu.vector_store %arg16[%c0_223, %c176], %253 {strides = array<i32>} : memref<2x386xf32, #tpu.memory_space<vmem>>, vector<1x16xf32>,
    %255 = vector.extract_strided_slice %246 {offsets = [4, 0], sizes = [1, 16], strides = [1, 1]} : vector<8x32xf32> to vector<1x16xf32>
    %c0_224 = arith.constant 0 : index
    %c192 = arith.constant 192 : index
    %256 = vector.load %arg16[%c0_224, %c192] : memref<2x386xf32, #tpu.memory_space<vmem>>, vector<1x16xf32>
    tpu.vector_store %arg16[%c0_224, %c192], %255 {strides = array<i32>} : memref<2x386xf32, #tpu.memory_space<vmem>>, vector<1x16xf32>,
    %257 = vector.extract_strided_slice %246 {offsets = [5, 0], sizes = [1, 16], strides = [1, 1]} : vector<8x32xf32> to vector<1x16xf32>
    %c0_225 = arith.constant 0 : index
    %c208 = arith.constant 208 : index
    %258 = vector.load %arg16[%c0_225, %c208] : memref<2x386xf32, #tpu.memory_space<vmem>>, vector<1x16xf32>
    tpu.vector_store %arg16[%c0_225, %c208], %257 {strides = array<i32>} : memref<2x386xf32, #tpu.memory_space<vmem>>, vector<1x16xf32>,
    %259 = vector.extract_strided_slice %246 {offsets = [6, 0], sizes = [1, 16], strides = [1, 1]} : vector<8x32xf32> to vector<1x16xf32>
    %c0_226 = arith.constant 0 : index
    %c224 = arith.constant 224 : index
    %260 = vector.load %arg16[%c0_226, %c224] : memref<2x386xf32, #tpu.memory_space<vmem>>, vector<1x16xf32>
    tpu.vector_store %arg16[%c0_226, %c224], %259 {strides = array<i32>} : memref<2x386xf32, #tpu.memory_space<vmem>>, vector<1x16xf32>,
    %261 = vector.extract_strided_slice %246 {offsets = [7, 0], sizes = [1, 16], strides = [1, 1]} : vector<8x32xf32> to vector<1x16xf32>
    %c0_227 = arith.constant 0 : index
    %c240 = arith.constant 240 : index
    %262 = vector.load %arg16[%c0_227, %c240] : memref<2x386xf32, #tpu.memory_space<vmem>>, vector<1x16xf32>
    tpu.vector_store %arg16[%c0_227, %c240], %261 {strides = array<i32>} : memref<2x386xf32, #tpu.memory_space<vmem>>, vector<1x16xf32>,
    %263 = vector.extract_strided_slice %246 {offsets = [0, 16], sizes = [1, 16], strides = [1, 1]} : vector<8x32xf32> to vector<1x16xf32>
    %c1_228 = arith.constant 1 : index
    %c128_229 = arith.constant 128 : index
    %264 = vector.load %arg16[%c1_228, %c128_229] : memref<2x386xf32, #tpu.memory_space<vmem>>, vector<1x16xf32>
    tpu.vector_store %arg16[%c1_228, %c128_229], %263 {strides = array<i32>} : memref<2x386xf32, #tpu.memory_space<vmem>>, vector<1x16xf32>,
    %265 = vector.extract_strided_slice %246 {offsets = [1, 16], sizes = [1, 16], strides = [1, 1]} : vector<8x32xf32> to vector<1x16xf32>
    %c1_230 = arith.constant 1 : index
    %c144_231 = arith.constant 144 : index
    %266 = vector.load %arg16[%c1_230, %c144_231] : memref<2x386xf32, #tpu.memory_space<vmem>>, vector<1x16xf32>
    tpu.vector_store %arg16[%c1_230, %c144_231], %265 {strides = array<i32>} : memref<2x386xf32, #tpu.memory_space<vmem>>, vector<1x16xf32>,
    %267 = vector.extract_strided_slice %246 {offsets = [2, 16], sizes = [1, 16], strides = [1, 1]} : vector<8x32xf32> to vector<1x16xf32>
    %c1_232 = arith.constant 1 : index
    %c160_233 = arith.constant 160 : index
    %268 = vector.load %arg16[%c1_232, %c160_233] : memref<2x386xf32, #tpu.memory_space<vmem>>, vector<1x16xf32>
    tpu.vector_store %arg16[%c1_232, %c160_233], %267 {strides = array<i32>} : memref<2x386xf32, #tpu.memory_space<vmem>>, vector<1x16xf32>,
    %269 = vector.extract_strided_slice %246 {offsets = [3, 16], sizes = [1, 16], strides = [1, 1]} : vector<8x32xf32> to vector<1x16xf32>
    %c1_234 = arith.constant 1 : index
    %c176_235 = arith.constant 176 : index
    %270 = vector.load %arg16[%c1_234, %c176_235] : memref<2x386xf32, #tpu.memory_space<vmem>>, vector<1x16xf32>
    tpu.vector_store %arg16[%c1_234, %c176_235], %269 {strides = array<i32>} : memref<2x386xf32, #tpu.memory_space<vmem>>, vector<1x16xf32>,
    %271 = vector.extract_strided_slice %246 {offsets = [4, 16], sizes = [1, 16], strides = [1, 1]} : vector<8x32xf32> to vector<1x16xf32>
    %c1_236 = arith.constant 1 : index
    %c192_237 = arith.constant 192 : index
    %272 = vector.load %arg16[%c1_236, %c192_237] : memref<2x386xf32, #tpu.memory_space<vmem>>, vector<1x16xf32>
    tpu.vector_store %arg16[%c1_236, %c192_237], %271 {strides = array<i32>} : memref<2x386xf32, #tpu.memory_space<vmem>>, vector<1x16xf32>,
    %273 = vector.extract_strided_slice %246 {offsets = [5, 16], sizes = [1, 16], strides = [1, 1]} : vector<8x32xf32> to vector<1x16xf32>
    %c1_238 = arith.constant 1 : index
    %c208_239 = arith.constant 208 : index
    %274 = vector.load %arg16[%c1_238, %c208_239] : memref<2x386xf32, #tpu.memory_space<vmem>>, vector<1x16xf32>
    tpu.vector_store %arg16[%c1_238, %c208_239], %273 {strides = array<i32>} : memref<2x386xf32, #tpu.memory_space<vmem>>, vector<1x16xf32>,
    %275 = vector.extract_strided_slice %246 {offsets = [6, 16], sizes = [1, 16], strides = [1, 1]} : vector<8x32xf32> to vector<1x16xf32>
    %c1_240 = arith.constant 1 : index
    %c224_241 = arith.constant 224 : index
    %276 = vector.load %arg16[%c1_240, %c224_241] : memref<2x386xf32, #tpu.memory_space<vmem>>, vector<1x16xf32>
    tpu.vector_store %arg16[%c1_240, %c224_241], %275 {strides = array<i32>} : memref<2x386xf32, #tpu.memory_space<vmem>>, vector<1x16xf32>,
    %277 = vector.extract_strided_slice %246 {offsets = [7, 16], sizes = [1, 16], strides = [1, 1]} : vector<8x32xf32> to vector<1x16xf32>
    %c1_242 = arith.constant 1 : index
    %c240_243 = arith.constant 240 : index
    %278 = vector.load %arg16[%c1_242, %c240_243] : memref<2x386xf32, #tpu.memory_space<vmem>>, vector<1x16xf32>
    tpu.vector_store %arg16[%c1_242, %c240_243], %277 {strides = array<i32>} : memref<2x386xf32, #tpu.memory_space<vmem>>, vector<1x16xf32>,
    %c2_244 = arith.constant 2 : index
    %c0_245 = arith.constant 0 : index
    %c0_246 = arith.constant 0 : index
    %279 = vector.load %arg1[%c2_244, %c0_245, %c0_246] : memref<3x8x36xf32, #tpu.memory_space<vmem>>, vector<1x8x36xf32>
    %280 = vector.shape_cast %279 : vector<1x8x36xf32> to vector<8x36xf32>
    %cst_247 = arith.constant dense<0.000000e+00> : vector<8x32xf32>
    %281 = tpu.matmul %280, %48, %cst_247 {dimension_numbers = #tpu.dot_dimension_numbers<[1], [0], [0], [1], [0, 0, 1, 1], [], []>} : vector<8x36xf32>, vector<36x32xf32>, vector<8x32xf32> -> vector<8x32xf32>
    %c2_248 = arith.constant 2 : index
    %c0_249 = arith.constant 0 : index
    %c0_250 = arith.constant 0 : index
    %282 = vector.load %arg2[%c2_248, %c0_249, %c0_250] : memref<3x8x1xf32, #tpu.memory_space<vmem>>, vector<1x8x1xf32>
    %283 = vector.shape_cast %282 : vector<1x8x1xf32> to vector<8x1xf32>
    %284 = vector.broadcast %283 : vector<8x1xf32> to vector<8x32xf32>
    %285 = arith.addf %281, %284 : vector<8x32xf32>
    %cst_251 = arith.constant 0.000000e+00 : f32
    %286 = vector.broadcast %cst_251 : f32 to vector<8x32xf32>
    %287 = arith.maximumf %285, %286 : vector<8x32xf32>
    %288 = vector.extract_strided_slice %287 {offsets = [0, 0], sizes = [8, 16], strides = [1, 1]} : vector<8x32xf32> to vector<8x16xf32>
    %cst_252 = arith.constant dense<0.000000e+00> : vector<8xf32>
    %289 = vector.multi_reduction <add>, %288, %cst_252 [1] : vector<8x16xf32> to vector<8xf32>
    %290 = vector.shape_cast %289 : vector<8xf32> to vector<8x1xf32>
    %cst_253 = arith.constant 1.600000e+01 : f32
    %291 = vector.broadcast %cst_253 : f32 to vector<8x1xf32>
    %292 = arith.divf %290, %291 : vector<8x1xf32>
    %c2_254 = arith.constant 2 : index
    %c0_255 = arith.constant 0 : index
    %c0_256 = arith.constant 0 : index
    %293 = vector.load %arg3[%c2_254, %c0_255, %c0_256] : memref<3x4x8xf32, #tpu.memory_space<vmem>>, vector<1x4x8xf32>
    %294 = vector.shape_cast %293 : vector<1x4x8xf32> to vector<4x8xf32>
    %cst_257 = arith.constant dense<0.000000e+00> : vector<4x1xf32>
    %295 = tpu.matmul %294, %292, %cst_257 {dimension_numbers = #tpu.dot_dimension_numbers<[1], [0], [0], [1], [0, 0, 1, 1], [], []>} : vector<4x8xf32>, vector<8x1xf32>, vector<4x1xf32> -> vector<4x1xf32>
    %c2_258 = arith.constant 2 : index
    %c0_259 = arith.constant 0 : index
    %c0_260 = arith.constant 0 : index
    %296 = vector.load %arg4[%c2_258, %c0_259, %c0_260] : memref<3x4x1xf32, #tpu.memory_space<vmem>>, vector<1x4x1xf32>
    %297 = vector.shape_cast %296 : vector<1x4x1xf32> to vector<4x1xf32>
    %298 = arith.addf %295, %297 : vector<4x1xf32>
    %cst_261 = arith.constant 0.000000e+00 : f32
    %299 = vector.broadcast %cst_261 : f32 to vector<4x1xf32>
    %300 = arith.maximumf %298, %299 : vector<4x1xf32>
    %c2_262 = arith.constant 2 : index
    %c0_263 = arith.constant 0 : index
    %c0_264 = arith.constant 0 : index
    %301 = vector.load %arg5[%c2_262, %c0_263, %c0_264] : memref<3x8x4xf32, #tpu.memory_space<vmem>>, vector<1x8x4xf32>
    %302 = vector.shape_cast %301 : vector<1x8x4xf32> to vector<8x4xf32>
    %cst_265 = arith.constant dense<0.000000e+00> : vector<8x1xf32>
    %303 = tpu.matmul %302, %300, %cst_265 {dimension_numbers = #tpu.dot_dimension_numbers<[1], [0], [0], [1], [0, 0, 1, 1], [], []>} : vector<8x4xf32>, vector<4x1xf32>, vector<8x1xf32> -> vector<8x1xf32>
    %c2_266 = arith.constant 2 : index
    %c0_267 = arith.constant 0 : index
    %c0_268 = arith.constant 0 : index
    %304 = vector.load %arg6[%c2_266, %c0_267, %c0_268] : memref<3x8x1xf32, #tpu.memory_space<vmem>>, vector<1x8x1xf32>
    %305 = vector.shape_cast %304 : vector<1x8x1xf32> to vector<8x1xf32>
    %306 = arith.addf %303, %305 : vector<8x1xf32>
    %cst_269 = arith.constant 0.000000e+00 : f32
    %307 = vector.broadcast %cst_269 : f32 to vector<8x1xf32>
    %308 = arith.subf %307, %306 : vector<8x1xf32>
    %309 = math.exp %308 : vector<8x1xf32>
    %cst_270 = arith.constant 1.000000e+00 : f32
    %310 = vector.broadcast %cst_270 : f32 to vector<8x1xf32>
    %311 = arith.addf %310, %309 : vector<8x1xf32>
    %312 = tpu.reciprocal %311 {approx = true} : vector<8x1xf32> -> vector<8x1xf32>
    %313 = vector.broadcast %312 : vector<8x1xf32> to vector<8x16xf32>
    %314 = arith.mulf %288, %313 : vector<8x16xf32>
    %315 = vector.extract_strided_slice %314 {offsets = [0, 0], sizes = [8, 15], strides = [1, 1]} : vector<8x16xf32> to vector<8x15xf32>
    %c0_271 = arith.constant 0 : index
    %c1_272 = arith.constant 1 : index
    %316 = vector.load %arg15[%c0_271, %c1_272] : memref<24x32xf32, #tpu.memory_space<vmem>>, vector<8x15xf32>
    tpu.vector_store %arg15[%c0_271, %c1_272], %315 {strides = array<i32>} : memref<24x32xf32, #tpu.memory_space<vmem>>, vector<8x15xf32>,
    %c8_273 = arith.constant 8 : index
    %c0_274 = arith.constant 0 : index
    %317 = vector.load %arg15[%c8_273, %c0_274] : memref<24x32xf32, #tpu.memory_space<vmem>>, vector<8x16xf32>
    tpu.vector_store %arg15[%c8_273, %c0_274], %314 {strides = array<i32>} : memref<24x32xf32, #tpu.memory_space<vmem>>, vector<8x16xf32>,
    %318 = vector.extract_strided_slice %314 {offsets = [0, 1], sizes = [8, 15], strides = [1, 1]} : vector<8x16xf32> to vector<8x15xf32>
    %c16_275 = arith.constant 16 : index
    %c0_276 = arith.constant 0 : index
    %319 = vector.load %arg15[%c16_275, %c0_276] : memref<24x32xf32, #tpu.memory_space<vmem>>, vector<8x15xf32>
    tpu.vector_store %arg15[%c16_275, %c0_276], %318 {strides = array<i32>} : memref<24x32xf32, #tpu.memory_space<vmem>>, vector<8x15xf32>,
    %320 = vector.extract_strided_slice %287 {offsets = [0, 16], sizes = [8, 16], strides = [1, 1]} : vector<8x32xf32> to vector<8x16xf32>
    %cst_277 = arith.constant dense<0.000000e+00> : vector<8xf32>
    %321 = vector.multi_reduction <add>, %320, %cst_277 [1] : vector<8x16xf32> to vector<8xf32>
    %322 = vector.shape_cast %321 : vector<8xf32> to vector<8x1xf32>
    %cst_278 = arith.constant 1.600000e+01 : f32
    %323 = vector.broadcast %cst_278 : f32 to vector<8x1xf32>
    %324 = arith.divf %322, %323 : vector<8x1xf32>
    %c2_279 = arith.constant 2 : index
    %c0_280 = arith.constant 0 : index
    %c0_281 = arith.constant 0 : index
    %325 = vector.load %arg3[%c2_279, %c0_280, %c0_281] : memref<3x4x8xf32, #tpu.memory_space<vmem>>, vector<1x4x8xf32>
    %326 = vector.shape_cast %325 : vector<1x4x8xf32> to vector<4x8xf32>
    %cst_282 = arith.constant dense<0.000000e+00> : vector<4x1xf32>
    %327 = tpu.matmul %326, %324, %cst_282 {dimension_numbers = #tpu.dot_dimension_numbers<[1], [0], [0], [1], [0, 0, 1, 1], [], []>} : vector<4x8xf32>, vector<8x1xf32>, vector<4x1xf32> -> vector<4x1xf32>
    %c2_283 = arith.constant 2 : index
    %c0_284 = arith.constant 0 : index
    %c0_285 = arith.constant 0 : index
    %328 = vector.load %arg4[%c2_283, %c0_284, %c0_285] : memref<3x4x1xf32, #tpu.memory_space<vmem>>, vector<1x4x1xf32>
    %329 = vector.shape_cast %328 : vector<1x4x1xf32> to vector<4x1xf32>
    %330 = arith.addf %327, %329 : vector<4x1xf32>
    %cst_286 = arith.constant 0.000000e+00 : f32
    %331 = vector.broadcast %cst_286 : f32 to vector<4x1xf32>
    %332 = arith.maximumf %330, %331 : vector<4x1xf32>
    %c2_287 = arith.constant 2 : index
    %c0_288 = arith.constant 0 : index
    %c0_289 = arith.constant 0 : index
    %333 = vector.load %arg5[%c2_287, %c0_288, %c0_289] : memref<3x8x4xf32, #tpu.memory_space<vmem>>, vector<1x8x4xf32>
    %334 = vector.shape_cast %333 : vector<1x8x4xf32> to vector<8x4xf32>
    %cst_290 = arith.constant dense<0.000000e+00> : vector<8x1xf32>
    %335 = tpu.matmul %334, %332, %cst_290 {dimension_numbers = #tpu.dot_dimension_numbers<[1], [0], [0], [1], [0, 0, 1, 1], [], []>} : vector<8x4xf32>, vector<4x1xf32>, vector<8x1xf32> -> vector<8x1xf32>
    %c2_291 = arith.constant 2 : index
    %c0_292 = arith.constant 0 : index
    %c0_293 = arith.constant 0 : index
    %336 = vector.load %arg6[%c2_291, %c0_292, %c0_293] : memref<3x8x1xf32, #tpu.memory_space<vmem>>, vector<1x8x1xf32>
    %337 = vector.shape_cast %336 : vector<1x8x1xf32> to vector<8x1xf32>
    %338 = arith.addf %335, %337 : vector<8x1xf32>
    %cst_294 = arith.constant 0.000000e+00 : f32
    %339 = vector.broadcast %cst_294 : f32 to vector<8x1xf32>
    %340 = arith.subf %339, %338 : vector<8x1xf32>
    %341 = math.exp %340 : vector<8x1xf32>
    %cst_295 = arith.constant 1.000000e+00 : f32
    %342 = vector.broadcast %cst_295 : f32 to vector<8x1xf32>
    %343 = arith.addf %342, %341 : vector<8x1xf32>
    %344 = tpu.reciprocal %343 {approx = true} : vector<8x1xf32> -> vector<8x1xf32>
    %345 = vector.broadcast %344 : vector<8x1xf32> to vector<8x16xf32>
    %346 = arith.mulf %320, %345 : vector<8x16xf32>
    %347 = vector.extract_strided_slice %346 {offsets = [0, 0], sizes = [8, 15], strides = [1, 1]} : vector<8x16xf32> to vector<8x15xf32>
    %c0_296 = arith.constant 0 : index
    %c17_297 = arith.constant 17 : index
    %348 = vector.load %arg15[%c0_296, %c17_297] : memref<24x32xf32, #tpu.memory_space<vmem>>, vector<8x15xf32>
    tpu.vector_store %arg15[%c0_296, %c17_297], %347 {strides = array<i32>} : memref<24x32xf32, #tpu.memory_space<vmem>>, vector<8x15xf32>,
    %c8_298 = arith.constant 8 : index
    %c16_299 = arith.constant 16 : index
    %349 = vector.load %arg15[%c8_298, %c16_299] : memref<24x32xf32, #tpu.memory_space<vmem>>, vector<8x16xf32>
    tpu.vector_store %arg15[%c8_298, %c16_299], %346 {strides = array<i32>} : memref<24x32xf32, #tpu.memory_space<vmem>>, vector<8x16xf32>,
    %350 = vector.extract_strided_slice %346 {offsets = [0, 1], sizes = [8, 15], strides = [1, 1]} : vector<8x16xf32> to vector<8x15xf32>
    %c16_300 = arith.constant 16 : index
    %c16_301 = arith.constant 16 : index
    %351 = vector.load %arg15[%c16_300, %c16_301] : memref<24x32xf32, #tpu.memory_space<vmem>>, vector<8x15xf32>
    tpu.vector_store %arg15[%c16_300, %c16_301], %350 {strides = array<i32>} : memref<24x32xf32, #tpu.memory_space<vmem>>, vector<8x15xf32>,
    %c2_302 = arith.constant 2 : index
    %c0_303 = arith.constant 0 : index
    %c0_304 = arith.constant 0 : index
    %352 = vector.load %arg7[%c2_302, %c0_303, %c0_304] : memref<3x8x24xf32, #tpu.memory_space<vmem>>, vector<1x8x24xf32>
    %353 = vector.shape_cast %352 : vector<1x8x24xf32> to vector<8x24xf32>
    %c0_305 = arith.constant 0 : index
    %c0_306 = arith.constant 0 : index
    %354 = vector.load %arg15[%c0_305, %c0_306] : memref<24x32xf32, #tpu.memory_space<vmem>>, vector<24x32xf32>
    %cst_307 = arith.constant dense<0.000000e+00> : vector<8x32xf32>
    %355 = tpu.matmul %353, %354, %cst_307 {dimension_numbers = #tpu.dot_dimension_numbers<[1], [0], [0], [1], [0, 0, 1, 1], [], []>} : vector<8x24xf32>, vector<24x32xf32>, vector<8x32xf32> -> vector<8x32xf32>
    %c2_308 = arith.constant 2 : index
    %c0_309 = arith.constant 0 : index
    %c0_310 = arith.constant 0 : index
    %356 = vector.load %arg8[%c2_308, %c0_309, %c0_310] : memref<3x8x1xf32, #tpu.memory_space<vmem>>, vector<1x8x1xf32>
    %357 = vector.shape_cast %356 : vector<1x8x1xf32> to vector<8x1xf32>
    %358 = vector.broadcast %357 : vector<8x1xf32> to vector<8x32xf32>
    %359 = arith.addf %355, %358 : vector<8x32xf32>
    %cst_311 = arith.constant 0.000000e+00 : f32
    %360 = vector.broadcast %cst_311 : f32 to vector<8x32xf32>
    %361 = arith.maximumf %359, %360 : vector<8x32xf32>
    %362 = vector.extract_strided_slice %361 {offsets = [0, 0], sizes = [1, 16], strides = [1, 1]} : vector<8x32xf32> to vector<1x16xf32>
    %c0_312 = arith.constant 0 : index
    %c256 = arith.constant 256 : index
    %363 = vector.load %arg16[%c0_312, %c256] : memref<2x386xf32, #tpu.memory_space<vmem>>, vector<1x16xf32>
    tpu.vector_store %arg16[%c0_312, %c256], %362 {strides = array<i32>} : memref<2x386xf32, #tpu.memory_space<vmem>>, vector<1x16xf32>,
    %364 = vector.extract_strided_slice %361 {offsets = [1, 0], sizes = [1, 16], strides = [1, 1]} : vector<8x32xf32> to vector<1x16xf32>
    %c0_313 = arith.constant 0 : index
    %c272 = arith.constant 272 : index
    %365 = vector.load %arg16[%c0_313, %c272] : memref<2x386xf32, #tpu.memory_space<vmem>>, vector<1x16xf32>
    tpu.vector_store %arg16[%c0_313, %c272], %364 {strides = array<i32>} : memref<2x386xf32, #tpu.memory_space<vmem>>, vector<1x16xf32>,
    %366 = vector.extract_strided_slice %361 {offsets = [2, 0], sizes = [1, 16], strides = [1, 1]} : vector<8x32xf32> to vector<1x16xf32>
    %c0_314 = arith.constant 0 : index
    %c288 = arith.constant 288 : index
    %367 = vector.load %arg16[%c0_314, %c288] : memref<2x386xf32, #tpu.memory_space<vmem>>, vector<1x16xf32>
    tpu.vector_store %arg16[%c0_314, %c288], %366 {strides = array<i32>} : memref<2x386xf32, #tpu.memory_space<vmem>>, vector<1x16xf32>,
    %368 = vector.extract_strided_slice %361 {offsets = [3, 0], sizes = [1, 16], strides = [1, 1]} : vector<8x32xf32> to vector<1x16xf32>
    %c0_315 = arith.constant 0 : index
    %c304 = arith.constant 304 : index
    %369 = vector.load %arg16[%c0_315, %c304] : memref<2x386xf32, #tpu.memory_space<vmem>>, vector<1x16xf32>
    tpu.vector_store %arg16[%c0_315, %c304], %368 {strides = array<i32>} : memref<2x386xf32, #tpu.memory_space<vmem>>, vector<1x16xf32>,
    %370 = vector.extract_strided_slice %361 {offsets = [4, 0], sizes = [1, 16], strides = [1, 1]} : vector<8x32xf32> to vector<1x16xf32>
    %c0_316 = arith.constant 0 : index
    %c320 = arith.constant 320 : index
    %371 = vector.load %arg16[%c0_316, %c320] : memref<2x386xf32, #tpu.memory_space<vmem>>, vector<1x16xf32>
    tpu.vector_store %arg16[%c0_316, %c320], %370 {strides = array<i32>} : memref<2x386xf32, #tpu.memory_space<vmem>>, vector<1x16xf32>,
    %372 = vector.extract_strided_slice %361 {offsets = [5, 0], sizes = [1, 16], strides = [1, 1]} : vector<8x32xf32> to vector<1x16xf32>
    %c0_317 = arith.constant 0 : index
    %c336 = arith.constant 336 : index
    %373 = vector.load %arg16[%c0_317, %c336] : memref<2x386xf32, #tpu.memory_space<vmem>>, vector<1x16xf32>
    tpu.vector_store %arg16[%c0_317, %c336], %372 {strides = array<i32>} : memref<2x386xf32, #tpu.memory_space<vmem>>, vector<1x16xf32>,
    %374 = vector.extract_strided_slice %361 {offsets = [6, 0], sizes = [1, 16], strides = [1, 1]} : vector<8x32xf32> to vector<1x16xf32>
    %c0_318 = arith.constant 0 : index
    %c352 = arith.constant 352 : index
    %375 = vector.load %arg16[%c0_318, %c352] : memref<2x386xf32, #tpu.memory_space<vmem>>, vector<1x16xf32>
    tpu.vector_store %arg16[%c0_318, %c352], %374 {strides = array<i32>} : memref<2x386xf32, #tpu.memory_space<vmem>>, vector<1x16xf32>,
    %376 = vector.extract_strided_slice %361 {offsets = [7, 0], sizes = [1, 16], strides = [1, 1]} : vector<8x32xf32> to vector<1x16xf32>
    %c0_319 = arith.constant 0 : index
    %c368 = arith.constant 368 : index
    %377 = vector.load %arg16[%c0_319, %c368] : memref<2x386xf32, #tpu.memory_space<vmem>>, vector<1x16xf32>
    tpu.vector_store %arg16[%c0_319, %c368], %376 {strides = array<i32>} : memref<2x386xf32, #tpu.memory_space<vmem>>, vector<1x16xf32>,
    %378 = vector.extract_strided_slice %361 {offsets = [0, 16], sizes = [1, 16], strides = [1, 1]} : vector<8x32xf32> to vector<1x16xf32>
    %c1_320 = arith.constant 1 : index
    %c256_321 = arith.constant 256 : index
    %379 = vector.load %arg16[%c1_320, %c256_321] : memref<2x386xf32, #tpu.memory_space<vmem>>, vector<1x16xf32>
    tpu.vector_store %arg16[%c1_320, %c256_321], %378 {strides = array<i32>} : memref<2x386xf32, #tpu.memory_space<vmem>>, vector<1x16xf32>,
    %380 = vector.extract_strided_slice %361 {offsets = [1, 16], sizes = [1, 16], strides = [1, 1]} : vector<8x32xf32> to vector<1x16xf32>
    %c1_322 = arith.constant 1 : index
    %c272_323 = arith.constant 272 : index
    %381 = vector.load %arg16[%c1_322, %c272_323] : memref<2x386xf32, #tpu.memory_space<vmem>>, vector<1x16xf32>
    tpu.vector_store %arg16[%c1_322, %c272_323], %380 {strides = array<i32>} : memref<2x386xf32, #tpu.memory_space<vmem>>, vector<1x16xf32>,
    %382 = vector.extract_strided_slice %361 {offsets = [2, 16], sizes = [1, 16], strides = [1, 1]} : vector<8x32xf32> to vector<1x16xf32>
    %c1_324 = arith.constant 1 : index
    %c288_325 = arith.constant 288 : index
    %383 = vector.load %arg16[%c1_324, %c288_325] : memref<2x386xf32, #tpu.memory_space<vmem>>, vector<1x16xf32>
    tpu.vector_store %arg16[%c1_324, %c288_325], %382 {strides = array<i32>} : memref<2x386xf32, #tpu.memory_space<vmem>>, vector<1x16xf32>,
    %384 = vector.extract_strided_slice %361 {offsets = [3, 16], sizes = [1, 16], strides = [1, 1]} : vector<8x32xf32> to vector<1x16xf32>
    %c1_326 = arith.constant 1 : index
    %c304_327 = arith.constant 304 : index
    %385 = vector.load %arg16[%c1_326, %c304_327] : memref<2x386xf32, #tpu.memory_space<vmem>>, vector<1x16xf32>
    tpu.vector_store %arg16[%c1_326, %c304_327], %384 {strides = array<i32>} : memref<2x386xf32, #tpu.memory_space<vmem>>, vector<1x16xf32>,
    %386 = vector.extract_strided_slice %361 {offsets = [4, 16], sizes = [1, 16], strides = [1, 1]} : vector<8x32xf32> to vector<1x16xf32>
    %c1_328 = arith.constant 1 : index
    %c320_329 = arith.constant 320 : index
    %387 = vector.load %arg16[%c1_328, %c320_329] : memref<2x386xf32, #tpu.memory_space<vmem>>, vector<1x16xf32>
    tpu.vector_store %arg16[%c1_328, %c320_329], %386 {strides = array<i32>} : memref<2x386xf32, #tpu.memory_space<vmem>>, vector<1x16xf32>,
    %388 = vector.extract_strided_slice %361 {offsets = [5, 16], sizes = [1, 16], strides = [1, 1]} : vector<8x32xf32> to vector<1x16xf32>
    %c1_330 = arith.constant 1 : index
    %c336_331 = arith.constant 336 : index
    %389 = vector.load %arg16[%c1_330, %c336_331] : memref<2x386xf32, #tpu.memory_space<vmem>>, vector<1x16xf32>
    tpu.vector_store %arg16[%c1_330, %c336_331], %388 {strides = array<i32>} : memref<2x386xf32, #tpu.memory_space<vmem>>, vector<1x16xf32>,
    %390 = vector.extract_strided_slice %361 {offsets = [6, 16], sizes = [1, 16], strides = [1, 1]} : vector<8x32xf32> to vector<1x16xf32>
    %c1_332 = arith.constant 1 : index
    %c352_333 = arith.constant 352 : index
    %391 = vector.load %arg16[%c1_332, %c352_333] : memref<2x386xf32, #tpu.memory_space<vmem>>, vector<1x16xf32>
    tpu.vector_store %arg16[%c1_332, %c352_333], %390 {strides = array<i32>} : memref<2x386xf32, #tpu.memory_space<vmem>>, vector<1x16xf32>,
    %392 = vector.extract_strided_slice %361 {offsets = [7, 16], sizes = [1, 16], strides = [1, 1]} : vector<8x32xf32> to vector<1x16xf32>
    %c1_334 = arith.constant 1 : index
    %c368_335 = arith.constant 368 : index
    %393 = vector.load %arg16[%c1_334, %c368_335] : memref<2x386xf32, #tpu.memory_space<vmem>>, vector<1x16xf32>
    tpu.vector_store %arg16[%c1_334, %c368_335], %392 {strides = array<i32>} : memref<2x386xf32, #tpu.memory_space<vmem>>, vector<1x16xf32>,
    %c0_336 = arith.constant 0 : index
    %c0_337 = arith.constant 0 : index
    %394 = vector.load %arg16[%c0_336, %c0_337] : memref<2x386xf32, #tpu.memory_space<vmem>>, vector<2x384xf32>
    %c0_338 = arith.constant 0 : index
    %c1_339 = arith.constant 1 : index
    %395 = vector.load %arg16[%c0_338, %c1_339] : memref<2x386xf32, #tpu.memory_space<vmem>>, vector<2x384xf32>
    %396 = arith.maximumf %394, %395 : vector<2x384xf32>
    %c0_340 = arith.constant 0 : index
    %c2_341 = arith.constant 2 : index
    %397 = vector.load %arg16[%c0_340, %c2_341] : memref<2x386xf32, #tpu.memory_space<vmem>>, vector<2x384xf32>
    %398 = arith.maximumf %396, %397 : vector<2x384xf32>
    %c0_342 = arith.constant 0 : index
    %c0_343 = arith.constant 0 : index
    %399 = vector.load %arg9[%c0_342, %c0_343] : memref<384x64xf32, #tpu.memory_space<vmem>>, vector<384x64xf32>
    %cst_344 = arith.constant dense<0.000000e+00> : vector<2x64xf32>
    %400 = tpu.matmul %398, %399, %cst_344 {dimension_numbers = #tpu.dot_dimension_numbers<[1], [0], [0], [1], [0, 0, 1, 1], [], []>} : vector<2x384xf32>, vector<384x64xf32>, vector<2x64xf32> -> vector<2x64xf32>
    %c0_345 = arith.constant 0 : index
    %c0_346 = arith.constant 0 : index
    %401 = vector.load %arg10[%c0_345, %c0_346] : memref<1x64xf32, #tpu.memory_space<vmem>>, vector<1x64xf32>
    %402 = vector.broadcast %401 : vector<1x64xf32> to vector<2x64xf32>
    %403 = arith.addf %400, %402 : vector<2x64xf32>
    %cst_347 = arith.constant 0.000000e+00 : f32
    %404 = vector.broadcast %cst_347 : f32 to vector<2x64xf32>
    %405 = arith.cmpf ogt, %403, %404 : vector<2x64xf32>
    %406 = math.exp %403 : vector<2x64xf32>
    %cst_348 = arith.constant 1.000000e+00 : f32
    %407 = vector.broadcast %cst_348 : f32 to vector<2x64xf32>
    %408 = arith.subf %406, %407 : vector<2x64xf32>
    %cst_349 = arith.constant 1.67326319 : f32
    %409 = vector.broadcast %cst_349 : f32 to vector<2x64xf32>
    %410 = arith.mulf %409, %408 : vector<2x64xf32>
    %411 = arith.select %405, %403, %410 : vector<2x64xi1>, vector<2x64xf32>
    %cst_350 = arith.constant 1.05070102 : f32
    %412 = vector.broadcast %cst_350 : f32 to vector<2x64xf32>
    %413 = arith.mulf %412, %411 : vector<2x64xf32>
    %c0_351 = arith.constant 0 : index
    %c0_352 = arith.constant 0 : index
    %414 = vector.load %arg11[%c0_351, %c0_352] : memref<64x5xf32, #tpu.memory_space<vmem>>, vector<64x5xf32>
    %cst_353 = arith.constant dense<0.000000e+00> : vector<2x5xf32>
    %415 = tpu.matmul %413, %414, %cst_353 {dimension_numbers = #tpu.dot_dimension_numbers<[1], [0], [0], [1], [0, 0, 1, 1], [], []>} : vector<2x64xf32>, vector<64x5xf32>, vector<2x5xf32> -> vector<2x5xf32>
    %c0_354 = arith.constant 0 : index
    %c0_355 = arith.constant 0 : index
    %416 = vector.load %arg12[%c0_354, %c0_355] : memref<1x5xf32, #tpu.memory_space<vmem>>, vector<1x5xf32>
    %417 = vector.broadcast %416 : vector<1x5xf32> to vector<2x5xf32>
    %418 = arith.addf %415, %417 : vector<2x5xf32>
    %c0_356 = arith.constant 0 : index
    %c0_357 = arith.constant 0 : index
    %419 = vector.load %arg13[%c0_356, %c0_357] : memref<2x5xf32, #tpu.memory_space<vmem>>, vector<2x5xf32>
    tpu.vector_store %arg13[%c0_356, %c0_357], %418 {strides = array<i32>} : memref<2x5xf32, #tpu.memory_space<vmem>>, vector<2x5xf32>,
    return
  }
}

</mosaic_0001>

<llo_original>
// kernel: spider_forward.1
$region0: #{spider_forward.1}
  #allocation0 [shape = 'u32[]', space=smem, size = 0x4, offset = 0x4, fixed_abs, tag = 'smem constant byte address 0x4 - core index']
  #allocation1 [shape = 'u32[144,128]{1,0:T(1,128)}', space=vmem, size = 0x12000, scoped, tag = 'internal scratch']
  #allocation2 [shape = 'f32[36,32]{1,0:T(8,128)}', space=vmem, size = 0x5000, scoped, tag = 'scratch operand']
  #allocation3 [shape = 'f32[24,32]{1,0:T(8,128)}', space=vmem, size = 0x3000, scoped, tag = 'scratch operand']
  #allocation4 [shape = 'f32[2,386]{1,0:T(2,128)}', space=vmem, size = 0x1000, scoped, tag = 'scratch operand']
  %s0 = inlined_call_operand.vmem [shape: f32[3,2,4,16], index: 0, kind: input, shape index: {}]
  %s1 = inlined_call_operand.vmem [shape: f32[3,8,36], index: 1, kind: input, shape index: {}]
  %s2 = inlined_call_operand.vmem [shape: f32[3,8,1], index: 2, kind: input, shape index: {}]
  %s3 = inlined_call_operand.vmem [shape: f32[3,4,8], index: 3, kind: input, shape index: {}]
  %s4 = inlined_call_operand.vmem [shape: f32[3,4,1], index: 4, kind: input, shape index: {}]
  %s5 = inlined_call_operand.vmem [shape: f32[3,8,4], index: 5, kind: input, shape index: {}]
  %s6 = inlined_call_operand.vmem [shape: f32[3,8,1], index: 6, kind: input, shape index: {}]
  %s7 = inlined_call_operand.vmem [shape: f32[3,8,24], index: 7, kind: input, shape index: {}]
  %s8 = inlined_call_operand.vmem [shape: f32[3,8,1], index: 8, kind: input, shape index: {}]
  %s9 = inlined_call_operand.vmem [shape: f32[384,64], index: 9, kind: input, shape index: {}]
  %s10 = inlined_call_operand.vmem [shape: f32[1,64], index: 10, kind: input, shape index: {}]
  %s11 = inlined_call_operand.vmem [shape: f32[64,5], index: 11, kind: input, shape index: {}]
  %s12 = inlined_call_operand.vmem [shape: f32[1,5], index: 12, kind: input, shape index: {}]
  %s13 = inlined_call_operand.hbm [shape: f32[2,5], index: 13, kind: output, shape index: {}]
  %s14 = sld [smem:[#allocation0]]
  $region62: #{spider_forward.1} parent=0
    _
  %s16 = ssub.s32 1, %s14
  %s17 = scalar_select 0, %s16, %s14
  $region1: #{spider_forward.1} parent=0
    #allocation5 [shape = 'u8[1024]{0}', space=vmem, size = 0x400, scoped, tag = 'output window, operand 0, single buffered']
    #allocation6 [shape = 's32[1]{0}', space=sflag, size = 0x4, scoped, tag = 'scoped memory for spider_forward.1']
    %18 = vsyncpa [#allocation6], 0
    // Predicated region
    $region2: #{spider_forward.1} parent=1 // pred_check
      _
    $region3: #{spider_forward.1} parent=1 // pred_check_branch
      %20 = sbr.rel (0) target = $region5
    $region4: #{spider_forward.1} parent=1 // pred_region
      _
    $region5: #{spider_forward.1} parent=1 // pred_fallthru
      _
    // Predicated region
    $region6: #{spider_forward.1} parent=1 // pred_check
      _
    $region7: #{spider_forward.1} parent=1 // pred_check_branch
      %22 = sbr.rel (0) target = $region9
    $region8: #{spider_forward.1} parent=1 // pred_region
      _
    $region9: #{spider_forward.1} parent=1 // pred_fallthru
      _
    // Predicated region
    $region10: #{spider_forward.1} parent=1 // pred_check
      _
    $region11: #{spider_forward.1} parent=1 // pred_check_branch
      %24 = sbr.rel (0) target = $region13
    $region12: #{spider_forward.1} parent=1 // pred_region
      _
    $region13: #{spider_forward.1} parent=1 // pred_fallthru
      _
    // Predicated region
    $region14: #{spider_forward.1} parent=1 // pred_check
      _
    $region15: #{spider_forward.1} parent=1 // pred_check_branch
      %26 = sbr.rel (0) target = $region17
    $region16: #{spider_forward.1} parent=1 // pred_region
      _
    $region17: #{spider_forward.1} parent=1 // pred_fallthru
      _
    // Predicated region
    $region18: #{spider_forward.1} parent=1 // pred_check
      _
    $region19: #{spider_forward.1} parent=1 // pred_check_branch
      %28 = sbr.rel (0) target = $region21
    $region20: #{spider_forward.1} parent=1 // pred_region
      _
    $region21: #{spider_forward.1} parent=1 // pred_fallthru
      _
    // Predicated region
    $region22: #{spider_forward.1} parent=1 // pred_check
      _
    $region23: #{spider_forward.1} parent=1 // pred_check_branch
      %30 = sbr.rel (0) target = $region25
    $region24: #{spider_forward.1} parent=1 // pred_region
      _
    $region25: #{spider_forward.1} parent=1 // pred_fallthru
      _
    // Predicated region
    $region26: #{spider_forward.1} parent=1 // pred_check
      _
    $region27: #{spider_forward.1} parent=1 // pred_check_branch
      %32 = sbr.rel (0) target = $region29
    $region28: #{spider_forward.1} parent=1 // pred_region
      _
    $region29: #{spider_forward.1} parent=1 // pred_fallthru
      _
    // Predicated region
    $region30: #{spider_forward.1} parent=1 // pred_check
      _
    $region31: #{spider_forward.1} parent=1 // pred_check_branch
      %34 = sbr.rel (0) target = $region33
    $region32: #{spider_forward.1} parent=1 // pred_region
      _
    $region33: #{spider_forward.1} parent=1 // pred_fallthru
      _
    // Predicated region
    $region34: #{spider_forward.1} parent=1 // pred_check
      _
    $region35: #{spider_forward.1} parent=1 // pred_check_branch
      %36 = sbr.rel (0) target = $region37
    $region36: #{spider_forward.1} parent=1 // pred_region
      _
    $region37: #{spider_forward.1} parent=1 // pred_fallthru
      _
    // Predicated region
    $region38: #{spider_forward.1} parent=1 // pred_check
      _
    $region39: #{spider_forward.1} parent=1 // pred_check_branch
      %38 = sbr.rel (0) target = $region41
    $region40: #{spider_forward.1} parent=1 // pred_region
      _
    $region41: #{spider_forward.1} parent=1 // pred_fallthru
      _
    // Predicated region
    $region42: #{spider_forward.1} parent=1 // pred_check
      _
    $region43: #{spider_forward.1} parent=1 // pred_check_branch
      %40 = sbr.rel (0) target = $region45
    $region44: #{spider_forward.1} parent=1 // pred_region
      _
    $region45: #{spider_forward.1} parent=1 // pred_fallthru
      _
    // Predicated region
    $region46: #{spider_forward.1} parent=1 // pred_check
      _
    $region47: #{spider_forward.1} parent=1 // pred_check_branch
      %42 = sbr.rel (0) target = $region49
    $region48: #{spider_forward.1} parent=1 // pred_region
      _
    $region49: #{spider_forward.1} parent=1 // pred_fallthru
      _
    // Predicated region
    $region50: #{spider_forward.1} parent=1 // pred_check
      _
    $region51: #{spider_forward.1} parent=1 // pred_check_branch
      %44 = sbr.rel (0) target = $region53
    $region52: #{spider_forward.1} parent=1 // pred_region
      _
    $region53: #{spider_forward.1} parent=1 // pred_fallthru
      _
    %vm45 = vcmask 261120
    %46 = vst.msk [vmem:[#allocation2] sm:$0xff] %vm45, 0.0
    %47 = vst.msk [vmem:[#allocation2 + $0x8] sm:$0xff] %vm45, 0.0
    %48 = vst.msk [vmem:[#allocation2 + $0x10] sm:$0xff] %vm45, 0.0
    %49 = vst.msk [vmem:[#allocation2 + $0x18] sm:$0xff] %vm45, 0.0
    %vm50 = vcmask 257024
    %51 = vst.msk [vmem:[#allocation2 + $0x20] sm:$0xf] %vm50, 0.0
    %52 = vst.msk [vmem:[#allocation3] sm:$0xff] %vm45, 0.0
    %53 = vst.msk [vmem:[#allocation3 + $0x8] sm:$0xff] %vm45, 0.0
    %54 = vst.msk [vmem:[#allocation3 + $0x10] sm:$0xff] %vm45, 0.0
    %vm55 = vcmask 9216
    %56 = vst.msk [vmem:[#allocation4 + $0x6] sm:$0x3] %vm55, 0.0
    %v57 = vld [vmem:[%s0] sm:$0xf]
    %59 = vrot.lane.b32.xlu0 %v57, 1
    %v60 = vpop.permute.xlu0 %59
    %vm62 = vcmask 125960
    %63 = vst.msk [vmem:[#allocation2] sm:$0xf] %vm62, %v60
    %vm64 = vcmask 125952
    %65 = vst.msk [vmem:[#allocation2 + $0xc] sm:$0xf] %vm64, %v57
    %66 = vrot.lane.b32.xlu0 %v57, 127
    %v67 = vpop.permute.xlu0 %66
    %vm69 = vcmask 117760
    %70 = vst.msk [vmem:[#allocation2 + $0x18] sm:$0xf] %vm69, %v67
    %s71 = scalar_lea.vmem %s0, 4
    %v72 = vld [vmem:[%s71] sm:$0xf]
    %74 = vrot.lane.b32.xlu0 %v72, 17
    %v75 = vpop.permute.xlu0 %74
    %vm77 = vcmask 257160
    %78 = vst.msk [vmem:[#allocation2] sm:$0xf] %vm77, %v75
    %79 = vrot.lane.b32.xlu0 %v72, 16
    %v80 = vpop.permute.xlu0 %79
    %vm82 = vcmask 257152
    %83 = vst.msk [vmem:[#allocation2 + $0xc] sm:$0xf] %vm82, %v80
    %84 = vrot.lane.b32.xlu0 %v72, 15
    %v85 = vpop.permute.xlu0 %84
    %vm87 = vcmask 248960
    %88 = vst.msk [vmem:[#allocation2 + $0x18] sm:$0xf] %vm87, %v85
    %s89 = scalar_lea.vmem %s0, 8
    %v90 = vld [vmem:[%s89] sm:$0xf]
    %92 = vrot.lane.b32.xlu0 %v90, 1
    %v93 = vpop.permute.xlu0 %92
    %95 = vst.msk [vmem:[#allocation2 + $0x4] sm:$0xf] %vm62, %v93
    %96 = vst.msk [vmem:[#allocation2 + $0x10] sm:$0xf] %vm64, %v90
    %97 = vrot.lane.b32.xlu0 %v90, 127
    %v98 = vpop.permute.xlu0 %97
    %100 = vst.msk [vmem:[#allocation2 + $0x1c] sm:$0xf] %vm69, %v98
    %s101 = scalar_lea.vmem %s0, 12
    %v102 = vld [vmem:[%s101] sm:$0xf]
    %104 = vrot.lane.b32.xlu0 %v102, 17
    %v105 = vpop.permute.xlu0 %104
    %107 = vst.msk [vmem:[#allocation2 + $0x4] sm:$0xf] %vm77, %v105
    %108 = vrot.lane.b32.xlu0 %v102, 16
    %v109 = vpop.permute.xlu0 %108
    %111 = vst.msk [vmem:[#allocation2 + $0x10] sm:$0xf] %vm82, %v109
    %112 = vrot.lane.b32.xlu0 %v102, 15
    %v113 = vpop.permute.xlu0 %112
    %115 = vst.msk [vmem:[#allocation2 + $0x1c] sm:$0xf] %vm87, %v113
    %s116 = scalar_lea.vmem %s0, 16
    %v117 = vld [vmem:[%s116] sm:$0xf]
    %119 = vrot.lane.b32.xlu0 %v117, 1
    %v120 = vpop.permute.xlu0 %119
    %122 = vst.msk [vmem:[#allocation2 + $0x8] sm:$0xf] %vm62, %v120
    %123 = vst.msk [vmem:[#allocation2 + $0x14] sm:$0xf] %vm64, %v117
    %124 = vrot.lane.b32.xlu0 %v117, 127
    %v125 = vpop.permute.xlu0 %124
    %127 = vst.msk [vmem:[#allocation2 + $0x20] sm:$0xf] %vm69, %v125
    %s128 = scalar_lea.vmem %s0, 20
    %v129 = vld [vmem:[%s128] sm:$0xf]
    %131 = vrot.lane.b32.xlu0 %v129, 17
    %v132 = vpop.permute.xlu0 %131
    %134 = vst.msk [vmem:[#allocation2 + $0x8] sm:$0xf] %vm77, %v132
    %135 = vrot.lane.b32.xlu0 %v129, 16
    %v136 = vpop.permute.xlu0 %135
    %138 = vst.msk [vmem:[#allocation2 + $0x14] sm:$0xf] %vm82, %v136
    %139 = vrot.lane.b32.xlu0 %v129, 15
    %v140 = vpop.permute.xlu0 %139
    %142 = vst.msk [vmem:[#allocation2 + $0x20] sm:$0xf] %vm87, %v140
    %v143 = vld [vmem:[#allocation2] sm:$0xff]
    %v144 = vld [vmem:[#allocation2 + $0x8] sm:$0xff]
    %v145 = vld [vmem:[#allocation2 + $0x10] sm:$0xff]
    %v146 = vld [vmem:[#allocation2 + $0x18] sm:$0xff]
    %v147 = vld [vmem:[#allocation2 + $0x20] sm:$0xf]
    %v148 = vld [vmem:[%s1] sm:$0xff]
    %v149 = vld [vmem:[%s2] sm:$0xff]
    %151 = vset.pattern.permute.xlu0 0
    %152 = vperm.xlu0 %151, %v149
    %v153 = vpop.permute.xlu0 %152
    %vm155 = vcmask 293888
    %v157 = vsel %vm155, %v148, 0
    %vm159 = vcmask 1043456
    %v161 = vsel %vm159, %v147, 0
    %163 = vmatprep.subr.mxu0 0.0
    %164 = vmatpush1.msra.mxu0 0.0
    %165 = vmatprep.subr.mxu0 0.0
    %166 = vmatpush1.msra.mxu0 0.0
    %167 = vmatprep.subr.mxu0 0.0
    %168 = vmatpush1.msra.mxu0 0.0
    %169 = vmatprep.subr.mxu0 0.0
    %170 = vmatpush1.msra.mxu0 0.0
    %171 = vmatprep.subr.mxu0 0.0
    %172 = vmatpush1.msra.mxu0 0.0
    %173 = vmatprep.subr.mxu0 0.0
    %174 = vmatpush1.msra.mxu0 0.0
    %175 = vmatprep.subr.mxu0 0.0
    %176 = vmatpush1.msra.mxu0 0.0
    %177 = vmatprep.subr.mxu0 0.0
    %178 = vmatpush1.msra.mxu0 0.0
    %179 = vmatprep.subr.mxu0 0.0
    %180 = vmatpush1.msra.mxu0 0.0
    %181 = vmatprep.subr.mxu0 0.0
    %182 = vmatpush1.msra.mxu0 0.0
    %183 = vmatprep.subr.mxu0 0.0
    %184 = vmatpush1.msra.mxu0 0.0
    %185 = vmatprep.subr.mxu0 0.0
    %186 = vmatpush1.msra.mxu0 %v161
    %187 = vmatprep.subr.mxu0 0.0
    %188 = vmatpush1.msra.mxu0 %v146
    %189 = vmatprep.subr.mxu0 0.0
    %190 = vmatpush1.msra.mxu0 %v145
    %191 = vmatprep.subr.mxu0 0.0
    %192 = vmatpush1.msra.mxu0 %v144
    %193 = vmatprep.subr.mxu0 0.0
    %194 = vmatpush1.msra.mxu0 %v143
    %195 = vmatprep.subr.mxu0 0.0
    %196 = vmatpush2.msra.mxu0 0.0
    %197 = vmatprep.subr.mxu0 0.0
    %198 = vmatpush2.msra.mxu0 0.0
    %199 = vmatprep.subr.mxu0 0.0
    %200 = vmatpush2.msra.mxu0 0.0
    %201 = vmatprep.subr.mxu0 0.0
    %202 = vmatpush2.msra.mxu0 0.0
    %203 = vmatprep.subr.mxu0 0.0
    %204 = vmatpush2.msra.mxu0 0.0
    %205 = vmatprep.subr.mxu0 0.0
    %206 = vmatpush2.msra.mxu0 0.0
    %207 = vmatprep.subr.mxu0 0.0
    %208 = vmatpush2.msra.mxu0 0.0
    %209 = vmatprep.subr.mxu0 0.0
    %210 = vmatpush2.msra.mxu0 0.0
    %211 = vmatprep.subr.mxu0 0.0
    %212 = vmatpush2.msra.mxu0 0.0
    %213 = vmatprep.subr.mxu0 0.0
    %214 = vmatpush2.msra.mxu0 0.0
    %215 = vmatprep.subr.mxu0 0.0
    %216 = vmatpush2.msra.mxu0 0.0
    %217 = vmatprep.subr.mxu0 0.0
    %218 = vmatpush2.msra.mxu0 0.0
    %219 = vmatprep.subr.mxu0 0.0
    %220 = vmatpush2.msra.mxu0 0.0
    %221 = vmatprep.subr.mxu0 0.0
    %222 = vmatpush2.msra.mxu0 0.0
    %223 = vmatprep.subr.mxu0 0.0
    %224 = vmatpush2.msra.mxu0 0.0
    %225 = vmatprep.subr.mxu0 0.0
    %226 = vmatpush2.msra.mxu0 0.0
    %227 = vmatprep.mubr.f32.mxu0 0.0
    %228 = vmatmul.mubr.f32.gmra.mxu0 %v157
    %v229 = vpop.f32.mrf.mxu0
    %v230 = vadd.f32 %v153, %v229
    %v231 = vpop.f32.mrf.mxu0
    %232 = vdwg.mxu0
    %v233 = vmax.f32 %v230, 0.0
    %vm234 = vcmask 130048
    %v235 = vsel %vm234, %v233, 0.0
    %236 = vadd.xlane.f32.xlu0 %v235
    %v237 = vpop.xlane.xlu0 %236
    %v238 = vrcp.pop 16.0
    %v239 = vmul.f32 %v237, %v238
    %v240 = vld [vmem:[%s3] sm:$0xf]
    %v241 = vld [vmem:[%s4] sm:$0xf]
    %vm242 = vcmask 64512
    %v244 = vsel %vm242, %v240, 0
    %246 = vmatprep.subr.mxu0 0.0
    %247 = vmatpush1.msra.mxu0 0.0
    %248 = vmatprep.subr.mxu0 0.0
    %249 = vmatpush1.msra.mxu0 0.0
    %250 = vmatprep.subr.mxu0 0.0
    %251 = vmatpush1.msra.mxu0 0.0
    %252 = vmatprep.subr.mxu0 0.0
    %253 = vmatpush1.msra.mxu0 0.0
    %254 = vmatprep.subr.mxu0 0.0
    %255 = vmatpush1.msra.mxu0 0.0
    %256 = vmatprep.subr.mxu0 0.0
    %257 = vmatpush1.msra.mxu0 0.0
    %258 = vmatprep.subr.mxu0 0.0
    %259 = vmatpush1.msra.mxu0 0.0
    %260 = vmatprep.subr.mxu0 0.0
    %261 = vmatpush1.msra.mxu0 0.0
    %262 = vmatprep.subr.mxu0 0.0
    %263 = vmatpush1.msra.mxu0 0.0
    %264 = vmatprep.subr.mxu0 0.0
    %265 = vmatpush1.msra.mxu0 0.0
    %266 = vmatprep.subr.mxu0 0.0
    %267 = vmatpush1.msra.mxu0 0.0
    %268 = vmatprep.subr.mxu0 0.0
    %269 = vmatpush1.msra.mxu0 0.0
    %270 = vmatprep.subr.mxu0 0.0
    %271 = vmatpush1.msra.mxu0 0.0
    %272 = vmatprep.subr.mxu0 0.0
    %273 = vmatpush1.msra.mxu0 0.0
    %274 = vmatprep.subr.mxu0 0.0
    %275 = vmatpush1.msra.mxu0 0.0
    %276 = vmatprep.subr.mxu0 0.0
    %277 = vmatpush1.msra.mxu0 %v239
    %278 = vmatprep.subr.mxu0 0.0
    %279 = vmatpush2.msra.mxu0 0.0
    %280 = vmatprep.subr.mxu0 0.0
    %281 = vmatpush2.msra.mxu0 0.0
    %282 = vmatprep.subr.mxu0 0.0
    %283 = vmatpush2.msra.mxu0 0.0
    %284 = vmatprep.subr.mxu0 0.0
    %285 = vmatpush2.msra.mxu0 0.0
    %286 = vmatprep.subr.mxu0 0.0
    %287 = vmatpush2.msra.mxu0 0.0
    %288 = vmatprep.subr.mxu0 0.0
    %289 = vmatpush2.msra.mxu0 0.0
    %290 = vmatprep.subr.mxu0 0.0
    %291 = vmatpush2.msra.mxu0 0.0
    %292 = vmatprep.subr.mxu0 0.0
    %293 = vmatpush2.msra.mxu0 0.0
    %294 = vmatprep.subr.mxu0 0.0
    %295 = vmatpush2.msra.mxu0 0.0
    %296 = vmatprep.subr.mxu0 0.0
    %297 = vmatpush2.msra.mxu0 0.0
    %298 = vmatprep.subr.mxu0 0.0
    %299 = vmatpush2.msra.mxu0 0.0
    %300 = vmatprep.subr.mxu0 0.0
    %301 = vmatpush2.msra.mxu0 0.0
    %302 = vmatprep.subr.mxu0 0.0
    %303 = vmatpush2.msra.mxu0 0.0
    %304 = vmatprep.subr.mxu0 0.0
    %305 = vmatpush2.msra.mxu0 0.0
    %306 = vmatprep.subr.mxu0 0.0
    %307 = vmatpush2.msra.mxu0 0.0
    %308 = vmatprep.subr.mxu0 0.0
    %309 = vmatpush2.msra.mxu0 0.0
    %310 = vmatprep.mubr.f32.mxu0 0.0
    %311 = vmatmul.mubr.f32.gmra.mxu0 %v244
    %v312 = vpop.f32.mrf.mxu0
    %v313 = vadd.f32 %v241, %v312
    %v314 = vpop.f32.mrf.mxu0
    %315 = vdwg.mxu0
    %v316 = vmax.f32 %v313, 0.0
    %v317 = vld [vmem:[%s5] sm:$0xff]
    %v318 = vld [vmem:[%s6] sm:$0xff]
    %vm319 = vcmask 31744
    %v321 = vsel %vm319, %v317, 0
    %v324 = vsel %vm159, %v316, 0
    %326 = vmatprep.subr.mxu0 0.0
    %327 = vmatpush1.msra.mxu0 0.0
    %328 = vmatprep.subr.mxu0 0.0
    %329 = vmatpush1.msra.mxu0 0.0
    %330 = vmatprep.subr.mxu0 0.0
    %331 = vmatpush1.msra.mxu0 0.0
    %332 = vmatprep.subr.mxu0 0.0
    %333 = vmatpush1.msra.mxu0 0.0
    %334 = vmatprep.subr.mxu0 0.0
    %335 = vmatpush1.msra.mxu0 0.0
    %336 = vmatprep.subr.mxu0 0.0
    %337 = vmatpush1.msra.mxu0 0.0
    %338 = vmatprep.subr.mxu0 0.0
    %339 = vmatpush1.msra.mxu0 0.0
    %340 = vmatprep.subr.mxu0 0.0
    %341 = vmatpush1.msra.mxu0 0.0
    %342 = vmatprep.subr.mxu0 0.0
    %343 = vmatpush1.msra.mxu0 0.0
    %344 = vmatprep.subr.mxu0 0.0
    %345 = vmatpush1.msra.mxu0 0.0
    %346 = vmatprep.subr.mxu0 0.0
    %347 = vmatpush1.msra.mxu0 0.0
    %348 = vmatprep.subr.mxu0 0.0
    %349 = vmatpush1.msra.mxu0 0.0
    %350 = vmatprep.subr.mxu0 0.0
    %351 = vmatpush1.msra.mxu0 0.0
    %352 = vmatprep.subr.mxu0 0.0
    %353 = vmatpush1.msra.mxu0 0.0
    %354 = vmatprep.subr.mxu0 0.0
    %355 = vmatpush1.msra.mxu0 0.0
    %356 = vmatprep.subr.mxu0 0.0
    %357 = vmatpush1.msra.mxu0 %v324
    %358 = vmatprep.subr.mxu0 0.0
    %359 = vmatpush2.msra.mxu0 0.0
    %360 = vmatprep.subr.mxu0 0.0
    %361 = vmatpush2.msra.mxu0 0.0
    %362 = vmatprep.subr.mxu0 0.0
    %363 = vmatpush2.msra.mxu0 0.0
    %364 = vmatprep.subr.mxu0 0.0
    %365 = vmatpush2.msra.mxu0 0.0
    %366 = vmatprep.subr.mxu0 0.0
    %367 = vmatpush2.msra.mxu0 0.0
    %368 = vmatprep.subr.mxu0 0.0
    %369 = vmatpush2.msra.mxu0 0.0
    %370 = vmatprep.subr.mxu0 0.0
    %371 = vmatpush2.msra.mxu0 0.0
    %372 = vmatprep.subr.mxu0 0.0
    %373 = vmatpush2.msra.mxu0 0.0
    %374 = vmatprep.subr.mxu0 0.0
    %375 = vmatpush2.msra.mxu0 0.0
    %376 = vmatprep.subr.mxu0 0.0
    %377 = vmatpush2.msra.mxu0 0.0
    %378 = vmatprep.subr.mxu0 0.0
    %379 = vmatpush2.msra.mxu0 0.0
    %380 = vmatprep.subr.mxu0 0.0
    %381 = vmatpush2.msra.mxu0 0.0
    %382 = vmatprep.subr.mxu0 0.0
    %383 = vmatpush2.msra.mxu0 0.0
    %384 = vmatprep.subr.mxu0 0.0
    %385 = vmatpush2.msra.mxu0 0.0
    %386 = vmatprep.subr.mxu0 0.0
    %387 = vmatpush2.msra.mxu0 0.0
    %388 = vmatprep.subr.mxu0 0.0
    %389 = vmatpush2.msra.mxu0 0.0
    %390 = vmatprep.mubr.f32.mxu0 0.0
    %391 = vmatmul.mubr.f32.gmra.mxu0 %v321
    %v392 = vpop.f32.mrf.mxu0
    %v393 = vadd.f32 %v318, %v392
    %v394 = vpop.f32.mrf.mxu0
    %395 = vdwg.mxu0
    %v396 = vsub.f32 0.0, %v393
    %v397 = vmul.f32 %v396, 1.442695
    %v398 = vpow.pop %v397
    %v399 = vadd.f32 %v398, 1.0
    %v400 = vrcp.pop %v399
    %402 = vset.pattern.permute.xlu0 0
    %403 = vperm.xlu0 %402, %v400
    %v404 = vpop.permute.xlu0 %403
    %v406 = vmul.f32 %v233, %v404
    %408 = vrot.lane.b32.xlu0 %v406, 1
    %v409 = vpop.permute.xlu0 %408
    %vm411 = vcmask 130056
    %412 = vst.msk [vmem:[#allocation3] sm:$0xff] %vm411, %v409
    %413 = vst.msk [vmem:[#allocation3 + $0x8] sm:$0xff] %vm234, %v406
    %414 = vrot.lane.b32.xlu0 %v406, 127
    %v415 = vpop.permute.xlu0 %414
    %vm417 = vcmask 121856
    %418 = vst.msk [vmem:[#allocation3 + $0x10] sm:$0xff] %vm417, %v415
    %420 = vrot.lane.b32.xlu0 %v233, 112
    %v421 = vpop.permute.xlu0 %420
    %v423 = vsel %vm234, %v421, 0.0
    %424 = vadd.xlane.f32.xlu0 %v423
    %v425 = vpop.xlane.xlu0 %424
    %v426 = vmul.f32 %v425, %v238
    %v427 = vld [vmem:[%s3] sm:$0xf]
    %v428 = vld [vmem:[%s4] sm:$0xf]
    %v430 = vsel %vm242, %v427, 0
    %432 = vmatprep.subr.mxu0 0.0
    %433 = vmatpush1.msra.mxu0 0.0
    %434 = vmatprep.subr.mxu0 0.0
    %435 = vmatpush1.msra.mxu0 0.0
    %436 = vmatprep.subr.mxu0 0.0
    %437 = vmatpush1.msra.mxu0 0.0
    %438 = vmatprep.subr.mxu0 0.0
    %439 = vmatpush1.msra.mxu0 0.0
    %440 = vmatprep.subr.mxu0 0.0
    %441 = vmatpush1.msra.mxu0 0.0
    %442 = vmatprep.subr.mxu0 0.0
    %443 = vmatpush1.msra.mxu0 0.0
    %444 = vmatprep.subr.mxu0 0.0
    %445 = vmatpush1.msra.mxu0 0.0
    %446 = vmatprep.subr.mxu0 0.0
    %447 = vmatpush1.msra.mxu0 0.0
    %448 = vmatprep.subr.mxu0 0.0
    %449 = vmatpush1.msra.mxu0 0.0
    %450 = vmatprep.subr.mxu0 0.0
    %451 = vmatpush1.msra.mxu0 0.0
    %452 = vmatprep.subr.mxu0 0.0
    %453 = vmatpush1.msra.mxu0 0.0
    %454 = vmatprep.subr.mxu0 0.0
    %455 = vmatpush1.msra.mxu0 0.0
    %456 = vmatprep.subr.mxu0 0.0
    %457 = vmatpush1.msra.mxu0 0.0
    %458 = vmatprep.subr.mxu0 0.0
    %459 = vmatpush1.msra.mxu0 0.0
    %460 = vmatprep.subr.mxu0 0.0
    %461 = vmatpush1.msra.mxu0 0.0
    %462 = vmatprep.subr.mxu0 0.0
    %463 = vmatpush1.msra.mxu0 %v426
    %464 = vmatprep.subr.mxu0 0.0
    %465 = vmatpush2.msra.mxu0 0.0
    %466 = vmatprep.subr.mxu0 0.0
    %467 = vmatpush2.msra.mxu0 0.0
    %468 = vmatprep.subr.mxu0 0.0
    %469 = vmatpush2.msra.mxu0 0.0
    %470 = vmatprep.subr.mxu0 0.0
    %471 = vmatpush2.msra.mxu0 0.0
    %472 = vmatprep.subr.mxu0 0.0
    %473 = vmatpush2.msra.mxu0 0.0
    %474 = vmatprep.subr.mxu0 0.0
    %475 = vmatpush2.msra.mxu0 0.0
    %476 = vmatprep.subr.mxu0 0.0
    %477 = vmatpush2.msra.mxu0 0.0
    %478 = vmatprep.subr.mxu0 0.0
    %479 = vmatpush2.msra.mxu0 0.0
    %480 = vmatprep.subr.mxu0 0.0
    %481 = vmatpush2.msra.mxu0 0.0
    %482 = vmatprep.subr.mxu0 0.0
    %483 = vmatpush2.msra.mxu0 0.0
    %484 = vmatprep.subr.mxu0 0.0
    %485 = vmatpush2.msra.mxu0 0.0
    %486 = vmatprep.subr.mxu0 0.0
    %487 = vmatpush2.msra.mxu0 0.0
    %488 = vmatprep.subr.mxu0 0.0
    %489 = vmatpush2.msra.mxu0 0.0
    %490 = vmatprep.subr.mxu0 0.0
    %491 = vmatpush2.msra.mxu0 0.0
    %492 = vmatprep.subr.mxu0 0.0
    %493 = vmatpush2.msra.mxu0 0.0
    %494 = vmatprep.subr.mxu0 0.0
    %495 = vmatpush2.msra.mxu0 0.0
    %496 = vmatprep.mubr.f32.mxu0 0.0
    %497 = vmatmul.mubr.f32.gmra.mxu0 %v430
    %v498 = vpop.f32.mrf.mxu0
    %v499 = vadd.f32 %v428, %v498
    %v500 = vpop.f32.mrf.mxu0
    %501 = vdwg.mxu0
    %v502 = vmax.f32 %v499, 0.0
    %v503 = vld [vmem:[%s5] sm:$0xff]
    %v504 = vld [vmem:[%s6] sm:$0xff]
    %v506 = vsel %vm319, %v503, 0
    %v509 = vsel %vm159, %v502, 0
    %511 = vmatprep.subr.mxu0 0.0
    %512 = vmatpush1.msra.mxu0 0.0
    %513 = vmatprep.subr.mxu0 0.0
    %514 = vmatpush1.msra.mxu0 0.0
    %515 = vmatprep.subr.mxu0 0.0
    %516 = vmatpush1.msra.mxu0 0.0
    %517 = vmatprep.subr.mxu0 0.0
    %518 = vmatpush1.msra.mxu0 0.0
    %519 = vmatprep.subr.mxu0 0.0
    %520 = vmatpush1.msra.mxu0 0.0
    %521 = vmatprep.subr.mxu0 0.0
    %522 = vmatpush1.msra.mxu0 0.0
    %523 = vmatprep.subr.mxu0 0.0
    %524 = vmatpush1.msra.mxu0 0.0
    %525 = vmatprep.subr.mxu0 0.0
    %526 = vmatpush1.msra.mxu0 0.0
    %527 = vmatprep.subr.mxu0 0.0
    %528 = vmatpush1.msra.mxu0 0.0
    %529 = vmatprep.subr.mxu0 0.0
    %530 = vmatpush1.msra.mxu0 0.0
    %531 = vmatprep.subr.mxu0 0.0
    %532 = vmatpush1.msra.mxu0 0.0
    %533 = vmatprep.subr.mxu0 0.0
    %534 = vmatpush1.msra.mxu0 0.0
    %535 = vmatprep.subr.mxu0 0.0
    %536 = vmatpush1.msra.mxu0 0.0
    %537 = vmatprep.subr.mxu0 0.0
    %538 = vmatpush1.msra.mxu0 0.0
    %539 = vmatprep.subr.mxu0 0.0
    %540 = vmatpush1.msra.mxu0 0.0
    %541 = vmatprep.subr.mxu0 0.0
    %542 = vmatpush1.msra.mxu0 %v509
    %543 = vmatprep.subr.mxu0 0.0
    %544 = vmatpush2.msra.mxu0 0.0
    %545 = vmatprep.subr.mxu0 0.0
    %546 = vmatpush2.msra.mxu0 0.0
    %547 = vmatprep.subr.mxu0 0.0
    %548 = vmatpush2.msra.mxu0 0.0
    %549 = vmatprep.subr.mxu0 0.0
    %550 = vmatpush2.msra.mxu0 0.0
    %551 = vmatprep.subr.mxu0 0.0
    %552 = vmatpush2.msra.mxu0 0.0
    %553 = vmatprep.subr.mxu0 0.0
    %554 = vmatpush2.msra.mxu0 0.0
    %555 = vmatprep.subr.mxu0 0.0
    %556 = vmatpush2.msra.mxu0 0.0
    %557 = vmatprep.subr.mxu0 0.0
    %558 = vmatpush2.msra.mxu0 0.0
    %559 = vmatprep.subr.mxu0 0.0
    %560 = vmatpush2.msra.mxu0 0.0
    %561 = vmatprep.subr.mxu0 0.0
    %562 = vmatpush2.msra.mxu0 0.0
    %563 = vmatprep.subr.mxu0 0.0
    %564 = vmatpush2.msra.mxu0 0.0
    %565 = vmatprep.subr.mxu0 0.0
    %566 = vmatpush2.msra.mxu0 0.0
    %567 = vmatprep.subr.mxu0 0.0
    %568 = vmatpush2.msra.mxu0 0.0
    %569 = vmatprep.subr.mxu0 0.0
    %570 = vmatpush2.msra.mxu0 0.0
    %571 = vmatprep.subr.mxu0 0.0
    %572 = vmatpush2.msra.mxu0 0.0
    %573 = vmatprep.subr.mxu0 0.0
    %574 = vmatpush2.msra.mxu0 0.0
    %575 = vmatprep.mubr.f32.mxu0 0.0
    %576 = vmatmul.mubr.f32.gmra.mxu0 %v506
    %v577 = vpop.f32.mrf.mxu0
    %v578 = vadd.f32 %v504, %v577
    %v579 = vpop.f32.mrf.mxu0
    %580 = vdwg.mxu0
    %v581 = vsub.f32 0.0, %v578
    %v582 = vmul.f32 %v581, 1.442695
    %v583 = vpow.pop %v582
    %v584 = vadd.f32 %v583, 1.0
    %v585 = vrcp.pop %v584
    %587 = vset.pattern.permute.xlu0 0
    %588 = vperm.xlu0 %587, %v585
    %v589 = vpop.permute.xlu0 %588
    %v591 = vmul.f32 %v233, %v589
    %593 = vrot.lane.b32.xlu0 %v591, 1
    %v594 = vpop.permute.xlu0 %593
    %vm596 = vcmask 261256
    %597 = vst.msk [vmem:[#allocation3] sm:$0xff] %vm596, %v594
    %vm598 = vcmask 261248
    %599 = vst.msk [vmem:[#allocation3 + $0x8] sm:$0xff] %vm598, %v591
    %600 = vrot.lane.b32.xlu0 %v591, 127
    %v601 = vpop.permute.xlu0 %600
    %vm603 = vcmask 253056
    %604 = vst.msk [vmem:[#allocation3 + $0x10] sm:$0xff] %vm603, %v601
    %v605 = vld [vmem:[%s7] sm:$0xff]
    %v606 = vld [vmem:[#allocation3] sm:$0xff]
    %v607 = vld [vmem:[#allocation3 + $0x8] sm:$0xff]
    %v608 = vld [vmem:[#allocation3 + $0x10] sm:$0xff]
    %v609 = vld [vmem:[%s8] sm:$0xff]
    %611 = vset.pattern.permute.xlu0 0
    %612 = vperm.xlu0 %611, %v609
    %v613 = vpop.permute.xlu0 %612
    %vm615 = vcmask 195584
    %v617 = vsel %vm615, %v605, 0
    %619 = vmatprep.subr.mxu0 0.0
    %620 = vmatpush1.msra.mxu0 0.0
    %621 = vmatprep.subr.mxu0 0.0
    %622 = vmatpush1.msra.mxu0 0.0
    %623 = vmatprep.subr.mxu0 0.0
    %624 = vmatpush1.msra.mxu0 0.0
    %625 = vmatprep.subr.mxu0 0.0
    %626 = vmatpush1.msra.mxu0 0.0
    %627 = vmatprep.subr.mxu0 0.0
    %628 = vmatpush1.msra.mxu0 0.0
    %629 = vmatprep.subr.mxu0 0.0
    %630 = vmatpush1.msra.mxu0 0.0
    %631 = vmatprep.subr.mxu0 0.0
    %632 = vmatpush1.msra.mxu0 0.0
    %633 = vmatprep.subr.mxu0 0.0
    %634 = vmatpush1.msra.mxu0 0.0
    %635 = vmatprep.subr.mxu0 0.0
    %636 = vmatpush1.msra.mxu0 0.0
    %637 = vmatprep.subr.mxu0 0.0
    %638 = vmatpush1.msra.mxu0 0.0
    %639 = vmatprep.subr.mxu0 0.0
    %640 = vmatpush1.msra.mxu0 0.0
    %641 = vmatprep.subr.mxu0 0.0
    %642 = vmatpush1.msra.mxu0 0.0
    %643 = vmatprep.subr.mxu0 0.0
    %644 = vmatpush1.msra.mxu0 0.0
    %645 = vmatprep.subr.mxu0 0.0
    %646 = vmatpush1.msra.mxu0 %v608
    %647 = vmatprep.subr.mxu0 0.0
    %648 = vmatpush1.msra.mxu0 %v607
    %649 = vmatprep.subr.mxu0 0.0
    %650 = vmatpush1.msra.mxu0 %v606
    %651 = vmatprep.subr.mxu0 0.0
    %652 = vmatpush2.msra.mxu0 0.0
    %653 = vmatprep.subr.mxu0 0.0
    %654 = vmatpush2.msra.mxu0 0.0
    %655 = vmatprep.subr.mxu0 0.0
    %656 = vmatpush2.msra.mxu0 0.0
    %657 = vmatprep.subr.mxu0 0.0
    %658 = vmatpush2.msra.mxu0 0.0
    %659 = vmatprep.subr.mxu0 0.0
    %660 = vmatpush2.msra.mxu0 0.0
    %661 = vmatprep.subr.mxu0 0.0
    %662 = vmatpush2.msra.mxu0 0.0
    %663 = vmatprep.subr.mxu0 0.0
    %664 = vmatpush2.msra.mxu0 0.0
    %665 = vmatprep.subr.mxu0 0.0
    %666 = vmatpush2.msra.mxu0 0.0
    %667 = vmatprep.subr.mxu0 0.0
    %668 = vmatpush2.msra.mxu0 0.0
    %669 = vmatprep.subr.mxu0 0.0
    %670 = vmatpush2.msra.mxu0 0.0
    %671 = vmatprep.subr.mxu0 0.0
    %672 = vmatpush2.msra.mxu0 0.0
    %673 = vmatprep.subr.mxu0 0.0
    %674 = vmatpush2.msra.mxu0 0.0
    %675 = vmatprep.subr.mxu0 0.0
    %676 = vmatpush2.msra.mxu0 0.0
    %677 = vmatprep.subr.mxu0 0.0
    %678 = vmatpush2.msra.mxu0 0.0
    %679 = vmatprep.subr.mxu0 0.0
    %680 = vmatpush2.msra.mxu0 0.0
    %681 = vmatprep.subr.mxu0 0.0
    %682 = vmatpush2.msra.mxu0 0.0
    %683 = vmatprep.mubr.f32.mxu0 0.0
    %684 = vmatmul.mubr.f32.gmra.mxu0 %v617
    %v685 = vpop.f32.mrf.mxu0
    %v686 = vadd.f32 %v613, %v685
    %v687 = vpop.f32.mrf.mxu0
    %688 = vdwg.mxu0
    %v689 = vmax.f32 %v686, 0.0
    %vm690 = vcmask 122880
    %691 = vst.msk [vmem:[#allocation4] sm:$0x1] %vm690, %v689
    %v694 = vunpack.c.l.s4 1983009808
    %v695 = vunpack.c.0.s8 %v694
    %v696 = vlaneseq
    %v697 = vshrl.u32 %v696, 7
    %v698 = vsub.s32 %v695, %v697
    %v699 = vrot.slane %v689, %v698
    %v700 = vrot.slane %v699, 7
    %v701 = vrot.slane %v700, 2
    %702 = vrot.lane.b32.xlu0 %v701, 16
    %v703 = vpop.permute.xlu0 %702
    %vm705 = vcmask 254080
    %706 = vst.msk [vmem:[#allocation4] sm:$0x1] %vm705, %v703
    %v707 = vcombine.high %v699, %v699
    %708 = vrot.lane.b32.xlu0 %v707, 32
    %v709 = vpop.permute.xlu0 %708
    %vm711 = vcmask 385280
    %712 = vst.msk [vmem:[#allocation4] sm:$0x1] %vm711, %v709
    %v713 = vrot.slane %v707, 7
    %v714 = vrot.slane %v713, 2
    %715 = vrot.lane.b32.xlu0 %v714, 48
    %v716 = vpop.permute.xlu0 %715
    %vm718 = vcmask 516480
    %719 = vst.msk [vmem:[#allocation4] sm:$0x1] %vm718, %v716
    %v720 = vcombine.high %v689, %v689
    %v722 = vunpack.c.l.s4 1983009808
    %v723 = vunpack.c.0.s8 %v722
    %v724 = vlaneseq
    %v725 = vshrl.u32 %v724, 7
    %v726 = vsub.s32 %v723, %v725
    %v727 = vrot.slane %v720, %v726
    %728 = vrot.lane.b32.xlu0 %v727, 64
    %v729 = vpop.permute.xlu0 %728
    %vm731 = vcmask 647680
    %732 = vst.msk [vmem:[#allocation4] sm:$0x1] %vm731, %v729
    %v733 = vrot.slane %v727, 7
    %v734 = vrot.slane %v733, 2
    %735 = vrot.lane.b32.xlu0 %v734, 80
    %v736 = vpop.permute.xlu0 %735
    %vm738 = vcmask 778880
    %739 = vst.msk [vmem:[#allocation4] sm:$0x1] %vm738, %v736
    %v740 = vcombine.high %v727, %v727
    %741 = vrot.lane.b32.xlu0 %v740, 96
    %v742 = vpop.permute.xlu0 %741
    %vm744 = vcmask 910080
    %745 = vst.msk [vmem:[#allocation4] sm:$0x1] %vm744, %v742
    %v746 = vrot.slane %v740, 7
    %v747 = vrot.slane %v746, 2
    %748 = vrot.lane.b32.xlu0 %v747, 112
    %v749 = vpop.permute.xlu0 %748
    %vm751 = vcmask 1041280
    %752 = vst.msk [vmem:[#allocation4] sm:$0x1] %vm751, %v749
    %753 = vrot.lane.b32.xlu0 %v699, 112
    %v754 = vpop.permute.xlu0 %753
    %756 = vst.msk [vmem:[#allocation4 + $0x1] sm:$0x1] %vm690, %v754
    %758 = vst.msk [vmem:[#allocation4 + $0x1] sm:$0x1] %vm705, %v701
    %759 = vrot.lane.b32.xlu0 %v707, 16
    %v760 = vpop.permute.xlu0 %759
    %762 = vst.msk [vmem:[#allocation4 + $0x1] sm:$0x1] %vm711, %v760
    %763 = vrot.lane.b32.xlu0 %v714, 32
    %v764 = vpop.permute.xlu0 %763
    %766 = vst.msk [vmem:[#allocation4 + $0x1] sm:$0x1] %vm718, %v764
    %767 = vrot.lane.b32.xlu0 %v727, 48
    %v768 = vpop.permute.xlu0 %767
    %770 = vst.msk [vmem:[#allocation4 + $0x1] sm:$0x1] %vm731, %v768
    %771 = vrot.lane.b32.xlu0 %v734, 64
    %v772 = vpop.permute.xlu0 %771
    %774 = vst.msk [vmem:[#allocation4 + $0x1] sm:$0x1] %vm738, %v772
    %775 = vrot.lane.b32.xlu0 %v740, 80
    %v776 = vpop.permute.xlu0 %775
    %778 = vst.msk [vmem:[#allocation4 + $0x1] sm:$0x1] %vm744, %v776
    %779 = vrot.lane.b32.xlu0 %v747, 96
    %v780 = vpop.permute.xlu0 %779
    %782 = vst.msk [vmem:[#allocation4 + $0x1] sm:$0x1] %vm751, %v780
    %s783 = scalar_lea.vmem %s1, 8
    %v784 = vld [vmem:[%s783] sm:$0xff]
    %s785 = scalar_lea.vmem %s2, 8
    %v786 = vld [vmem:[%s785] sm:$0xff]
    %788 = vset.pattern.permute.xlu0 0
    %789 = vperm.xlu0 %788, %v786
    %v790 = vpop.permute.xlu0 %789
    %v793 = vsel %vm155, %v784, 0
    %795 = vmatprep.subr.mxu0 0.0
    %796 = vmatpush1.msra.mxu0 0.0
    %797 = vmatprep.subr.mxu0 0.0
    %798 = vmatpush1.msra.mxu0 0.0
    %799 = vmatprep.subr.mxu0 0.0
    %800 = vmatpush1.msra.mxu0 0.0
    %801 = vmatprep.subr.mxu0 0.0
    %802 = vmatpush1.msra.mxu0 0.0
    %803 = vmatprep.subr.mxu0 0.0
    %804 = vmatpush1.msra.mxu0 0.0
    %805 = vmatprep.subr.mxu0 0.0
    %806 = vmatpush1.msra.mxu0 0.0
    %807 = vmatprep.subr.mxu0 0.0
    %808 = vmatpush1.msra.mxu0 0.0
    %809 = vmatprep.subr.mxu0 0.0
    %810 = vmatpush1.msra.mxu0 0.0
    %811 = vmatprep.subr.mxu0 0.0
    %812 = vmatpush1.msra.mxu0 0.0
    %813 = vmatprep.subr.mxu0 0.0
    %814 = vmatpush1.msra.mxu0 0.0
    %815 = vmatprep.subr.mxu0 0.0
    %816 = vmatpush1.msra.mxu0 0.0
    %817 = vmatprep.subr.mxu0 0.0
    %818 = vmatpush1.msra.mxu0 %v161
    %819 = vmatprep.subr.mxu0 0.0
    %820 = vmatpush1.msra.mxu0 %v146
    %821 = vmatprep.subr.mxu0 0.0
    %822 = vmatpush1.msra.mxu0 %v145
    %823 = vmatprep.subr.mxu0 0.0
    %824 = vmatpush1.msra.mxu0 %v144
    %825 = vmatprep.subr.mxu0 0.0
    %826 = vmatpush1.msra.mxu0 %v143
    %827 = vmatprep.subr.mxu0 0.0
    %828 = vmatpush2.msra.mxu0 0.0
    %829 = vmatprep.subr.mxu0 0.0
    %830 = vmatpush2.msra.mxu0 0.0
    %831 = vmatprep.subr.mxu0 0.0
    %832 = vmatpush2.msra.mxu0 0.0
    %833 = vmatprep.subr.mxu0 0.0
    %834 = vmatpush2.msra.mxu0 0.0
    %835 = vmatprep.subr.mxu0 0.0
    %836 = vmatpush2.msra.mxu0 0.0
    %837 = vmatprep.subr.mxu0 0.0
    %838 = vmatpush2.msra.mxu0 0.0
    %839 = vmatprep.subr.mxu0 0.0
    %840 = vmatpush2.msra.mxu0 0.0
    %841 = vmatprep.subr.mxu0 0.0
    %842 = vmatpush2.msra.mxu0 0.0
    %843 = vmatprep.subr.mxu0 0.0
    %844 = vmatpush2.msra.mxu0 0.0
    %845 = vmatprep.subr.mxu0 0.0
    %846 = vmatpush2.msra.mxu0 0.0
    %847 = vmatprep.subr.mxu0 0.0
    %848 = vmatpush2.msra.mxu0 0.0
    %849 = vmatprep.subr.mxu0 0.0
    %850 = vmatpush2.msra.mxu0 0.0
    %851 = vmatprep.subr.mxu0 0.0
    %852 = vmatpush2.msra.mxu0 0.0
    %853 = vmatprep.subr.mxu0 0.0
    %854 = vmatpush2.msra.mxu0 0.0
    %855 = vmatprep.subr.mxu0 0.0
    %856 = vmatpush2.msra.mxu0 0.0
    %857 = vmatprep.subr.mxu0 0.0
    %858 = vmatpush2.msra.mxu0 0.0
    %859 = vmatprep.mubr.f32.mxu0 0.0
    %860 = vmatmul.mubr.f32.gmra.mxu0 %v793
    %v861 = vpop.f32.mrf.mxu0
    %v862 = vadd.f32 %v790, %v861
    %v863 = vpop.f32.mrf.mxu0
    %864 = vdwg.mxu0
    %v865 = vmax.f32 %v862, 0.0
    %v866 = vsel %vm234, %v865, 0.0
    %867 = vadd.xlane.f32.xlu0 %v866
    %v868 = vpop.xlane.xlu0 %867
    %v869 = vmul.f32 %v868, %v238
    %s870 = scalar_lea.vmem %s3, 4
    %v871 = vld [vmem:[%s870] sm:$0xf]
    %s872 = scalar_lea.vmem %s4, 4
    %v873 = vld [vmem:[%s872] sm:$0xf]
    %v875 = vsel %vm242, %v871, 0
    %877 = vmatprep.subr.mxu0 0.0
    %878 = vmatpush1.msra.mxu0 0.0
    %879 = vmatprep.subr.mxu0 0.0
    %880 = vmatpush1.msra.mxu0 0.0
    %881 = vmatprep.subr.mxu0 0.0
    %882 = vmatpush1.msra.mxu0 0.0
    %883 = vmatprep.subr.mxu0 0.0
    %884 = vmatpush1.msra.mxu0 0.0
    %885 = vmatprep.subr.mxu0 0.0
    %886 = vmatpush1.msra.mxu0 0.0
    %887 = vmatprep.subr.mxu0 0.0
    %888 = vmatpush1.msra.mxu0 0.0
    %889 = vmatprep.subr.mxu0 0.0
    %890 = vmatpush1.msra.mxu0 0.0
    %891 = vmatprep.subr.mxu0 0.0
    %892 = vmatpush1.msra.mxu0 0.0
    %893 = vmatprep.subr.mxu0 0.0
    %894 = vmatpush1.msra.mxu0 0.0
    %895 = vmatprep.subr.mxu0 0.0
    %896 = vmatpush1.msra.mxu0 0.0
    %897 = vmatprep.subr.mxu0 0.0
    %898 = vmatpush1.msra.mxu0 0.0
    %899 = vmatprep.subr.mxu0 0.0
    %900 = vmatpush1.msra.mxu0 0.0
    %901 = vmatprep.subr.mxu0 0.0
    %902 = vmatpush1.msra.mxu0 0.0
    %903 = vmatprep.subr.mxu0 0.0
    %904 = vmatpush1.msra.mxu0 0.0
    %905 = vmatprep.subr.mxu0 0.0
    %906 = vmatpush1.msra.mxu0 0.0
    %907 = vmatprep.subr.mxu0 0.0
    %908 = vmatpush1.msra.mxu0 %v869
    %909 = vmatprep.subr.mxu0 0.0
    %910 = vmatpush2.msra.mxu0 0.0
    %911 = vmatprep.subr.mxu0 0.0
    %912 = vmatpush2.msra.mxu0 0.0
    %913 = vmatprep.subr.mxu0 0.0
    %914 = vmatpush2.msra.mxu0 0.0
    %915 = vmatprep.subr.mxu0 0.0
    %916 = vmatpush2.msra.mxu0 0.0
    %917 = vmatprep.subr.mxu0 0.0
    %918 = vmatpush2.msra.mxu0 0.0
    %919 = vmatprep.subr.mxu0 0.0
    %920 = vmatpush2.msra.mxu0 0.0
    %921 = vmatprep.subr.mxu0 0.0
    %922 = vmatpush2.msra.mxu0 0.0
    %923 = vmatprep.subr.mxu0 0.0
    %924 = vmatpush2.msra.mxu0 0.0
    %925 = vmatprep.subr.mxu0 0.0
    %926 = vmatpush2.msra.mxu0 0.0
    %927 = vmatprep.subr.mxu0 0.0
    %928 = vmatpush2.msra.mxu0 0.0
    %929 = vmatprep.subr.mxu0 0.0
    %930 = vmatpush2.msra.mxu0 0.0
    %931 = vmatprep.subr.mxu0 0.0
    %932 = vmatpush2.msra.mxu0 0.0
    %933 = vmatprep.subr.mxu0 0.0
    %934 = vmatpush2.msra.mxu0 0.0
    %935 = vmatprep.subr.mxu0 0.0
    %936 = vmatpush2.msra.mxu0 0.0
    %937 = vmatprep.subr.mxu0 0.0
    %938 = vmatpush2.msra.mxu0 0.0
    %939 = vmatprep.subr.mxu0 0.0
    %940 = vmatpush2.msra.mxu0 0.0
    %941 = vmatprep.mubr.f32.mxu0 0.0
    %942 = vmatmul.mubr.f32.gmra.mxu0 %v875
    %v943 = vpop.f32.mrf.mxu0
    %v944 = vadd.f32 %v873, %v943
    %v945 = vpop.f32.mrf.mxu0
    %946 = vdwg.mxu0
    %v947 = vmax.f32 %v944, 0.0
    %s948 = scalar_lea.vmem %s5, 8
    %v949 = vld [vmem:[%s948] sm:$0xff]
    %s950 = scalar_lea.vmem %s6, 8
    %v951 = vld [vmem:[%s950] sm:$0xff]
    %v953 = vsel %vm319, %v949, 0
    %v956 = vsel %vm159, %v947, 0
    %958 = vmatprep.subr.mxu0 0.0
    %959 = vmatpush1.msra.mxu0 0.0
    %960 = vmatprep.subr.mxu0 0.0
    %961 = vmatpush1.msra.mxu0 0.0
    %962 = vmatprep.subr.mxu0 0.0
    %963 = vmatpush1.msra.mxu0 0.0
    %964 = vmatprep.subr.mxu0 0.0
    %965 = vmatpush1.msra.mxu0 0.0
    %966 = vmatprep.subr.mxu0 0.0
    %967 = vmatpush1.msra.mxu0 0.0
    %968 = vmatprep.subr.mxu0 0.0
    %969 = vmatpush1.msra.mxu0 0.0
    %970 = vmatprep.subr.mxu0 0.0
    %971 = vmatpush1.msra.mxu0 0.0
    %972 = vmatprep.subr.mxu0 0.0
    %973 = vmatpush1.msra.mxu0 0.0
    %974 = vmatprep.subr.mxu0 0.0
    %975 = vmatpush1.msra.mxu0 0.0
    %976 = vmatprep.subr.mxu0 0.0
    %977 = vmatpush1.msra.mxu0 0.0
    %978 = vmatprep.subr.mxu0 0.0
    %979 = vmatpush1.msra.mxu0 0.0
    %980 = vmatprep.subr.mxu0 0.0
    %981 = vmatpush1.msra.mxu0 0.0
    %982 = vmatprep.subr.mxu0 0.0
    %983 = vmatpush1.msra.mxu0 0.0
    %984 = vmatprep.subr.mxu0 0.0
    %985 = vmatpush1.msra.mxu0 0.0
    %986 = vmatprep.subr.mxu0 0.0
    %987 = vmatpush1.msra.mxu0 0.0
    %988 = vmatprep.subr.mxu0 0.0
    %989 = vmatpush1.msra.mxu0 %v956
    %990 = vmatprep.subr.mxu0 0.0
    %991 = vmatpush2.msra.mxu0 0.0
    %992 = vmatprep.subr.mxu0 0.0
    %993 = vmatpush2.msra.mxu0 0.0
    %994 = vmatprep.subr.mxu0 0.0
    %995 = vmatpush2.msra.mxu0 0.0
    %996 = vmatprep.subr.mxu0 0.0
    %997 = vmatpush2.msra.mxu0 0.0
    %998 = vmatprep.subr.mxu0 0.0
    %999 = vmatpush2.msra.mxu0 0.0
    %1000 = vmatprep.subr.mxu0 0.0
    %1001 = vmatpush2.msra.mxu0 0.0
    %1002 = vmatprep.subr.mxu0 0.0
    %1003 = vmatpush2.msra.mxu0 0.0
    %1004 = vmatprep.subr.mxu0 0.0
    %1005 = vmatpush2.msra.mxu0 0.0
    %1006 = vmatprep.subr.mxu0 0.0
    %1007 = vmatpush2.msra.mxu0 0.0
    %1008 = vmatprep.subr.mxu0 0.0
    %1009 = vmatpush2.msra.mxu0 0.0
    %1010 = vmatprep.subr.mxu0 0.0
    %1011 = vmatpush2.msra.mxu0 0.0
    %1012 = vmatprep.subr.mxu0 0.0
    %1013 = vmatpush2.msra.mxu0 0.0
    %1014 = vmatprep.subr.mxu0 0.0
    %1015 = vmatpush2.msra.mxu0 0.0
    %1016 = vmatprep.subr.mxu0 0.0
    %1017 = vmatpush2.msra.mxu0 0.0
    %1018 = vmatprep.subr.mxu0 0.0
    %1019 = vmatpush2.msra.mxu0 0.0
    %1020 = vmatprep.subr.mxu0 0.0
    %1021 = vmatpush2.msra.mxu0 0.0
    %1022 = vmatprep.mubr.f32.mxu0 0.0
    %1023 = vmatmul.mubr.f32.gmra.mxu0 %v953
    %v1024 = vpop.f32.mrf.mxu0
    %v1025 = vadd.f32 %v951, %v1024
    %v1026 = vpop.f32.mrf.mxu0
    %1027 = vdwg.mxu0
    %v1028 = vsub.f32 0.0, %v1025
    %v1029 = vmul.f32 %v1028, 1.442695
    %v1030 = vpow.pop %v1029
    %v1031 = vadd.f32 %v1030, 1.0
    %v1032 = vrcp.pop %v1031
    %1034 = vset.pattern.permute.xlu0 0
    %1035 = vperm.xlu0 %1034, %v1032
    %v1036 = vpop.permute.xlu0 %1035
    %v1038 = vmul.f32 %v865, %v1036
    %1040 = vrot.lane.b32.xlu0 %v1038, 1
    %v1041 = vpop.permute.xlu0 %1040
    %1043 = vst.msk [vmem:[#allocation3] sm:$0xff] %vm411, %v1041
    %1044 = vst.msk [vmem:[#allocation3 + $0x8] sm:$0xff] %vm234, %v1038
    %1045 = vrot.lane.b32.xlu0 %v1038, 127
    %v1046 = vpop.permute.xlu0 %1045
    %1048 = vst.msk [vmem:[#allocation3 + $0x10] sm:$0xff] %vm417, %v1046
    %1050 = vrot.lane.b32.xlu0 %v865, 112
    %v1051 = vpop.permute.xlu0 %1050
    %v1053 = vsel %vm234, %v1051, 0.0
    %1054 = vadd.xlane.f32.xlu0 %v1053
    %v1055 = vpop.xlane.xlu0 %1054
    %v1056 = vmul.f32 %v1055, %v238
    %v1057 = vld [vmem:[%s870] sm:$0xf]
    %v1058 = vld [vmem:[%s872] sm:$0xf]
    %v1060 = vsel %vm242, %v1057, 0
    %1062 = vmatprep.subr.mxu0 0.0
    %1063 = vmatpush1.msra.mxu0 0.0
    %1064 = vmatprep.subr.mxu0 0.0
    %1065 = vmatpush1.msra.mxu0 0.0
    %1066 = vmatprep.subr.mxu0 0.0
    %1067 = vmatpush1.msra.mxu0 0.0
    %1068 = vmatprep.subr.mxu0 0.0
    %1069 = vmatpush1.msra.mxu0 0.0
    %1070 = vmatprep.subr.mxu0 0.0
    %1071 = vmatpush1.msra.mxu0 0.0
    %1072 = vmatprep.subr.mxu0 0.0
    %1073 = vmatpush1.msra.mxu0 0.0
    %1074 = vmatprep.subr.mxu0 0.0
    %1075 = vmatpush1.msra.mxu0 0.0
    %1076 = vmatprep.subr.mxu0 0.0
    %1077 = vmatpush1.msra.mxu0 0.0
    %1078 = vmatprep.subr.mxu0 0.0
    %1079 = vmatpush1.msra.mxu0 0.0
    %1080 = vmatprep.subr.mxu0 0.0
    %1081 = vmatpush1.msra.mxu0 0.0
    %1082 = vmatprep.subr.mxu0 0.0
    %1083 = vmatpush1.msra.mxu0 0.0
    %1084 = vmatprep.subr.mxu0 0.0
    %1085 = vmatpush1.msra.mxu0 0.0
    %1086 = vmatprep.subr.mxu0 0.0
    %1087 = vmatpush1.msra.mxu0 0.0
    %1088 = vmatprep.subr.mxu0 0.0
    %1089 = vmatpush1.msra.mxu0 0.0
    %1090 = vmatprep.subr.mxu0 0.0
    %1091 = vmatpush1.msra.mxu0 0.0
    %1092 = vmatprep.subr.mxu0 0.0
    %1093 = vmatpush1.msra.mxu0 %v1056
    %1094 = vmatprep.subr.mxu0 0.0
    %1095 = vmatpush2.msra.mxu0 0.0
    %1096 = vmatprep.subr.mxu0 0.0
    %1097 = vmatpush2.msra.mxu0 0.0
    %1098 = vmatprep.subr.mxu0 0.0
    %1099 = vmatpush2.msra.mxu0 0.0
    %1100 = vmatprep.subr.mxu0 0.0
    %1101 = vmatpush2.msra.mxu0 0.0
    %1102 = vmatprep.subr.mxu0 0.0
    %1103 = vmatpush2.msra.mxu0 0.0
    %1104 = vmatprep.subr.mxu0 0.0
    %1105 = vmatpush2.msra.mxu0 0.0
    %1106 = vmatprep.subr.mxu0 0.0
    %1107 = vmatpush2.msra.mxu0 0.0
    %1108 = vmatprep.subr.mxu0 0.0
    %1109 = vmatpush2.msra.mxu0 0.0
    %1110 = vmatprep.subr.mxu0 0.0
    %1111 = vmatpush2.msra.mxu0 0.0
    %1112 = vmatprep.subr.mxu0 0.0
    %1113 = vmatpush2.msra.mxu0 0.0
    %1114 = vmatprep.subr.mxu0 0.0
    %1115 = vmatpush2.msra.mxu0 0.0
    %1116 = vmatprep.subr.mxu0 0.0
    %1117 = vmatpush2.msra.mxu0 0.0
    %1118 = vmatprep.subr.mxu0 0.0
    %1119 = vmatpush2.msra.mxu0 0.0
    %1120 = vmatprep.subr.mxu0 0.0
    %1121 = vmatpush2.msra.mxu0 0.0
    %1122 = vmatprep.subr.mxu0 0.0
    %1123 = vmatpush2.msra.mxu0 0.0
    %1124 = vmatprep.subr.mxu0 0.0
    %1125 = vmatpush2.msra.mxu0 0.0
    %1126 = vmatprep.mubr.f32.mxu0 0.0
    %1127 = vmatmul.mubr.f32.gmra.mxu0 %v1060
    %v1128 = vpop.f32.mrf.mxu0
    %v1129 = vadd.f32 %v1058, %v1128
    %v1130 = vpop.f32.mrf.mxu0
    %1131 = vdwg.mxu0
    %v1132 = vmax.f32 %v1129, 0.0
    %v1133 = vld [vmem:[%s948] sm:$0xff]
    %v1134 = vld [vmem:[%s950] sm:$0xff]
    %v1136 = vsel %vm319, %v1133, 0
    %v1139 = vsel %vm159, %v1132, 0
    %1141 = vmatprep.subr.mxu0 0.0
    %1142 = vmatpush1.msra.mxu0 0.0
    %1143 = vmatprep.subr.mxu0 0.0
    %1144 = vmatpush1.msra.mxu0 0.0
    %1145 = vmatprep.subr.mxu0 0.0
    %1146 = vmatpush1.msra.mxu0 0.0
    %1147 = vmatprep.subr.mxu0 0.0
    %1148 = vmatpush1.msra.mxu0 0.0
    %1149 = vmatprep.subr.mxu0 0.0
    %1150 = vmatpush1.msra.mxu0 0.0
    %1151 = vmatprep.subr.mxu0 0.0
    %1152 = vmatpush1.msra.mxu0 0.0
    %1153 = vmatprep.subr.mxu0 0.0
    %1154 = vmatpush1.msra.mxu0 0.0
    %1155 = vmatprep.subr.mxu0 0.0
    %1156 = vmatpush1.msra.mxu0 0.0
    %1157 = vmatprep.subr.mxu0 0.0
    %1158 = vmatpush1.msra.mxu0 0.0
    %1159 = vmatprep.subr.mxu0 0.0
    %1160 = vmatpush1.msra.mxu0 0.0
    %1161 = vmatprep.subr.mxu0 0.0
    %1162 = vmatpush1.msra.mxu0 0.0
    %1163 = vmatprep.subr.mxu0 0.0
    %1164 = vmatpush1.msra.mxu0 0.0
    %1165 = vmatprep.subr.mxu0 0.0
    %1166 = vmatpush1.msra.mxu0 0.0
    %1167 = vmatprep.subr.mxu0 0.0
    %1168 = vmatpush1.msra.mxu0 0.0
    %1169 = vmatprep.subr.mxu0 0.0
    %1170 = vmatpush1.msra.mxu0 0.0
    %1171 = vmatprep.subr.mxu0 0.0
    %1172 = vmatpush1.msra.mxu0 %v1139
    %1173 = vmatprep.subr.mxu0 0.0
    %1174 = vmatpush2.msra.mxu0 0.0
    %1175 = vmatprep.subr.mxu0 0.0
    %1176 = vmatpush2.msra.mxu0 0.0
    %1177 = vmatprep.subr.mxu0 0.0
    %1178 = vmatpush2.msra.mxu0 0.0
    %1179 = vmatprep.subr.mxu0 0.0
    %1180 = vmatpush2.msra.mxu0 0.0
    %1181 = vmatprep.subr.mxu0 0.0
    %1182 = vmatpush2.msra.mxu0 0.0
    %1183 = vmatprep.subr.mxu0 0.0
    %1184 = vmatpush2.msra.mxu0 0.0
    %1185 = vmatprep.subr.mxu0 0.0
    %1186 = vmatpush2.msra.mxu0 0.0
    %1187 = vmatprep.subr.mxu0 0.0
    %1188 = vmatpush2.msra.mxu0 0.0
    %1189 = vmatprep.subr.mxu0 0.0
    %1190 = vmatpush2.msra.mxu0 0.0
    %1191 = vmatprep.subr.mxu0 0.0
    %1192 = vmatpush2.msra.mxu0 0.0
    %1193 = vmatprep.subr.mxu0 0.0
    %1194 = vmatpush2.msra.mxu0 0.0
    %1195 = vmatprep.subr.mxu0 0.0
    %1196 = vmatpush2.msra.mxu0 0.0
    %1197 = vmatprep.subr.mxu0 0.0
    %1198 = vmatpush2.msra.mxu0 0.0
    %1199 = vmatprep.subr.mxu0 0.0
    %1200 = vmatpush2.msra.mxu0 0.0
    %1201 = vmatprep.subr.mxu0 0.0
    %1202 = vmatpush2.msra.mxu0 0.0
    %1203 = vmatprep.subr.mxu0 0.0
    %1204 = vmatpush2.msra.mxu0 0.0
    %1205 = vmatprep.mubr.f32.mxu0 0.0
    %1206 = vmatmul.mubr.f32.gmra.mxu0 %v1136
    %v1207 = vpop.f32.mrf.mxu0
    %v1208 = vadd.f32 %v1134, %v1207
    %v1209 = vpop.f32.mrf.mxu0
    %1210 = vdwg.mxu0
    %v1211 = vsub.f32 0.0, %v1208
    %v1212 = vmul.f32 %v1211, 1.442695
    %v1213 = vpow.pop %v1212
    %v1214 = vadd.f32 %v1213, 1.0
    %v1215 = vrcp.pop %v1214
    %1217 = vset.pattern.permute.xlu0 0
    %1218 = vperm.xlu0 %1217, %v1215
    %v1219 = vpop.permute.xlu0 %1218
    %v1221 = vmul.f32 %v865, %v1219
    %1223 = vrot.lane.b32.xlu0 %v1221, 1
    %v1224 = vpop.permute.xlu0 %1223
    %1226 = vst.msk [vmem:[#allocation3] sm:$0xff] %vm596, %v1224
    %1227 = vst.msk [vmem:[#allocation3 + $0x8] sm:$0xff] %vm598, %v1221
    %1228 = vrot.lane.b32.xlu0 %v1221, 127
    %v1229 = vpop.permute.xlu0 %1228
    %1231 = vst.msk [vmem:[#allocation3 + $0x10] sm:$0xff] %vm603, %v1229
    %s1232 = scalar_lea.vmem %s7, 8
    %v1233 = vld [vmem:[%s1232] sm:$0xff]
    %v1234 = vld [vmem:[#allocation3] sm:$0xff]
    %v1235 = vld [vmem:[#allocation3 + $0x8] sm:$0xff]
    %v1236 = vld [vmem:[#allocation3 + $0x10] sm:$0xff]
    %s1237 = scalar_lea.vmem %s8, 8
    %v1238 = vld [vmem:[%s1237] sm:$0xff]
    %1240 = vset.pattern.permute.xlu0 0
    %1241 = vperm.xlu0 %1240, %v1238
    %v1242 = vpop.permute.xlu0 %1241
    %v1245 = vsel %vm615, %v1233, 0
    %1247 = vmatprep.subr.mxu0 0.0
    %1248 = vmatpush1.msra.mxu0 0.0
    %1249 = vmatprep.subr.mxu0 0.0
    %1250 = vmatpush1.msra.mxu0 0.0
    %1251 = vmatprep.subr.mxu0 0.0
    %1252 = vmatpush1.msra.mxu0 0.0
    %1253 = vmatprep.subr.mxu0 0.0
    %1254 = vmatpush1.msra.mxu0 0.0
    %1255 = vmatprep.subr.mxu0 0.0
    %1256 = vmatpush1.msra.mxu0 0.0
    %1257 = vmatprep.subr.mxu0 0.0
    %1258 = vmatpush1.msra.mxu0 0.0
    %1259 = vmatprep.subr.mxu0 0.0
    %1260 = vmatpush1.msra.mxu0 0.0
    %1261 = vmatprep.subr.mxu0 0.0
    %1262 = vmatpush1.msra.mxu0 0.0
    %1263 = vmatprep.subr.mxu0 0.0
    %1264 = vmatpush1.msra.mxu0 0.0
    %1265 = vmatprep.subr.mxu0 0.0
    %1266 = vmatpush1.msra.mxu0 0.0
    %1267 = vmatprep.subr.mxu0 0.0
    %1268 = vmatpush1.msra.mxu0 0.0
    %1269 = vmatprep.subr.mxu0 0.0
    %1270 = vmatpush1.msra.mxu0 0.0
    %1271 = vmatprep.subr.mxu0 0.0
    %1272 = vmatpush1.msra.mxu0 0.0
    %1273 = vmatprep.subr.mxu0 0.0
    %1274 = vmatpush1.msra.mxu0 %v1236
    %1275 = vmatprep.subr.mxu0 0.0
    %1276 = vmatpush1.msra.mxu0 %v1235
    %1277 = vmatprep.subr.mxu0 0.0
    %1278 = vmatpush1.msra.mxu0 %v1234
    %1279 = vmatprep.subr.mxu0 0.0
    %1280 = vmatpush2.msra.mxu0 0.0
    %1281 = vmatprep.subr.mxu0 0.0
    %1282 = vmatpush2.msra.mxu0 0.0
    %1283 = vmatprep.subr.mxu0 0.0
    %1284 = vmatpush2.msra.mxu0 0.0
    %1285 = vmatprep.subr.mxu0 0.0
    %1286 = vmatpush2.msra.mxu0 0.0
    %1287 = vmatprep.subr.mxu0 0.0
    %1288 = vmatpush2.msra.mxu0 0.0
    %1289 = vmatprep.subr.mxu0 0.0
    %1290 = vmatpush2.msra.mxu0 0.0
    %1291 = vmatprep.subr.mxu0 0.0
    %1292 = vmatpush2.msra.mxu0 0.0
    %1293 = vmatprep.subr.mxu0 0.0
    %1294 = vmatpush2.msra.mxu0 0.0
    %1295 = vmatprep.subr.mxu0 0.0
    %1296 = vmatpush2.msra.mxu0 0.0
    %1297 = vmatprep.subr.mxu0 0.0
    %1298 = vmatpush2.msra.mxu0 0.0
    %1299 = vmatprep.subr.mxu0 0.0
    %1300 = vmatpush2.msra.mxu0 0.0
    %1301 = vmatprep.subr.mxu0 0.0
    %1302 = vmatpush2.msra.mxu0 0.0
    %1303 = vmatprep.subr.mxu0 0.0
    %1304 = vmatpush2.msra.mxu0 0.0
    %1305 = vmatprep.subr.mxu0 0.0
    %1306 = vmatpush2.msra.mxu0 0.0
    %1307 = vmatprep.subr.mxu0 0.0
    %1308 = vmatpush2.msra.mxu0 0.0
    %1309 = vmatprep.subr.mxu0 0.0
    %1310 = vmatpush2.msra.mxu0 0.0
    %1311 = vmatprep.mubr.f32.mxu0 0.0
    %1312 = vmatmul.mubr.f32.gmra.mxu0 %v1245
    %v1313 = vpop.f32.mrf.mxu0
    %v1314 = vadd.f32 %v1242, %v1313
    %v1315 = vpop.f32.mrf.mxu0
    %1316 = vdwg.mxu0
    %v1317 = vmax.f32 %v1314, 0.0
    %1318 = vst.msk [vmem:[#allocation4 + $0x2] sm:$0x1] %vm690, %v1317
    %v1321 = vunpack.c.l.s4 1983009808
    %v1322 = vunpack.c.0.s8 %v1321
    %v1323 = vlaneseq
    %v1324 = vshrl.u32 %v1323, 7
    %v1325 = vsub.s32 %v1322, %v1324
    %v1326 = vrot.slane %v1317, %v1325
    %v1327 = vrot.slane %v1326, 7
    %v1328 = vrot.slane %v1327, 2
    %1329 = vrot.lane.b32.xlu0 %v1328, 16
    %v1330 = vpop.permute.xlu0 %1329
    %1332 = vst.msk [vmem:[#allocation4 + $0x2] sm:$0x1] %vm705, %v1330
    %v1333 = vcombine.high %v1326, %v1326
    %1334 = vrot.lane.b32.xlu0 %v1333, 32
    %v1335 = vpop.permute.xlu0 %1334
    %1337 = vst.msk [vmem:[#allocation4 + $0x2] sm:$0x1] %vm711, %v1335
    %v1338 = vrot.slane %v1333, 7
    %v1339 = vrot.slane %v1338, 2
    %1340 = vrot.lane.b32.xlu0 %v1339, 48
    %v1341 = vpop.permute.xlu0 %1340
    %1343 = vst.msk [vmem:[#allocation4 + $0x2] sm:$0x1] %vm718, %v1341
    %v1344 = vcombine.high %v1317, %v1317
    %v1346 = vunpack.c.l.s4 1983009808
    %v1347 = vunpack.c.0.s8 %v1346
    %v1348 = vlaneseq
    %v1349 = vshrl.u32 %v1348, 7
    %v1350 = vsub.s32 %v1347, %v1349
    %v1351 = vrot.slane %v1344, %v1350
    %1352 = vrot.lane.b32.xlu0 %v1351, 64
    %v1353 = vpop.permute.xlu0 %1352
    %1355 = vst.msk [vmem:[#allocation4 + $0x2] sm:$0x1] %vm731, %v1353
    %v1356 = vrot.slane %v1351, 7
    %v1357 = vrot.slane %v1356, 2
    %1358 = vrot.lane.b32.xlu0 %v1357, 80
    %v1359 = vpop.permute.xlu0 %1358
    %1361 = vst.msk [vmem:[#allocation4 + $0x2] sm:$0x1] %vm738, %v1359
    %v1362 = vcombine.high %v1351, %v1351
    %1363 = vrot.lane.b32.xlu0 %v1362, 96
    %v1364 = vpop.permute.xlu0 %1363
    %1366 = vst.msk [vmem:[#allocation4 + $0x2] sm:$0x1] %vm744, %v1364
    %v1367 = vrot.slane %v1362, 7
    %v1368 = vrot.slane %v1367, 2
    %1369 = vrot.lane.b32.xlu0 %v1368, 112
    %v1370 = vpop.permute.xlu0 %1369
    %1372 = vst.msk [vmem:[#allocation4 + $0x2] sm:$0x1] %vm751, %v1370
    %1373 = vrot.lane.b32.xlu0 %v1326, 112
    %v1374 = vpop.permute.xlu0 %1373
    %1376 = vst.msk [vmem:[#allocation4 + $0x3] sm:$0x1] %vm690, %v1374
    %1378 = vst.msk [vmem:[#allocation4 + $0x3] sm:$0x1] %vm705, %v1328
    %1379 = vrot.lane.b32.xlu0 %v1333, 16
    %v1380 = vpop.permute.xlu0 %1379
    %1382 = vst.msk [vmem:[#allocation4 + $0x3] sm:$0x1] %vm711, %v1380
    %1383 = vrot.lane.b32.xlu0 %v1339, 32
    %v1384 = vpop.permute.xlu0 %1383
    %1386 = vst.msk [vmem:[#allocation4 + $0x3] sm:$0x1] %vm718, %v1384
    %1387 = vrot.lane.b32.xlu0 %v1351, 48
    %v1388 = vpop.permute.xlu0 %1387
    %1390 = vst.msk [vmem:[#allocation4 + $0x3] sm:$0x1] %vm731, %v1388
    %1391 = vrot.lane.b32.xlu0 %v1357, 64
    %v1392 = vpop.permute.xlu0 %1391
    %1394 = vst.msk [vmem:[#allocation4 + $0x3] sm:$0x1] %vm738, %v1392
    %1395 = vrot.lane.b32.xlu0 %v1362, 80
    %v1396 = vpop.permute.xlu0 %1395
    %1398 = vst.msk [vmem:[#allocation4 + $0x3] sm:$0x1] %vm744, %v1396
    %1399 = vrot.lane.b32.xlu0 %v1368, 96
    %v1400 = vpop.permute.xlu0 %1399
    %1402 = vst.msk [vmem:[#allocation4 + $0x3] sm:$0x1] %vm751, %v1400
    %s1403 = scalar_lea.vmem %s1, 16
    %v1404 = vld [vmem:[%s1403] sm:$0xff]
    %s1405 = scalar_lea.vmem %s2, 16
    %v1406 = vld [vmem:[%s1405] sm:$0xff]
    %1408 = vset.pattern.permute.xlu0 0
    %1409 = vperm.xlu0 %1408, %v1406
    %v1410 = vpop.permute.xlu0 %1409
    %v1413 = vsel %vm155, %v1404, 0
    %1415 = vmatprep.subr.mxu0 0.0
    %1416 = vmatpush1.msra.mxu0 0.0
    %1417 = vmatprep.subr.mxu0 0.0
    %1418 = vmatpush1.msra.mxu0 0.0
    %1419 = vmatprep.subr.mxu0 0.0
    %1420 = vmatpush1.msra.mxu0 0.0
    %1421 = vmatprep.subr.mxu0 0.0
    %1422 = vmatpush1.msra.mxu0 0.0
    %1423 = vmatprep.subr.mxu0 0.0
    %1424 = vmatpush1.msra.mxu0 0.0
    %1425 = vmatprep.subr.mxu0 0.0
    %1426 = vmatpush1.msra.mxu0 0.0
    %1427 = vmatprep.subr.mxu0 0.0
    %1428 = vmatpush1.msra.mxu0 0.0
    %1429 = vmatprep.subr.mxu0 0.0
    %1430 = vmatpush1.msra.mxu0 0.0
    %1431 = vmatprep.subr.mxu0 0.0
    %1432 = vmatpush1.msra.mxu0 0.0
    %1433 = vmatprep.subr.mxu0 0.0
    %1434 = vmatpush1.msra.mxu0 0.0
    %1435 = vmatprep.subr.mxu0 0.0
    %1436 = vmatpush1.msra.mxu0 0.0
    %1437 = vmatprep.subr.mxu0 0.0
    %1438 = vmatpush1.msra.mxu0 %v161
    %1439 = vmatprep.subr.mxu0 0.0
    %1440 = vmatpush1.msra.mxu0 %v146
    %1441 = vmatprep.subr.mxu0 0.0
    %1442 = vmatpush1.msra.mxu0 %v145
    %1443 = vmatprep.subr.mxu0 0.0
    %1444 = vmatpush1.msra.mxu0 %v144
    %1445 = vmatprep.subr.mxu0 0.0
    %1446 = vmatpush1.msra.mxu0 %v143
    %1447 = vmatprep.subr.mxu0 0.0
    %1448 = vmatpush2.msra.mxu0 0.0
    %1449 = vmatprep.subr.mxu0 0.0
    %1450 = vmatpush2.msra.mxu0 0.0
    %1451 = vmatprep.subr.mxu0 0.0
    %1452 = vmatpush2.msra.mxu0 0.0
    %1453 = vmatprep.subr.mxu0 0.0
    %1454 = vmatpush2.msra.mxu0 0.0
    %1455 = vmatprep.subr.mxu0 0.0
    %1456 = vmatpush2.msra.mxu0 0.0
    %1457 = vmatprep.subr.mxu0 0.0
    %1458 = vmatpush2.msra.mxu0 0.0
    %1459 = vmatprep.subr.mxu0 0.0
    %1460 = vmatpush2.msra.mxu0 0.0
    %1461 = vmatprep.subr.mxu0 0.0
    %1462 = vmatpush2.msra.mxu0 0.0
    %1463 = vmatprep.subr.mxu0 0.0
    %1464 = vmatpush2.msra.mxu0 0.0
    %1465 = vmatprep.subr.mxu0 0.0
    %1466 = vmatpush2.msra.mxu0 0.0
    %1467 = vmatprep.subr.mxu0 0.0
    %1468 = vmatpush2.msra.mxu0 0.0
    %1469 = vmatprep.subr.mxu0 0.0
    %1470 = vmatpush2.msra.mxu0 0.0
    %1471 = vmatprep.subr.mxu0 0.0
    %1472 = vmatpush2.msra.mxu0 0.0
    %1473 = vmatprep.subr.mxu0 0.0
    %1474 = vmatpush2.msra.mxu0 0.0
    %1475 = vmatprep.subr.mxu0 0.0
    %1476 = vmatpush2.msra.mxu0 0.0
    %1477 = vmatprep.subr.mxu0 0.0
    %1478 = vmatpush2.msra.mxu0 0.0
    %1479 = vmatprep.mubr.f32.mxu0 0.0
    %1480 = vmatmul.mubr.f32.gmra.mxu0 %v1413
    %v1481 = vpop.f32.mrf.mxu0
    %v1482 = vadd.f32 %v1410, %v1481
    %v1483 = vpop.f32.mrf.mxu0
    %1484 = vdwg.mxu0
    %v1485 = vmax.f32 %v1482, 0.0
    %v1486 = vsel %vm234, %v1485, 0.0
    %1487 = vadd.xlane.f32.xlu0 %v1486
    %v1488 = vpop.xlane.xlu0 %1487
    %v1489 = vmul.f32 %v1488, %v238
    %s1490 = scalar_lea.vmem %s3, 8
    %v1491 = vld [vmem:[%s1490] sm:$0xf]
    %s1492 = scalar_lea.vmem %s4, 8
    %v1493 = vld [vmem:[%s1492] sm:$0xf]
    %v1495 = vsel %vm242, %v1491, 0
    %1497 = vmatprep.subr.mxu0 0.0
    %1498 = vmatpush1.msra.mxu0 0.0
    %1499 = vmatprep.subr.mxu0 0.0
    %1500 = vmatpush1.msra.mxu0 0.0
    %1501 = vmatprep.subr.mxu0 0.0
    %1502 = vmatpush1.msra.mxu0 0.0
    %1503 = vmatprep.subr.mxu0 0.0
    %1504 = vmatpush1.msra.mxu0 0.0
    %1505 = vmatprep.subr.mxu0 0.0
    %1506 = vmatpush1.msra.mxu0 0.0
    %1507 = vmatprep.subr.mxu0 0.0
    %1508 = vmatpush1.msra.mxu0 0.0
    %1509 = vmatprep.subr.mxu0 0.0
    %1510 = vmatpush1.msra.mxu0 0.0
    %1511 = vmatprep.subr.mxu0 0.0
    %1512 = vmatpush1.msra.mxu0 0.0
    %1513 = vmatprep.subr.mxu0 0.0
    %1514 = vmatpush1.msra.mxu0 0.0
    %1515 = vmatprep.subr.mxu0 0.0
    %1516 = vmatpush1.msra.mxu0 0.0
    %1517 = vmatprep.subr.mxu0 0.0
    %1518 = vmatpush1.msra.mxu0 0.0
    %1519 = vmatprep.subr.mxu0 0.0
    %1520 = vmatpush1.msra.mxu0 0.0
    %1521 = vmatprep.subr.mxu0 0.0
    %1522 = vmatpush1.msra.mxu0 0.0
    %1523 = vmatprep.subr.mxu0 0.0
    %1524 = vmatpush1.msra.mxu0 0.0
    %1525 = vmatprep.subr.mxu0 0.0
    %1526 = vmatpush1.msra.mxu0 0.0
    %1527 = vmatprep.subr.mxu0 0.0
    %1528 = vmatpush1.msra.mxu0 %v1489
    %1529 = vmatprep.subr.mxu0 0.0
    %1530 = vmatpush2.msra.mxu0 0.0
    %1531 = vmatprep.subr.mxu0 0.0
    %1532 = vmatpush2.msra.mxu0 0.0
    %1533 = vmatprep.subr.mxu0 0.0
    %1534 = vmatpush2.msra.mxu0 0.0
    %1535 = vmatprep.subr.mxu0 0.0
    %1536 = vmatpush2.msra.mxu0 0.0
    %1537 = vmatprep.subr.mxu0 0.0
    %1538 = vmatpush2.msra.mxu0 0.0
    %1539 = vmatprep.subr.mxu0 0.0
    %1540 = vmatpush2.msra.mxu0 0.0
    %1541 = vmatprep.subr.mxu0 0.0
    %1542 = vmatpush2.msra.mxu0 0.0
    %1543 = vmatprep.subr.mxu0 0.0
    %1544 = vmatpush2.msra.mxu0 0.0
    %1545 = vmatprep.subr.mxu0 0.0
    %1546 = vmatpush2.msra.mxu0 0.0
    %1547 = vmatprep.subr.mxu0 0.0
    %1548 = vmatpush2.msra.mxu0 0.0
    %1549 = vmatprep.subr.mxu0 0.0
    %1550 = vmatpush2.msra.mxu0 0.0
    %1551 = vmatprep.subr.mxu0 0.0
    %1552 = vmatpush2.msra.mxu0 0.0
    %1553 = vmatprep.subr.mxu0 0.0
    %1554 = vmatpush2.msra.mxu0 0.0
    %1555 = vmatprep.subr.mxu0 0.0
    %1556 = vmatpush2.msra.mxu0 0.0
    %1557 = vmatprep.subr.mxu0 0.0
    %1558 = vmatpush2.msra.mxu0 0.0
    %1559 = vmatprep.subr.mxu0 0.0
    %1560 = vmatpush2.msra.mxu0 0.0
    %1561 = vmatprep.mubr.f32.mxu0 0.0
    %1562 = vmatmul.mubr.f32.gmra.mxu0 %v1495
    %v1563 = vpop.f32.mrf.mxu0
    %v1564 = vadd.f32 %v1493, %v1563
    %v1565 = vpop.f32.mrf.mxu0
    %1566 = vdwg.mxu0
    %v1567 = vmax.f32 %v1564, 0.0
    %s1568 = scalar_lea.vmem %s5, 16
    %v1569 = vld [vmem:[%s1568] sm:$0xff]
    %s1570 = scalar_lea.vmem %s6, 16
    %v1571 = vld [vmem:[%s1570] sm:$0xff]
    %v1573 = vsel %vm319, %v1569, 0
    %v1576 = vsel %vm159, %v1567, 0
    %1578 = vmatprep.subr.mxu0 0.0
    %1579 = vmatpush1.msra.mxu0 0.0
    %1580 = vmatprep.subr.mxu0 0.0
    %1581 = vmatpush1.msra.mxu0 0.0
    %1582 = vmatprep.subr.mxu0 0.0
    %1583 = vmatpush1.msra.mxu0 0.0
    %1584 = vmatprep.subr.mxu0 0.0
    %1585 = vmatpush1.msra.mxu0 0.0
    %1586 = vmatprep.subr.mxu0 0.0
    %1587 = vmatpush1.msra.mxu0 0.0
    %1588 = vmatprep.subr.mxu0 0.0
    %1589 = vmatpush1.msra.mxu0 0.0
    %1590 = vmatprep.subr.mxu0 0.0
    %1591 = vmatpush1.msra.mxu0 0.0
    %1592 = vmatprep.subr.mxu0 0.0
    %1593 = vmatpush1.msra.mxu0 0.0
    %1594 = vmatprep.subr.mxu0 0.0
    %1595 = vmatpush1.msra.mxu0 0.0
    %1596 = vmatprep.subr.mxu0 0.0
    %1597 = vmatpush1.msra.mxu0 0.0
    %1598 = vmatprep.subr.mxu0 0.0
    %1599 = vmatpush1.msra.mxu0 0.0
    %1600 = vmatprep.subr.mxu0 0.0
    %1601 = vmatpush1.msra.mxu0 0.0
    %1602 = vmatprep.subr.mxu0 0.0
    %1603 = vmatpush1.msra.mxu0 0.0
    %1604 = vmatprep.subr.mxu0 0.0
    %1605 = vmatpush1.msra.mxu0 0.0
    %1606 = vmatprep.subr.mxu0 0.0
    %1607 = vmatpush1.msra.mxu0 0.0
    %1608 = vmatprep.subr.mxu0 0.0
    %1609 = vmatpush1.msra.mxu0 %v1576
    %1610 = vmatprep.subr.mxu0 0.0
    %1611 = vmatpush2.msra.mxu0 0.0
    %1612 = vmatprep.subr.mxu0 0.0
    %1613 = vmatpush2.msra.mxu0 0.0
    %1614 = vmatprep.subr.mxu0 0.0
    %1615 = vmatpush2.msra.mxu0 0.0
    %1616 = vmatprep.subr.mxu0 0.0
    %1617 = vmatpush2.msra.mxu0 0.0
    %1618 = vmatprep.subr.mxu0 0.0
    %1619 = vmatpush2.msra.mxu0 0.0
    %1620 = vmatprep.subr.mxu0 0.0
    %1621 = vmatpush2.msra.mxu0 0.0
    %1622 = vmatprep.subr.mxu0 0.0
    %1623 = vmatpush2.msra.mxu0 0.0
    %1624 = vmatprep.subr.mxu0 0.0
    %1625 = vmatpush2.msra.mxu0 0.0
    %1626 = vmatprep.subr.mxu0 0.0
    %1627 = vmatpush2.msra.mxu0 0.0
    %1628 = vmatprep.subr.mxu0 0.0
    %1629 = vmatpush2.msra.mxu0 0.0
    %1630 = vmatprep.subr.mxu0 0.0
    %1631 = vmatpush2.msra.mxu0 0.0
    %1632 = vmatprep.subr.mxu0 0.0
    %1633 = vmatpush2.msra.mxu0 0.0
    %1634 = vmatprep.subr.mxu0 0.0
    %1635 = vmatpush2.msra.mxu0 0.0
    %1636 = vmatprep.subr.mxu0 0.0
    %1637 = vmatpush2.msra.mxu0 0.0
    %1638 = vmatprep.subr.mxu0 0.0
    %1639 = vmatpush2.msra.mxu0 0.0
    %1640 = vmatprep.subr.mxu0 0.0
    %1641 = vmatpush2.msra.mxu0 0.0
    %1642 = vmatprep.mubr.f32.mxu0 0.0
    %1643 = vmatmul.mubr.f32.gmra.mxu0 %v1573
    %v1644 = vpop.f32.mrf.mxu0
    %v1645 = vadd.f32 %v1571, %v1644
    %v1646 = vpop.f32.mrf.mxu0
    %1647 = vdwg.mxu0
    %v1648 = vsub.f32 0.0, %v1645
    %v1649 = vmul.f32 %v1648, 1.442695
    %v1650 = vpow.pop %v1649
    %v1651 = vadd.f32 %v1650, 1.0
    %v1652 = vrcp.pop %v1651
    %1654 = vset.pattern.permute.xlu0 0
    %1655 = vperm.xlu0 %1654, %v1652
    %v1656 = vpop.permute.xlu0 %1655
    %v1658 = vmul.f32 %v1485, %v1656
    %1660 = vrot.lane.b32.xlu0 %v1658, 1
    %v1661 = vpop.permute.xlu0 %1660
    %1663 = vst.msk [vmem:[#allocation3] sm:$0xff] %vm411, %v1661
    %1664 = vst.msk [vmem:[#allocation3 + $0x8] sm:$0xff] %vm234, %v1658
    %1665 = vrot.lane.b32.xlu0 %v1658, 127
    %v1666 = vpop.permute.xlu0 %1665
    %1668 = vst.msk [vmem:[#allocation3 + $0x10] sm:$0xff] %vm417, %v1666
    %1670 = vrot.lane.b32.xlu0 %v1485, 112
    %v1671 = vpop.permute.xlu0 %1670
    %v1673 = vsel %vm234, %v1671, 0.0
    %1674 = vadd.xlane.f32.xlu0 %v1673
    %v1675 = vpop.xlane.xlu0 %1674
    %v1676 = vmul.f32 %v1675, %v238
    %v1677 = vld [vmem:[%s1490] sm:$0xf]
    %v1678 = vld [vmem:[%s1492] sm:$0xf]
    %v1680 = vsel %vm242, %v1677, 0
    %1682 = vmatprep.subr.mxu0 0.0
    %1683 = vmatpush1.msra.mxu0 0.0
    %1684 = vmatprep.subr.mxu0 0.0
    %1685 = vmatpush1.msra.mxu0 0.0
    %1686 = vmatprep.subr.mxu0 0.0
    %1687 = vmatpush1.msra.mxu0 0.0
    %1688 = vmatprep.subr.mxu0 0.0
    %1689 = vmatpush1.msra.mxu0 0.0
    %1690 = vmatprep.subr.mxu0 0.0
    %1691 = vmatpush1.msra.mxu0 0.0
    %1692 = vmatprep.subr.mxu0 0.0
    %1693 = vmatpush1.msra.mxu0 0.0
    %1694 = vmatprep.subr.mxu0 0.0
    %1695 = vmatpush1.msra.mxu0 0.0
    %1696 = vmatprep.subr.mxu0 0.0
    %1697 = vmatpush1.msra.mxu0 0.0
    %1698 = vmatprep.subr.mxu0 0.0
    %1699 = vmatpush1.msra.mxu0 0.0
    %1700 = vmatprep.subr.mxu0 0.0
    %1701 = vmatpush1.msra.mxu0 0.0
    %1702 = vmatprep.subr.mxu0 0.0
    %1703 = vmatpush1.msra.mxu0 0.0
    %1704 = vmatprep.subr.mxu0 0.0
    %1705 = vmatpush1.msra.mxu0 0.0
    %1706 = vmatprep.subr.mxu0 0.0
    %1707 = vmatpush1.msra.mxu0 0.0
    %1708 = vmatprep.subr.mxu0 0.0
    %1709 = vmatpush1.msra.mxu0 0.0
    %1710 = vmatprep.subr.mxu0 0.0
    %1711 = vmatpush1.msra.mxu0 0.0
    %1712 = vmatprep.subr.mxu0 0.0
    %1713 = vmatpush1.msra.mxu0 %v1676
    %1714 = vmatprep.subr.mxu0 0.0
    %1715 = vmatpush2.msra.mxu0 0.0
    %1716 = vmatprep.subr.mxu0 0.0
    %1717 = vmatpush2.msra.mxu0 0.0
    %1718 = vmatprep.subr.mxu0 0.0
    %1719 = vmatpush2.msra.mxu0 0.0
    %1720 = vmatprep.subr.mxu0 0.0
    %1721 = vmatpush2.msra.mxu0 0.0
    %1722 = vmatprep.subr.mxu0 0.0
    %1723 = vmatpush2.msra.mxu0 0.0
    %1724 = vmatprep.subr.mxu0 0.0
    %1725 = vmatpush2.msra.mxu0 0.0
    %1726 = vmatprep.subr.mxu0 0.0
    %1727 = vmatpush2.msra.mxu0 0.0
    %1728 = vmatprep.subr.mxu0 0.0
    %1729 = vmatpush2.msra.mxu0 0.0
    %1730 = vmatprep.subr.mxu0 0.0
    %1731 = vmatpush2.msra.mxu0 0.0
    %1732 = vmatprep.subr.mxu0 0.0
    %1733 = vmatpush2.msra.mxu0 0.0
    %1734 = vmatprep.subr.mxu0 0.0
    %1735 = vmatpush2.msra.mxu0 0.0
    %1736 = vmatprep.subr.mxu0 0.0
    %1737 = vmatpush2.msra.mxu0 0.0
    %1738 = vmatprep.subr.mxu0 0.0
    %1739 = vmatpush2.msra.mxu0 0.0
    %1740 = vmatprep.subr.mxu0 0.0
    %1741 = vmatpush2.msra.mxu0 0.0
    %1742 = vmatprep.subr.mxu0 0.0
    %1743 = vmatpush2.msra.mxu0 0.0
    %1744 = vmatprep.subr.mxu0 0.0
    %1745 = vmatpush2.msra.mxu0 0.0
    %1746 = vmatprep.mubr.f32.mxu0 0.0
    %1747 = vmatmul.mubr.f32.gmra.mxu0 %v1680
    %v1748 = vpop.f32.mrf.mxu0
    %v1749 = vadd.f32 %v1678, %v1748
    %v1750 = vpop.f32.mrf.mxu0
    %1751 = vdwg.mxu0
    %v1752 = vmax.f32 %v1749, 0.0
    %v1753 = vld [vmem:[%s1568] sm:$0xff]
    %v1754 = vld [vmem:[%s1570] sm:$0xff]
    %v1756 = vsel %vm319, %v1753, 0
    %v1759 = vsel %vm159, %v1752, 0
    %1761 = vmatprep.subr.mxu0 0.0
    %1762 = vmatpush1.msra.mxu0 0.0
    %1763 = vmatprep.subr.mxu0 0.0
    %1764 = vmatpush1.msra.mxu0 0.0
    %1765 = vmatprep.subr.mxu0 0.0
    %1766 = vmatpush1.msra.mxu0 0.0
    %1767 = vmatprep.subr.mxu0 0.0
    %1768 = vmatpush1.msra.mxu0 0.0
    %1769 = vmatprep.subr.mxu0 0.0
    %1770 = vmatpush1.msra.mxu0 0.0
    %1771 = vmatprep.subr.mxu0 0.0
    %1772 = vmatpush1.msra.mxu0 0.0
    %1773 = vmatprep.subr.mxu0 0.0
    %1774 = vmatpush1.msra.mxu0 0.0
    %1775 = vmatprep.subr.mxu0 0.0
    %1776 = vmatpush1.msra.mxu0 0.0
    %1777 = vmatprep.subr.mxu0 0.0
    %1778 = vmatpush1.msra.mxu0 0.0
    %1779 = vmatprep.subr.mxu0 0.0
    %1780 = vmatpush1.msra.mxu0 0.0
    %1781 = vmatprep.subr.mxu0 0.0
    %1782 = vmatpush1.msra.mxu0 0.0
    %1783 = vmatprep.subr.mxu0 0.0
    %1784 = vmatpush1.msra.mxu0 0.0
    %1785 = vmatprep.subr.mxu0 0.0
    %1786 = vmatpush1.msra.mxu0 0.0
    %1787 = vmatprep.subr.mxu0 0.0
    %1788 = vmatpush1.msra.mxu0 0.0
    %1789 = vmatprep.subr.mxu0 0.0
    %1790 = vmatpush1.msra.mxu0 0.0
    %1791 = vmatprep.subr.mxu0 0.0
    %1792 = vmatpush1.msra.mxu0 %v1759
    %1793 = vmatprep.subr.mxu0 0.0
    %1794 = vmatpush2.msra.mxu0 0.0
    %1795 = vmatprep.subr.mxu0 0.0
    %1796 = vmatpush2.msra.mxu0 0.0
    %1797 = vmatprep.subr.mxu0 0.0
    %1798 = vmatpush2.msra.mxu0 0.0
    %1799 = vmatprep.subr.mxu0 0.0
    %1800 = vmatpush2.msra.mxu0 0.0
    %1801 = vmatprep.subr.mxu0 0.0
    %1802 = vmatpush2.msra.mxu0 0.0
    %1803 = vmatprep.subr.mxu0 0.0
    %1804 = vmatpush2.msra.mxu0 0.0
    %1805 = vmatprep.subr.mxu0 0.0
    %1806 = vmatpush2.msra.mxu0 0.0
    %1807 = vmatprep.subr.mxu0 0.0
    %1808 = vmatpush2.msra.mxu0 0.0
    %1809 = vmatprep.subr.mxu0 0.0
    %1810 = vmatpush2.msra.mxu0 0.0
    %1811 = vmatprep.subr.mxu0 0.0
    %1812 = vmatpush2.msra.mxu0 0.0
    %1813 = vmatprep.subr.mxu0 0.0
    %1814 = vmatpush2.msra.mxu0 0.0
    %1815 = vmatprep.subr.mxu0 0.0
    %1816 = vmatpush2.msra.mxu0 0.0
    %1817 = vmatprep.subr.mxu0 0.0
    %1818 = vmatpush2.msra.mxu0 0.0
    %1819 = vmatprep.subr.mxu0 0.0
    %1820 = vmatpush2.msra.mxu0 0.0
    %1821 = vmatprep.subr.mxu0 0.0
    %1822 = vmatpush2.msra.mxu0 0.0
    %1823 = vmatprep.subr.mxu0 0.0
    %1824 = vmatpush2.msra.mxu0 0.0
    %1825 = vmatprep.mubr.f32.mxu0 0.0
    %1826 = vmatmul.mubr.f32.gmra.mxu0 %v1756
    %v1827 = vpop.f32.mrf.mxu0
    %v1828 = vadd.f32 %v1754, %v1827
    %v1829 = vpop.f32.mrf.mxu0
    %1830 = vdwg.mxu0
    %v1831 = vsub.f32 0.0, %v1828
    %v1832 = vmul.f32 %v1831, 1.442695
    %v1833 = vpow.pop %v1832
    %v1834 = vadd.f32 %v1833, 1.0
    %v1835 = vrcp.pop %v1834
    %1837 = vset.pattern.permute.xlu0 0
    %1838 = vperm.xlu0 %1837, %v1835
    %v1839 = vpop.permute.xlu0 %1838
    %v1841 = vmul.f32 %v1485, %v1839
    %1843 = vrot.lane.b32.xlu0 %v1841, 1
    %v1844 = vpop.permute.xlu0 %1843
    %1846 = vst.msk [vmem:[#allocation3] sm:$0xff] %vm596, %v1844
    %1847 = vst.msk [vmem:[#allocation3 + $0x8] sm:$0xff] %vm598, %v1841
    %1848 = vrot.lane.b32.xlu0 %v1841, 127
    %v1849 = vpop.permute.xlu0 %1848
    %1851 = vst.msk [vmem:[#allocation3 + $0x10] sm:$0xff] %vm603, %v1849
    %s1852 = scalar_lea.vmem %s7, 16
    %v1853 = vld [vmem:[%s1852] sm:$0xff]
    %v1854 = vld [vmem:[#allocation3] sm:$0xff]
    %v1855 = vld [vmem:[#allocation3 + $0x8] sm:$0xff]
    %v1856 = vld [vmem:[#allocation3 + $0x10] sm:$0xff]
    %s1857 = scalar_lea.vmem %s8, 16
    %v1858 = vld [vmem:[%s1857] sm:$0xff]
    %1860 = vset.pattern.permute.xlu0 0
    %1861 = vperm.xlu0 %1860, %v1858
    %v1862 = vpop.permute.xlu0 %1861
    %v1865 = vsel %vm615, %v1853, 0
    %1867 = vmatprep.subr.mxu0 0.0
    %1868 = vmatpush1.msra.mxu0 0.0
    %1869 = vmatprep.subr.mxu0 0.0
    %1870 = vmatpush1.msra.mxu0 0.0
    %1871 = vmatprep.subr.mxu0 0.0
    %1872 = vmatpush1.msra.mxu0 0.0
    %1873 = vmatprep.subr.mxu0 0.0
    %1874 = vmatpush1.msra.mxu0 0.0
    %1875 = vmatprep.subr.mxu0 0.0
    %1876 = vmatpush1.msra.mxu0 0.0
    %1877 = vmatprep.subr.mxu0 0.0
    %1878 = vmatpush1.msra.mxu0 0.0
    %1879 = vmatprep.subr.mxu0 0.0
    %1880 = vmatpush1.msra.mxu0 0.0
    %1881 = vmatprep.subr.mxu0 0.0
    %1882 = vmatpush1.msra.mxu0 0.0
    %1883 = vmatprep.subr.mxu0 0.0
    %1884 = vmatpush1.msra.mxu0 0.0
    %1885 = vmatprep.subr.mxu0 0.0
    %1886 = vmatpush1.msra.mxu0 0.0
    %1887 = vmatprep.subr.mxu0 0.0
    %1888 = vmatpush1.msra.mxu0 0.0
    %1889 = vmatprep.subr.mxu0 0.0
    %1890 = vmatpush1.msra.mxu0 0.0
    %1891 = vmatprep.subr.mxu0 0.0
    %1892 = vmatpush1.msra.mxu0 0.0
    %1893 = vmatprep.subr.mxu0 0.0
    %1894 = vmatpush1.msra.mxu0 %v1856
    %1895 = vmatprep.subr.mxu0 0.0
    %1896 = vmatpush1.msra.mxu0 %v1855
    %1897 = vmatprep.subr.mxu0 0.0
    %1898 = vmatpush1.msra.mxu0 %v1854
    %1899 = vmatprep.subr.mxu0 0.0
    %1900 = vmatpush2.msra.mxu0 0.0
    %1901 = vmatprep.subr.mxu0 0.0
    %1902 = vmatpush2.msra.mxu0 0.0
    %1903 = vmatprep.subr.mxu0 0.0
    %1904 = vmatpush2.msra.mxu0 0.0
    %1905 = vmatprep.subr.mxu0 0.0
    %1906 = vmatpush2.msra.mxu0 0.0
    %1907 = vmatprep.subr.mxu0 0.0
    %1908 = vmatpush2.msra.mxu0 0.0
    %1909 = vmatprep.subr.mxu0 0.0
    %1910 = vmatpush2.msra.mxu0 0.0
    %1911 = vmatprep.subr.mxu0 0.0
    %1912 = vmatpush2.msra.mxu0 0.0
    %1913 = vmatprep.subr.mxu0 0.0
    %1914 = vmatpush2.msra.mxu0 0.0
    %1915 = vmatprep.subr.mxu0 0.0
    %1916 = vmatpush2.msra.mxu0 0.0
    %1917 = vmatprep.subr.mxu0 0.0
    %1918 = vmatpush2.msra.mxu0 0.0
    %1919 = vmatprep.subr.mxu0 0.0
    %1920 = vmatpush2.msra.mxu0 0.0
    %1921 = vmatprep.subr.mxu0 0.0
    %1922 = vmatpush2.msra.mxu0 0.0
    %1923 = vmatprep.subr.mxu0 0.0
    %1924 = vmatpush2.msra.mxu0 0.0
    %1925 = vmatprep.subr.mxu0 0.0
    %1926 = vmatpush2.msra.mxu0 0.0
    %1927 = vmatprep.subr.mxu0 0.0
    %1928 = vmatpush2.msra.mxu0 0.0
    %1929 = vmatprep.subr.mxu0 0.0
    %1930 = vmatpush2.msra.mxu0 0.0
    %1931 = vmatprep.mubr.f32.mxu0 0.0
    %1932 = vmatmul.mubr.f32.gmra.mxu0 %v1865
    %v1933 = vpop.f32.mrf.mxu0
    %v1934 = vadd.f32 %v1862, %v1933
    %v1935 = vpop.f32.mrf.mxu0
    %1936 = vdwg.mxu0
    %v1937 = vmax.f32 %v1934, 0.0
    %1938 = vst.msk [vmem:[#allocation4 + $0x4] sm:$0x1] %vm690, %v1937
    %v1941 = vunpack.c.l.s4 1983009808
    %v1942 = vunpack.c.0.s8 %v1941
    %v1943 = vlaneseq
    %v1944 = vshrl.u32 %v1943, 7
    %v1945 = vsub.s32 %v1942, %v1944
    %v1946 = vrot.slane %v1937, %v1945
    %v1947 = vrot.slane %v1946, 7
    %v1948 = vrot.slane %v1947, 2
    %1949 = vrot.lane.b32.xlu0 %v1948, 16
    %v1950 = vpop.permute.xlu0 %1949
    %1952 = vst.msk [vmem:[#allocation4 + $0x4] sm:$0x1] %vm705, %v1950
    %v1953 = vcombine.high %v1946, %v1946
    %1954 = vrot.lane.b32.xlu0 %v1953, 32
    %v1955 = vpop.permute.xlu0 %1954
    %1957 = vst.msk [vmem:[#allocation4 + $0x4] sm:$0x1] %vm711, %v1955
    %v1958 = vrot.slane %v1953, 7
    %v1959 = vrot.slane %v1958, 2
    %1960 = vrot.lane.b32.xlu0 %v1959, 48
    %v1961 = vpop.permute.xlu0 %1960
    %1963 = vst.msk [vmem:[#allocation4 + $0x4] sm:$0x1] %vm718, %v1961
    %v1964 = vcombine.high %v1937, %v1937
    %v1966 = vunpack.c.l.s4 1983009808
    %v1967 = vunpack.c.0.s8 %v1966
    %v1968 = vlaneseq
    %v1969 = vshrl.u32 %v1968, 7
    %v1970 = vsub.s32 %v1967, %v1969
    %v1971 = vrot.slane %v1964, %v1970
    %1972 = vrot.lane.b32.xlu0 %v1971, 64
    %v1973 = vpop.permute.xlu0 %1972
    %1975 = vst.msk [vmem:[#allocation4 + $0x4] sm:$0x1] %vm731, %v1973
    %v1976 = vrot.slane %v1971, 7
    %v1977 = vrot.slane %v1976, 2
    %1978 = vrot.lane.b32.xlu0 %v1977, 80
    %v1979 = vpop.permute.xlu0 %1978
    %1981 = vst.msk [vmem:[#allocation4 + $0x4] sm:$0x1] %vm738, %v1979
    %v1982 = vcombine.high %v1971, %v1971
    %1983 = vrot.lane.b32.xlu0 %v1982, 96
    %v1984 = vpop.permute.xlu0 %1983
    %1986 = vst.msk [vmem:[#allocation4 + $0x4] sm:$0x1] %vm744, %v1984
    %v1987 = vrot.slane %v1982, 7
    %v1988 = vrot.slane %v1987, 2
    %1989 = vrot.lane.b32.xlu0 %v1988, 112
    %v1990 = vpop.permute.xlu0 %1989
    %1992 = vst.msk [vmem:[#allocation4 + $0x4] sm:$0x1] %vm751, %v1990
    %1993 = vrot.lane.b32.xlu0 %v1946, 112
    %v1994 = vpop.permute.xlu0 %1993
    %1996 = vst.msk [vmem:[#allocation4 + $0x5] sm:$0x1] %vm690, %v1994
    %1998 = vst.msk [vmem:[#allocation4 + $0x5] sm:$0x1] %vm705, %v1948
    %1999 = vrot.lane.b32.xlu0 %v1953, 16
    %v2000 = vpop.permute.xlu0 %1999
    %2002 = vst.msk [vmem:[#allocation4 + $0x5] sm:$0x1] %vm711, %v2000
    %2003 = vrot.lane.b32.xlu0 %v1959, 32
    %v2004 = vpop.permute.xlu0 %2003
    %2006 = vst.msk [vmem:[#allocation4 + $0x5] sm:$0x1] %vm718, %v2004
    %2007 = vrot.lane.b32.xlu0 %v1971, 48
    %v2008 = vpop.permute.xlu0 %2007
    %2010 = vst.msk [vmem:[#allocation4 + $0x5] sm:$0x1] %vm731, %v2008
    %2011 = vrot.lane.b32.xlu0 %v1977, 64
    %v2012 = vpop.permute.xlu0 %2011
    %2014 = vst.msk [vmem:[#allocation4 + $0x5] sm:$0x1] %vm738, %v2012
    %2015 = vrot.lane.b32.xlu0 %v1982, 80
    %v2016 = vpop.permute.xlu0 %2015
    %2018 = vst.msk [vmem:[#allocation4 + $0x5] sm:$0x1] %vm744, %v2016
    %2019 = vrot.lane.b32.xlu0 %v1988, 96
    %v2020 = vpop.permute.xlu0 %2019
    %2022 = vst.msk [vmem:[#allocation4 + $0x5] sm:$0x1] %vm751, %v2020
    %v2023 = vld [vmem:[#allocation4] sm:$0x3f]
    %v2024 = vld [vmem:[#allocation4] sm:$0xff]
    %2026 = vrot.lane.b32.xlu0 %v2024, 127
    %v2027 = vpop.permute.xlu0 %2026
    %v2028 = vrot.slane %v2027, 2
    %vm2029 = vcmask 1039360
    %v2030 = vsel %vm2029, %v2027, %v2028
    %v2032 = vmax.f32 %v2023, %v2030
    %2033 = vrot.lane.b32.xlu0 %v2024, 126
    %v2034 = vpop.permute.xlu0 %2033
    %v2035 = vrot.slane %v2034, 2
    %vm2036 = vcmask 1031168
    %v2037 = vsel %vm2036, %v2034, %v2035
    %v2039 = vmax.f32 %v2032, %v2037
    %v2040 = vld [vmem:[%s9] sm:$0xff]
    %v2041 = vld [vmem:[%s9 + $0x8] sm:$0xff]
    %v2042 = vld [vmem:[%s9 + $0x10] sm:$0xff]
    %v2043 = vld [vmem:[%s9 + $0x18] sm:$0xff]
    %v2044 = vld [vmem:[%s9 + $0x20] sm:$0xff]
    %v2045 = vld [vmem:[%s9 + $0x28] sm:$0xff]
    %v2046 = vld [vmem:[%s9 + $0x30] sm:$0xff]
    %v2047 = vld [vmem:[%s9 + $0x38] sm:$0xff]
    %v2048 = vld [vmem:[%s9 + $0x40] sm:$0xff]
    %v2049 = vld [vmem:[%s9 + $0x48] sm:$0xff]
    %v2050 = vld [vmem:[%s9 + $0x50] sm:$0xff]
    %v2051 = vld [vmem:[%s9 + $0x58] sm:$0xff]
    %v2052 = vld [vmem:[%s9 + $0x60] sm:$0xff]
    %v2053 = vld [vmem:[%s9 + $0x68] sm:$0xff]
    %v2054 = vld [vmem:[%s9 + $0x70] sm:$0xff]
    %v2055 = vld [vmem:[%s9 + $0x78] sm:$0xff]
    %v2056 = vld [vmem:[%s9 + $0x80] sm:$0xff]
    %v2057 = vld [vmem:[%s9 + $0x88] sm:$0xff]
    %v2058 = vld [vmem:[%s9 + $0x90] sm:$0xff]
    %v2059 = vld [vmem:[%s9 + $0x98] sm:$0xff]
    %v2060 = vld [vmem:[%s9 + $0xa0] sm:$0xff]
    %v2061 = vld [vmem:[%s9 + $0xa8] sm:$0xff]
    %v2062 = vld [vmem:[%s9 + $0xb0] sm:$0xff]
    %v2063 = vld [vmem:[%s9 + $0xb8] sm:$0xff]
    %v2064 = vld [vmem:[%s9 + $0xc0] sm:$0xff]
    %v2065 = vld [vmem:[%s9 + $0xc8] sm:$0xff]
    %v2066 = vld [vmem:[%s9 + $0xd0] sm:$0xff]
    %v2067 = vld [vmem:[%s9 + $0xd8] sm:$0xff]
    %v2068 = vld [vmem:[%s9 + $0xe0] sm:$0xff]
    %v2069 = vld [vmem:[%s9 + $0xe8] sm:$0xff]
    %v2070 = vld [vmem:[%s9 + $0xf0] sm:$0xff]
    %v2071 = vld [vmem:[%s9 + $0xf8] sm:$0xff]
    %v2072 = vld [vmem:[%s9 + $0x100] sm:$0xff]
    %v2073 = vld [vmem:[%s9 + $0x108] sm:$0xff]
    %v2074 = vld [vmem:[%s9 + $0x110] sm:$0xff]
    %v2075 = vld [vmem:[%s9 + $0x118] sm:$0xff]
    %v2076 = vld [vmem:[%s9 + $0x120] sm:$0xff]
    %v2077 = vld [vmem:[%s9 + $0x128] sm:$0xff]
    %v2078 = vld [vmem:[%s9 + $0x130] sm:$0xff]
    %v2079 = vld [vmem:[%s9 + $0x138] sm:$0xff]
    %v2080 = vld [vmem:[%s9 + $0x140] sm:$0xff]
    %v2081 = vld [vmem:[%s9 + $0x148] sm:$0xff]
    %v2082 = vld [vmem:[%s9 + $0x150] sm:$0xff]
    %v2083 = vld [vmem:[%s9 + $0x158] sm:$0xff]
    %v2084 = vld [vmem:[%s9 + $0x160] sm:$0xff]
    %v2085 = vld [vmem:[%s9 + $0x168] sm:$0xff]
    %v2086 = vld [vmem:[%s9 + $0x170] sm:$0xff]
    %v2087 = vld [vmem:[%s9 + $0x178] sm:$0xff]
    %v2088 = vld [vmem:[%s10] sm:$0x1]
    %v2090 = vlaneseq
    %v2091 = vshrl.u32 %v2090, 7
    %v2092 = vsub.s32 0, %v2091
    %v2093 = vrot.slane %v2088, %v2092
    %v2096 = vcombine.high %v2039, %v2039
    %v2098 = vunpack.c.l.s4 1983009808
    %v2099 = vunpack.c.0.s8 %v2098
    %v2100 = vlaneseq
    %v2101 = vshrl.u32 %v2100, 7
    %v2102 = vsub.s32 %v2099, %v2101
    %v2103 = vrot.slane %v2039, %v2102
    %v2105 = vunpack.c.l.s4 1983009808
    %v2106 = vunpack.c.0.s8 %v2105
    %v2107 = vlaneseq
    %v2108 = vshrl.u32 %v2107, 7
    %v2109 = vsub.s32 %v2106, %v2108
    %v2110 = vrot.slane %v2096, %v2109
    %v2111 = vcombine.high %v2103, %v2103
    %2115 = vmatprep.subr.mxu0 0.0
    %2116 = vmatpush1.msra.mxu0 %v2055
    %2117 = vmatprep.subr.mxu0 0.0
    %2118 = vmatpush1.msra.mxu0 %v2054
    %2119 = vmatprep.subr.mxu0 0.0
    %2120 = vmatpush1.msra.mxu0 %v2053
    %2121 = vmatprep.subr.mxu0 0.0
    %2122 = vmatpush1.msra.mxu0 %v2052
    %2123 = vmatprep.subr.mxu0 0.0
    %2124 = vmatpush1.msra.mxu0 %v2051
    %2125 = vmatprep.subr.mxu0 0.0
    %2126 = vmatpush1.msra.mxu0 %v2050
    %2127 = vmatprep.subr.mxu0 0.0
    %2128 = vmatpush1.msra.mxu0 %v2049
    %2129 = vmatprep.subr.mxu0 0.0
    %2130 = vmatpush1.msra.mxu0 %v2048
    %2131 = vmatprep.subr.mxu0 0.0
    %2132 = vmatpush1.msra.mxu0 %v2047
    %2133 = vmatprep.subr.mxu0 0.0
    %2134 = vmatpush1.msra.mxu0 %v2046
    %2135 = vmatprep.subr.mxu0 0.0
    %2136 = vmatpush1.msra.mxu0 %v2045
    %2137 = vmatprep.subr.mxu0 0.0
    %2138 = vmatpush1.msra.mxu0 %v2044
    %2139 = vmatprep.subr.mxu0 0.0
    %2140 = vmatpush1.msra.mxu0 %v2043
    %2141 = vmatprep.subr.mxu0 0.0
    %2142 = vmatpush1.msra.mxu0 %v2042
    %2143 = vmatprep.subr.mxu0 0.0
    %2144 = vmatpush1.msra.mxu0 %v2041
    %2145 = vmatprep.subr.mxu0 0.0
    %2146 = vmatpush1.msra.mxu0 %v2040
    %2147 = vmatprep.subr.mxu0 0.0
    %2148 = vmatpush2.msra.mxu0 %v2071
    %2149 = vmatprep.subr.mxu0 0.0
    %2150 = vmatpush2.msra.mxu0 %v2070
    %2151 = vmatprep.subr.mxu0 0.0
    %2152 = vmatpush2.msra.mxu0 %v2069
    %2153 = vmatprep.subr.mxu0 0.0
    %2154 = vmatpush2.msra.mxu0 %v2068
    %2155 = vmatprep.subr.mxu0 0.0
    %2156 = vmatpush2.msra.mxu0 %v2067
    %2157 = vmatprep.subr.mxu0 0.0
    %2158 = vmatpush2.msra.mxu0 %v2066
    %2159 = vmatprep.subr.mxu0 0.0
    %2160 = vmatpush2.msra.mxu0 %v2065
    %2161 = vmatprep.subr.mxu0 0.0
    %2162 = vmatpush2.msra.mxu0 %v2064
    %2163 = vmatprep.subr.mxu0 0.0
    %2164 = vmatpush2.msra.mxu0 %v2063
    %2165 = vmatprep.subr.mxu0 0.0
    %2166 = vmatpush2.msra.mxu0 %v2062
    %2167 = vmatprep.subr.mxu0 0.0
    %2168 = vmatpush2.msra.mxu0 %v2061
    %2169 = vmatprep.subr.mxu0 0.0
    %2170 = vmatpush2.msra.mxu0 %v2060
    %2171 = vmatprep.subr.mxu0 0.0
    %2172 = vmatpush2.msra.mxu0 %v2059
    %2173 = vmatprep.subr.mxu0 0.0
    %2174 = vmatpush2.msra.mxu0 %v2058
    %2175 = vmatprep.subr.mxu0 0.0
    %2176 = vmatpush2.msra.mxu0 %v2057
    %2177 = vmatprep.subr.mxu0 0.0
    %2178 = vmatpush2.msra.mxu0 %v2056
    %2179 = vmatprep.mubr.f32.mxu0 %v2111
    %2180 = vmatmul.mubr.f32.gmra.mxu0 %v2103
    %v2181 = vpop.f32.mrf.mxu0
    %v2182 = vadd.f32 %v2093, %v2181
    %v2183 = vpop.f32.mrf.mxu0
    %2184 = vdwg.mxu0
    %2185 = vmatprep.subr.mxu0 0.0
    %2186 = vmatpush1.msra.mxu0 %v2087
    %2187 = vmatprep.subr.mxu0 0.0
    %2188 = vmatpush1.msra.mxu0 %v2086
    %2189 = vmatprep.subr.mxu0 0.0
    %2190 = vmatpush1.msra.mxu0 %v2085
    %2191 = vmatprep.subr.mxu0 0.0
    %2192 = vmatpush1.msra.mxu0 %v2084
    %2193 = vmatprep.subr.mxu0 0.0
    %2194 = vmatpush1.msra.mxu0 %v2083
    %2195 = vmatprep.subr.mxu0 0.0
    %2196 = vmatpush1.msra.mxu0 %v2082
    %2197 = vmatprep.subr.mxu0 0.0
    %2198 = vmatpush1.msra.mxu0 %v2081
    %2199 = vmatprep.subr.mxu0 0.0
    %2200 = vmatpush1.msra.mxu0 %v2080
    %2201 = vmatprep.subr.mxu0 0.0
    %2202 = vmatpush1.msra.mxu0 %v2079
    %2203 = vmatprep.subr.mxu0 0.0
    %2204 = vmatpush1.msra.mxu0 %v2078
    %2205 = vmatprep.subr.mxu0 0.0
    %2206 = vmatpush1.msra.mxu0 %v2077
    %2207 = vmatprep.subr.mxu0 0.0
    %2208 = vmatpush1.msra.mxu0 %v2076
    %2209 = vmatprep.subr.mxu0 0.0
    %2210 = vmatpush1.msra.mxu0 %v2075
    %2211 = vmatprep.subr.mxu0 0.0
    %2212 = vmatpush1.msra.mxu0 %v2074
    %2213 = vmatprep.subr.mxu0 0.0
    %2214 = vmatpush1.msra.mxu0 %v2073
    %2215 = vmatprep.subr.mxu0 0.0
    %2216 = vmatpush1.msra.mxu0 %v2072
    %2217 = vmatprep.subr.mxu0 0.0
    %2218 = vmatpush2.msra.mxu0 0.0
    %2219 = vmatprep.subr.mxu0 0.0
    %2220 = vmatpush2.msra.mxu0 0.0
    %2221 = vmatprep.subr.mxu0 0.0
    %2222 = vmatpush2.msra.mxu0 0.0
    %2223 = vmatprep.subr.mxu0 0.0
    %2224 = vmatpush2.msra.mxu0 0.0
    %2225 = vmatprep.subr.mxu0 0.0
    %2226 = vmatpush2.msra.mxu0 0.0
    %2227 = vmatprep.subr.mxu0 0.0
    %2228 = vmatpush2.msra.mxu0 0.0
    %2229 = vmatprep.subr.mxu0 0.0
    %2230 = vmatpush2.msra.mxu0 0.0
    %2231 = vmatprep.subr.mxu0 0.0
    %2232 = vmatpush2.msra.mxu0 0.0
    %2233 = vmatprep.subr.mxu0 0.0
    %2234 = vmatpush2.msra.mxu0 0.0
    %2235 = vmatprep.subr.mxu0 0.0
    %2236 = vmatpush2.msra.mxu0 0.0
    %2237 = vmatprep.subr.mxu0 0.0
    %2238 = vmatpush2.msra.mxu0 0.0
    %2239 = vmatprep.subr.mxu0 0.0
    %2240 = vmatpush2.msra.mxu0 0.0
    %2241 = vmatprep.subr.mxu0 0.0
    %2242 = vmatpush2.msra.mxu0 0.0
    %2243 = vmatprep.subr.mxu0 0.0
    %2244 = vmatpush2.msra.mxu0 0.0
    %2245 = vmatprep.subr.mxu0 0.0
    %2246 = vmatpush2.msra.mxu0 0.0
    %2247 = vmatprep.subr.mxu0 0.0
    %2248 = vmatpush2.msra.mxu0 0.0
    %2249 = vmatprep.mubr.f32.mxu0 0.0
    %2250 = vmatmul.mubr.f32.gmra.mxu0 %v2110
    %v2251 = vpop.f32.mrf.mxu0
    %v2252 = vadd.f32 %v2182, %v2251
    %v2253 = vpop.f32.mrf.mxu0
    %2254 = vdwg.mxu0
    %vm2255 = vcmp.gt.f32.partialorder %v2252, 0.0
    %v2256 = vmul.f32 %v2252, 1.442695
    %v2257 = vpow.pop %v2256
    %v2258 = vsub.f32 %v2257, 1.0
    %v2259 = vmul.f32 %v2258, 1.6732632
    %v2260 = vsel %vm2255, %v2252, %v2259
    %v2261 = vmul.f32 %v2260, 1.050701
    %v2262 = vld [vmem:[%s11] sm:$0xff]
    %v2263 = vld [vmem:[%s11 + $0x8] sm:$0xff]
    %v2264 = vld [vmem:[%s11 + $0x10] sm:$0xff]
    %v2265 = vld [vmem:[%s11 + $0x18] sm:$0xff]
    %v2266 = vld [vmem:[%s11 + $0x20] sm:$0xff]
    %v2267 = vld [vmem:[%s11 + $0x28] sm:$0xff]
    %v2268 = vld [vmem:[%s11 + $0x30] sm:$0xff]
    %v2269 = vld [vmem:[%s11 + $0x38] sm:$0xff]
    %v2270 = vld [vmem:[%s12] sm:$0x1]
    %v2272 = vlaneseq
    %v2273 = vshrl.u32 %v2272, 7
    %v2274 = vsub.s32 0, %v2273
    %v2275 = vrot.slane %v2270, %v2274
    %vm2277 = vcmask 523264
    %v2279 = vsel %vm2277, %v2261, 0
    %2281 = vmatprep.subr.mxu0 0.0
    %2282 = vmatpush1.msra.mxu0 0.0
    %2283 = vmatprep.subr.mxu0 0.0
    %2284 = vmatpush1.msra.mxu0 0.0
    %2285 = vmatprep.subr.mxu0 0.0
    %2286 = vmatpush1.msra.mxu0 0.0
    %2287 = vmatprep.subr.mxu0 0.0
    %2288 = vmatpush1.msra.mxu0 0.0
    %2289 = vmatprep.subr.mxu0 0.0
    %2290 = vmatpush1.msra.mxu0 0.0
    %2291 = vmatprep.subr.mxu0 0.0
    %2292 = vmatpush1.msra.mxu0 0.0
    %2293 = vmatprep.subr.mxu0 0.0
    %2294 = vmatpush1.msra.mxu0 0.0
    %2295 = vmatprep.subr.mxu0 0.0
    %2296 = vmatpush1.msra.mxu0 0.0
    %2297 = vmatprep.subr.mxu0 0.0
    %2298 = vmatpush1.msra.mxu0 %v2269
    %2299 = vmatprep.subr.mxu0 0.0
    %2300 = vmatpush1.msra.mxu0 %v2268
    %2301 = vmatprep.subr.mxu0 0.0
    %2302 = vmatpush1.msra.mxu0 %v2267
    %2303 = vmatprep.subr.mxu0 0.0
    %2304 = vmatpush1.msra.mxu0 %v2266
    %2305 = vmatprep.subr.mxu0 0.0
    %2306 = vmatpush1.msra.mxu0 %v2265
    %2307 = vmatprep.subr.mxu0 0.0
    %2308 = vmatpush1.msra.mxu0 %v2264
    %2309 = vmatprep.subr.mxu0 0.0
    %2310 = vmatpush1.msra.mxu0 %v2263
    %2311 = vmatprep.subr.mxu0 0.0
    %2312 = vmatpush1.msra.mxu0 %v2262
    %2313 = vmatprep.subr.mxu0 0.0
    %2314 = vmatpush2.msra.mxu0 0.0
    %2315 = vmatprep.subr.mxu0 0.0
    %2316 = vmatpush2.msra.mxu0 0.0
    %2317 = vmatprep.subr.mxu0 0.0
    %2318 = vmatpush2.msra.mxu0 0.0
    %2319 = vmatprep.subr.mxu0 0.0
    %2320 = vmatpush2.msra.mxu0 0.0
    %2321 = vmatprep.subr.mxu0 0.0
    %2322 = vmatpush2.msra.mxu0 0.0
    %2323 = vmatprep.subr.mxu0 0.0
    %2324 = vmatpush2.msra.mxu0 0.0
    %2325 = vmatprep.subr.mxu0 0.0
    %2326 = vmatpush2.msra.mxu0 0.0
    %2327 = vmatprep.subr.mxu0 0.0
    %2328 = vmatpush2.msra.mxu0 0.0
    %2329 = vmatprep.subr.mxu0 0.0
    %2330 = vmatpush2.msra.mxu0 0.0
    %2331 = vmatprep.subr.mxu0 0.0
    %2332 = vmatpush2.msra.mxu0 0.0
    %2333 = vmatprep.subr.mxu0 0.0
    %2334 = vmatpush2.msra.mxu0 0.0
    %2335 = vmatprep.subr.mxu0 0.0
    %2336 = vmatpush2.msra.mxu0 0.0
    %2337 = vmatprep.subr.mxu0 0.0
    %2338 = vmatpush2.msra.mxu0 0.0
    %2339 = vmatprep.subr.mxu0 0.0
    %2340 = vmatpush2.msra.mxu0 0.0
    %2341 = vmatprep.subr.mxu0 0.0
    %2342 = vmatpush2.msra.mxu0 0.0
    %2343 = vmatprep.subr.mxu0 0.0
    %2344 = vmatpush2.msra.mxu0 0.0
    %2345 = vmatprep.mubr.f32.mxu0 0.0
    %2346 = vmatmul.mubr.f32.gmra.mxu0 %v2279
    %v2347 = vpop.f32.mrf.mxu0
    %v2348 = vadd.f32 %v2275, %v2347
    %v2349 = vpop.f32.mrf.mxu0
    %2350 = vdwg.mxu0
    %vm2351 = vcmask 33792
    %2352 = vst.msk [vmem:[#allocation5] sm:$0x3] %vm2351, %v2348
    // Predicated region
    $region54: #{spider_forward.1} parent=1 // pred_check
      _
    $region55: #{spider_forward.1} parent=1 // pred_check_branch
      %2354 = sbr.rel (0) target = $region57
    $region56: #{spider_forward.1} parent=1 // pred_region
      %s2356 = ssub.s32 32, 32
      %2357 = vsyncadd [#allocation6], %s2356
      %s2359 = sshll.u32 [#allocation5], 4
      %s2360 = int_to_ptr.vmem [resolvable:$true] %s2359
      %2362 = dma.vmem_to_hbm [thread:$0]  %s2360, 32, %s13, [#allocation6]
    $region57: #{spider_forward.1} parent=1 // pred_fallthru
      _
    // Predicated region
    $region58: #{spider_forward.1} parent=1 // pred_check
      _
    $region59: #{spider_forward.1} parent=1 // pred_check_branch
      %2364 = sbr.rel (0) target = $region61
    $region60: #{spider_forward.1} parent=1 // pred_region
      %2365 = dma.done [#allocation6], 32
    $region61: #{spider_forward.1} parent=1 // pred_fallthru
      _
    %2366 = vsyncpa [#allocation6], 1

</llo_original>
